<compile_context>
chip_gen: v7x
topology: tpu7x:2x2x1
jax: 0.10.0
libtpu: 0.0.40
codegen_flags: <defaults>
</compile_context>

<pallas_src>
import jax
import jax.numpy as jnp
from jax.experimental import pallas as pl
from jax.experimental.pallas import tpu as pltpu

_LANE = 128
_BF16_SUBLANE = 16  # bf16 packs (16, 128) per vreg


def _round_up(x, m):
    return ((x + m - 1) // m) * m


def _tpu_vmem_bytes():
    """Physical per-TensorCore VMEM (fallback: conservative v7x-sized 64 MiB)."""
    try:
        return int(pltpu.get_tpu_info().vmem_capacity_bytes)
    except Exception:
        return 64 * 1024 * 1024


def _pick_k_tile(in_flat, vmem_cap):
    """K tile for streaming the clip projection (multiple of 128, divides in_flat)."""
    cap = 16384 if vmem_cap > (96 << 20) else 8192
    if in_flat <= cap:
        return in_flat
    for t in range(cap, _LANE - 1, -_LANE):
        if in_flat % t == 0:
            return t
    return in_flat


# ----------------------------------------------------------------------------
# Kernel: (K-tiled) clip-proj -> encoder -> tanh(alpha*.) -> decoder ->
# sigmoid -> tanh, plus optional row L2-norm of the code.  alpha/norm static.
# All matmuls: bf16 inputs on the MXU, f32 accumulation; element-wise in f32.
# Grid = (batch tiles [parallel], K tiles of the clip reduction [arbitrary]).
# ----------------------------------------------------------------------------
def _make_kernel(alpha: float, norm: bool):
    def kernel(x_ref, proj_ref,
               w1_ref, b1_ref, w2_ref, b2_ref, w3_ref, b3_ref,          # encoder
               wd1_ref, bd1_ref, wd2_ref, bd2_ref, wd3_ref, bd3_ref,    # decoder
               out_ref, recon_ref, fea_acc):
        k = pl.program_id(1)

        @pl.when(k == 0)
        def _():
            fea_acc[...] = jnp.zeros_like(fea_acc)

        # clip stand-in: accumulate one K-slab of x_flat @ clip_proj (f32 acc).
        fea_acc[...] += jnp.dot(x_ref[...], proj_ref[...],
                                preferred_element_type=jnp.float32)

        @pl.when(k == pl.num_programs(1) - 1)
        def _():
            def lin(h_f32, w_ref, b_ref):
                # bf16 MXU matmul with f32 accumulation; bias add in f32 (VPU).
                return jnp.dot(h_f32.astype(jnp.bfloat16), w_ref[...],
                               preferred_element_type=jnp.float32) + b_ref[...]

            fea = fea_acc[...]                                           # (BM, y_dim)

            # encoder: Linear -> ReLU -> Linear -> ReLU -> Linear
            h1 = jnp.maximum(lin(fea, w1_ref, b1_ref), 0.0)
            h2 = jnp.maximum(lin(h1, w2_ref, b2_ref), 0.0)
            enc = lin(h2, w3_ref, b3_ref)                                # (BM, BIT_PAD)

            # out = tanh(alpha * encoder(fea)); padded code columns stay 0.
            out = jnp.tanh(alpha * enc)

            # decoder: Linear -> ReLU -> Linear -> ReLU -> Linear -> Sigmoid, then tanh
            d1 = jnp.maximum(lin(out, wd1_ref, bd1_ref), 0.0)
            d2 = jnp.maximum(lin(d1, wd2_ref, bd2_ref), 0.0)
            d3 = lin(d2, wd3_ref, bd3_ref)
            recon = jnp.tanh(jax.nn.sigmoid(d3))                         # (BM, y_dim)

            # norm: out *= rsqrt(sum(out^2) + eps)  (EUP, no divide)
            if norm:
                sq = jnp.sum(out * out, axis=1, keepdims=True)
                out = out * jax.lax.rsqrt(sq + 1e-12)

            out_ref[...] = out
            recon_ref[...] = recon.astype(recon_ref.dtype)

    return kernel


def image_net_forward(x, params, *, alpha=1.0, norm=True):
    """x: (B, C, H, W) float32 image, NCHW (PyTorch convention)."""
    B = x.shape[0]
    x_flat = x.reshape(B, -1)
    in_flat = x_flat.shape[1]

    clip_proj = params["clip_proj"]                                     # (in_flat, y_dim) bf16
    y_dim = params["w1"].shape[0]
    m1 = params["w1"].shape[1]
    m2 = params["w2"].shape[1]
    bit = params["w3"].shape[1]

    # Lane alignment: feature dims must be multiples of 128; the narrow code
    # dimension is zero-padded to 128 lanes (lane-dense stores).
    assert in_flat % _LANE == 0 and y_dim % _LANE == 0
    assert m1 % _LANE == 0 and m2 % _LANE == 0
    bit_pad = max(_LANE, _round_up(bit, _LANE))

    # ---- per-generation sizing ------------------------------------------
    vmem_cap = _tpu_vmem_bytes()
    vmem_limit = int(vmem_cap * 0.85)          # leave Mosaic scratch headroom

    if B < 128:
        BM = _round_up(max(B, 1), _BF16_SUBLANE)
    elif vmem_cap > (96 << 20) and B >= 256:
        BM = 256                               # 128-MiB-VMEM parts (v5e/v6e)
    else:
        BM = 128
    # v7x (64 MiB VMEM, 2 TCs): keep >= 2 "parallel" batch steps for medium B.
    if vmem_cap <= (96 << 20) and B >= 32 and pl.cdiv(B, BM) < 2:
        BM = _round_up(pl.cdiv(B, 2), _BF16_SUBLANE)
    Bp = _round_up(B, BM)

    k_tile = _pick_k_tile(in_flat, vmem_cap)
    k_steps = in_flat // k_tile

    x_pad = jnp.zeros((Bp, in_flat), jnp.bfloat16).at[:B].set(
        x_flat.astype(jnp.bfloat16))

    # Zero-pad the code dimension of w3 / b3 / wd1 (keeps math identical).
    w3p = jnp.pad(params["w3"], ((0, 0), (0, bit_pad - bit)))
    b3p = jnp.pad(params["b3"], ((0, 0), (0, bit_pad - bit)))
    wd1p = jnp.pad(params["wd1"], ((0, bit_pad - bit), (0, 0)))

    grid = (Bp // BM, k_steps)

    # Advisory cost estimate so XLA schedules the surrounding graph sensibly.
    flops = 2 * Bp * (in_flat * y_dim + y_dim * m1 + m1 * m2 + m2 * bit_pad
                      + bit_pad * m2 + m2 * m1 + m1 * y_dim)
    transcendentals = Bp * (bit_pad + 2 * y_dim)
    bytes_accessed = (
        x_pad.size * 2 + clip_proj.size * 2
        + sum(params[k].size * 2 for k in ("w1", "w2", "wd2", "wd3"))
        + (w3p.size + wd1p.size) * 2
        + sum(params[k].size * 4 for k in ("b1", "b2", "bd1", "bd2", "bd3"))
        + b3p.size * 4
        + Bp * bit_pad * 4 + Bp * y_dim * 2)

    def run(single_buffer_consts):
        const_kw = ({"pipeline_mode": pl.Buffered(1)}
                    if single_buffer_consts else {})

        def const_spec(shape):
            # Constant-index operands: fetched once, single-buffered.
            return pl.BlockSpec(shape, lambda i, k: (0, 0), **const_kw)

        return pl.pallas_call(
            _make_kernel(float(alpha), bool(norm)),
            out_shape=(
                jax.ShapeDtypeStruct((Bp, bit_pad), jnp.float32),
                jax.ShapeDtypeStruct((Bp, y_dim), jnp.bfloat16),
            ),
            grid_spec=pltpu.PrefetchScalarGridSpec(
                num_scalar_prefetch=0,
                grid=grid,
                in_specs=[
                    pl.BlockSpec((BM, k_tile), lambda i, k: (i, k)),      # x slab
                    pl.BlockSpec((k_tile, y_dim), lambda i, k: (k, 0)),   # clip_proj slab
                    const_spec((y_dim, m1)),          # w1
                    const_spec((1, m1)),              # b1
                    const_spec((m1, m2)),             # w2
                    const_spec((1, m2)),              # b2
                    const_spec((m2, bit_pad)),        # w3 (padded)
                    const_spec((1, bit_pad)),         # b3 (padded)
                    const_spec((bit_pad, m2)),        # wd1 (padded)
                    const_spec((1, m2)),              # bd1
                    const_spec((m2, m1)),             # wd2
                    const_spec((1, m1)),              # bd2
                    const_spec((m1, y_dim)),          # wd3
                    const_spec((1, y_dim)),           # bd3
                ],
                out_specs=[
                    pl.BlockSpec((BM, bit_pad), lambda i, k: (i, 0)),
                    pl.BlockSpec((BM, y_dim), lambda i, k: (i, 0)),
                ],
                scratch_shapes=[pltpu.VMEM((BM, y_dim), jnp.float32)],    # fea accumulator
            ),
            compiler_params=pltpu.CompilerParams(
                dimension_semantics=("parallel", "arbitrary"),
                vmem_limit_bytes=vmem_limit,
            ),
            cost_estimate=pl.CostEstimate(
                flops=flops,
                transcendentals=transcendentals,
                bytes_accessed=bytes_accessed,
            ),
        )(x_pad, clip_proj,
          params["w1"], params["b1"], params["w2"], params["b2"], w3p, b3p,
          wd1p, params["bd1"], params["wd2"], params["bd2"],
          params["wd3"], params["bd3"])

    try:
        out_pad, recon_pad = run(True)
        jax.block_until_ready((out_pad, recon_pad))
    except Exception:
        # TODO(synk): this jax build rejected pl.Buffered(1); fall back to the
        # default double-buffered constant operands.
        out_pad, recon_pad = run(False)

    # Slice off batch / lane padding; return recon as f32 like the PyTorch module.
    return out_pad[:B, :bit], recon_pad[:B, :].astype(jnp.float32)


def init_params(key, *, in_flat, y_dim, mid_num1, mid_num2, bit):
    """Deterministic synthetic parameters.  Weights stored as (in, out) bf16
    (so the kernel does x @ W + b on the MXU); biases kept in f32."""
    ks = jax.random.split(key, 8)

    def lin(k, fan_in, fan_out):
        scale = 1.0 / jnp.sqrt(fan_in)
        kw, kb = jax.random.split(k)
        w = jax.random.uniform(kw, (fan_in, fan_out), jnp.float32, -scale, scale)
        b = jax.random.uniform(kb, (1, fan_out), jnp.float32, -scale, scale)
        return w.astype(jnp.bfloat16), b

    p = {}
    p["clip_proj"] = (jax.random.normal(ks[0], (in_flat, y_dim), jnp.float32)
                      * 0.02).astype(jnp.bfloat16)
    p["w1"], p["b1"] = lin(ks[1], y_dim, mid_num1)
    p["w2"], p["b2"] = lin(ks[2], mid_num1, mid_num2)
    p["w3"], p["b3"] = lin(ks[3], mid_num2, bit)
    p["wd1"], p["bd1"] = lin(ks[4], bit, mid_num2)
    p["wd2"], p["bd2"] = lin(ks[5], mid_num2, mid_num1)
    p["wd3"], p["bd3"] = lin(ks[6], mid_num1, y_dim)
    return p


if __name__ == "__main__":
    # Small shapes consistent with the module's forward:
    B, C, H, W = 2, 4, 16, 16          # image input (NCHW)
    y_dim = 128                        # feature / tag dimension
    mid_num1 = mid_num2 = 256          # scaled-down from 8192
    bit = 64                           # hash code length

    key = jax.random.PRNGKey(0)
    k_x, k_p = jax.random.split(key)
    x = jax.random.normal(k_x, (B, C, H, W), jnp.float32)
    params = init_params(k_p, in_flat=C * H * W, y_dim=y_dim,
                         mid_num1=mid_num1, mid_num2=mid_num2, bit=bit)

    out, recon = image_net_forward(x, params, alpha=1.0, norm=True)
    jax.block_until_ready((out, recon))

    # sanity: shapes, unit-norm codes, recon in (0, 1) tanh(sigmoid) range
    assert out.shape == (B, bit) and recon.shape == (B, y_dim)
    assert jnp.allclose(jnp.linalg.norm(out, axis=1), 1.0, atol=1e-5)
    assert bool(jnp.all((recon > 0.0) & (recon < 1.0)))

    # norm=False path is supported as well
    out_raw, _ = image_net_forward(x, params, alpha=1.0, norm=False)
    jax.block_until_ready(out_raw)
    assert out_raw.shape == (B, bit)

    print("KERNEL_OK")
</pallas_src>

<mosaic_0001>
module attributes {stable_mosaic.version = 11 : i64} {
  func.func @kernel(%arg0: i32, %arg1: i32, %arg2: memref<16x1024xbf16, #tpu.memory_space<vmem>>, %arg3: memref<1024x128xbf16, #tpu.memory_space<vmem>>, %arg4: memref<128x256xbf16, #tpu.memory_space<vmem>>, %arg5: memref<1x256xf32, #tpu.memory_space<vmem>>, %arg6: memref<256x256xbf16, #tpu.memory_space<vmem>>, %arg7: memref<1x256xf32, #tpu.memory_space<vmem>>, %arg8: memref<256x128xbf16, #tpu.memory_space<vmem>>, %arg9: memref<1x128xf32, #tpu.memory_space<vmem>>, %arg10: memref<128x256xbf16, #tpu.memory_space<vmem>>, %arg11: memref<1x256xf32, #tpu.memory_space<vmem>>, %arg12: memref<256x256xbf16, #tpu.memory_space<vmem>>, %arg13: memref<1x256xf32, #tpu.memory_space<vmem>>, %arg14: memref<256x128xbf16, #tpu.memory_space<vmem>>, %arg15: memref<1x128xf32, #tpu.memory_space<vmem>>, %arg16: memref<16x128xf32, #tpu.memory_space<vmem>>, %arg17: memref<16x128xbf16, #tpu.memory_space<vmem>>, %arg18: memref<16x128xf32, #tpu.memory_space<vmem>>) attributes {dimension_semantics = [#tpu.dimension_semantics<parallel>, #tpu.dimension_semantics<arbitrary>], iteration_bounds = array<i64: 1, 1>, scalar_prefetch = 0 : i64, scratch_operands = 1 : i64, tpu.core_type = #tpu.core_type<tc>, window_params = [{transform_indices = @transform_0, window_bounds = array<i64: 16, 1024>}, {transform_indices = @transform_1, window_bounds = array<i64: 1024, 128>}, {pipeline_mode = #tpu.pipeline_mode<synchronous>, transform_indices = @transform_2, window_bounds = array<i64: 128, 256>}, {pipeline_mode = #tpu.pipeline_mode<synchronous>, transform_indices = @transform_3, window_bounds = array<i64: 1, 256>}, {pipeline_mode = #tpu.pipeline_mode<synchronous>, transform_indices = @transform_4, window_bounds = array<i64: 256, 256>}, {pipeline_mode = #tpu.pipeline_mode<synchronous>, transform_indices = @transform_5, window_bounds = array<i64: 1, 256>}, {pipeline_mode = #tpu.pipeline_mode<synchronous>, transform_indices = @transform_6, window_bounds = array<i64: 256, 128>}, {pipeline_mode = #tpu.pipeline_mode<synchronous>, transform_indices = @transform_7, window_bounds = array<i64: 1, 128>}, {pipeline_mode = #tpu.pipeline_mode<synchronous>, transform_indices = @transform_8, window_bounds = array<i64: 128, 256>}, {pipeline_mode = #tpu.pipeline_mode<synchronous>, transform_indices = @transform_9, window_bounds = array<i64: 1, 256>}, {pipeline_mode = #tpu.pipeline_mode<synchronous>, transform_indices = @transform_10, window_bounds = array<i64: 256, 256>}, {pipeline_mode = #tpu.pipeline_mode<synchronous>, transform_indices = @transform_11, window_bounds = array<i64: 1, 256>}, {pipeline_mode = #tpu.pipeline_mode<synchronous>, transform_indices = @transform_12, window_bounds = array<i64: 256, 128>}, {pipeline_mode = #tpu.pipeline_mode<synchronous>, transform_indices = @transform_13, window_bounds = array<i64: 1, 128>}, {transform_indices = @transform_14, window_bounds = array<i64: 16, 128>}, {transform_indices = @transform_15, window_bounds = array<i64: 16, 128>}]} {
    %c0_i32 = arith.constant 0 : i32
    %0 = arith.cmpi eq, %arg1, %c0_i32 : i32
    %1 = arith.extui %0 : i1 to i32
    %c0_i32_0 = arith.constant 0 : i32
    %2 = arith.cmpi ne, %1, %c0_i32_0 : i32
    scf.if %2 {
      %cst_10 = arith.constant 0.000000e+00 : f32
      %12 = vector.broadcast %cst_10 : f32 to vector<16x128xf32>
      %c0_11 = arith.constant 0 : index
      %c0_12 = arith.constant 0 : index
      %13 = vector.load %arg18[%c0_11, %c0_12] : memref<16x128xf32, #tpu.memory_space<vmem>>, vector<16x128xf32>
      tpu.vector_store %arg18[%c0_11, %c0_12], %12 {strides = array<i32>} : memref<16x128xf32, #tpu.memory_space<vmem>>, vector<16x128xf32>,
    } else {
    }
    %c0 = arith.constant 0 : index
    %c0_1 = arith.constant 0 : index
    %3 = vector.load %arg18[%c0, %c0_1] : memref<16x128xf32, #tpu.memory_space<vmem>>, vector<16x128xf32>
    %c0_2 = arith.constant 0 : index
    %c0_3 = arith.constant 0 : index
    %4 = vector.load %arg2[%c0_2, %c0_3] : memref<16x1024xbf16, #tpu.memory_space<vmem>>, vector<16x1024xbf16>
    %c0_4 = arith.constant 0 : index
    %c0_5 = arith.constant 0 : index
    %5 = vector.load %arg3[%c0_4, %c0_5] : memref<1024x128xbf16, #tpu.memory_space<vmem>>, vector<1024x128xbf16>
    %cst = arith.constant dense<0.000000e+00> : vector<16x128xf32>
    %6 = tpu.matmul %4, %5, %cst {dimension_numbers = #tpu.dot_dimension_numbers<[1], [0], [0], [1], [0, 0, 1, 1], [], []>} : vector<16x1024xbf16>, vector<1024x128xbf16>, vector<16x128xf32> -> vector<16x128xf32>
    %7 = arith.addf %3, %6 : vector<16x128xf32>
    %c0_6 = arith.constant 0 : index
    %c0_7 = arith.constant 0 : index
    %8 = vector.load %arg18[%c0_6, %c0_7] : memref<16x128xf32, #tpu.memory_space<vmem>>, vector<16x128xf32>
    tpu.vector_store %arg18[%c0_6, %c0_7], %7 {strides = array<i32>} : memref<16x128xf32, #tpu.memory_space<vmem>>, vector<16x128xf32>,
    %c0_i32_8 = arith.constant 0 : i32
    %9 = arith.cmpi eq, %arg1, %c0_i32_8 : i32
    %10 = arith.extui %9 : i1 to i32
    %c0_i32_9 = arith.constant 0 : i32
    %11 = arith.cmpi ne, %10, %c0_i32_9 : i32
    scf.if %11 {
      %c0_10 = arith.constant 0 : index
      %c0_11 = arith.constant 0 : index
      %12 = vector.load %arg18[%c0_10, %c0_11] : memref<16x128xf32, #tpu.memory_space<vmem>>, vector<16x128xf32>
      %13 = arith.truncf %12 : vector<16x128xf32> to vector<16x128xbf16>
      %c0_12 = arith.constant 0 : index
      %c0_13 = arith.constant 0 : index
      %14 = vector.load %arg4[%c0_12, %c0_13] : memref<128x256xbf16, #tpu.memory_space<vmem>>, vector<128x256xbf16>
      %cst_14 = arith.constant dense<0.000000e+00> : vector<16x256xf32>
      %15 = tpu.matmul %13, %14, %cst_14 {dimension_numbers = #tpu.dot_dimension_numbers<[1], [0], [0], [1], [0, 0, 1, 1], [], []>} : vector<16x128xbf16>, vector<128x256xbf16>, vector<16x256xf32> -> vector<16x256xf32>
      %c0_15 = arith.constant 0 : index
      %c0_16 = arith.constant 0 : index
      %16 = vector.load %arg5[%c0_15, %c0_16] : memref<1x256xf32, #tpu.memory_space<vmem>>, vector<1x256xf32>
      %17 = vector.broadcast %16 : vector<1x256xf32> to vector<16x256xf32>
      %18 = arith.addf %15, %17 : vector<16x256xf32>
      %cst_17 = arith.constant 0.000000e+00 : f32
      %19 = vector.broadcast %cst_17 : f32 to vector<16x256xf32>
      %20 = arith.maximumf %18, %19 : vector<16x256xf32>
      %21 = arith.truncf %20 : vector<16x256xf32> to vector<16x256xbf16>
      %c0_18 = arith.constant 0 : index
      %c0_19 = arith.constant 0 : index
      %22 = vector.load %arg6[%c0_18, %c0_19] : memref<256x256xbf16, #tpu.memory_space<vmem>>, vector<256x256xbf16>
      %cst_20 = arith.constant dense<0.000000e+00> : vector<16x256xf32>
      %23 = tpu.matmul %21, %22, %cst_20 {dimension_numbers = #tpu.dot_dimension_numbers<[1], [0], [0], [1], [0, 0, 1, 1], [], []>} : vector<16x256xbf16>, vector<256x256xbf16>, vector<16x256xf32> -> vector<16x256xf32>
      %c0_21 = arith.constant 0 : index
      %c0_22 = arith.constant 0 : index
      %24 = vector.load %arg7[%c0_21, %c0_22] : memref<1x256xf32, #tpu.memory_space<vmem>>, vector<1x256xf32>
      %25 = vector.broadcast %24 : vector<1x256xf32> to vector<16x256xf32>
      %26 = arith.addf %23, %25 : vector<16x256xf32>
      %cst_23 = arith.constant 0.000000e+00 : f32
      %27 = vector.broadcast %cst_23 : f32 to vector<16x256xf32>
      %28 = arith.maximumf %26, %27 : vector<16x256xf32>
      %29 = arith.truncf %28 : vector<16x256xf32> to vector<16x256xbf16>
      %c0_24 = arith.constant 0 : index
      %c0_25 = arith.constant 0 : index
      %30 = vector.load %arg8[%c0_24, %c0_25] : memref<256x128xbf16, #tpu.memory_space<vmem>>, vector<256x128xbf16>
      %cst_26 = arith.constant dense<0.000000e+00> : vector<16x128xf32>
      %31 = tpu.matmul %29, %30, %cst_26 {dimension_numbers = #tpu.dot_dimension_numbers<[1], [0], [0], [1], [0, 0, 1, 1], [], []>} : vector<16x256xbf16>, vector<256x128xbf16>, vector<16x128xf32> -> vector<16x128xf32>
      %c0_27 = arith.constant 0 : index
      %c0_28 = arith.constant 0 : index
      %32 = vector.load %arg9[%c0_27, %c0_28] : memref<1x128xf32, #tpu.memory_space<vmem>>, vector<1x128xf32>
      %33 = vector.broadcast %32 : vector<1x128xf32> to vector<16x128xf32>
      %34 = arith.addf %31, %33 : vector<16x128xf32>
      %cst_29 = arith.constant 1.000000e+00 : f32
      %35 = vector.broadcast %cst_29 : f32 to vector<16x128xf32>
      %36 = arith.mulf %35, %34 : vector<16x128xf32>
      %37 = math.tanh %36 : vector<16x128xf32>
      %38 = arith.truncf %37 : vector<16x128xf32> to vector<16x128xbf16>
      %c0_30 = arith.constant 0 : index
      %c0_31 = arith.constant 0 : index
      %39 = vector.load %arg10[%c0_30, %c0_31] : memref<128x256xbf16, #tpu.memory_space<vmem>>, vector<128x256xbf16>
      %cst_32 = arith.constant dense<0.000000e+00> : vector<16x256xf32>
      %40 = tpu.matmul %38, %39, %cst_32 {dimension_numbers = #tpu.dot_dimension_numbers<[1], [0], [0], [1], [0, 0, 1, 1], [], []>} : vector<16x128xbf16>, vector<128x256xbf16>, vector<16x256xf32> -> vector<16x256xf32>
      %c0_33 = arith.constant 0 : index
      %c0_34 = arith.constant 0 : index
      %41 = vector.load %arg11[%c0_33, %c0_34] : memref<1x256xf32, #tpu.memory_space<vmem>>, vector<1x256xf32>
      %42 = vector.broadcast %41 : vector<1x256xf32> to vector<16x256xf32>
      %43 = arith.addf %40, %42 : vector<16x256xf32>
      %cst_35 = arith.constant 0.000000e+00 : f32
      %44 = vector.broadcast %cst_35 : f32 to vector<16x256xf32>
      %45 = arith.maximumf %43, %44 : vector<16x256xf32>
      %46 = arith.truncf %45 : vector<16x256xf32> to vector<16x256xbf16>
      %c0_36 = arith.constant 0 : index
      %c0_37 = arith.constant 0 : index
      %47 = vector.load %arg12[%c0_36, %c0_37] : memref<256x256xbf16, #tpu.memory_space<vmem>>, vector<256x256xbf16>
      %cst_38 = arith.constant dense<0.000000e+00> : vector<16x256xf32>
      %48 = tpu.matmul %46, %47, %cst_38 {dimension_numbers = #tpu.dot_dimension_numbers<[1], [0], [0], [1], [0, 0, 1, 1], [], []>} : vector<16x256xbf16>, vector<256x256xbf16>, vector<16x256xf32> -> vector<16x256xf32>
      %c0_39 = arith.constant 0 : index
      %c0_40 = arith.constant 0 : index
      %49 = vector.load %arg13[%c0_39, %c0_40] : memref<1x256xf32, #tpu.memory_space<vmem>>, vector<1x256xf32>
      %50 = vector.broadcast %49 : vector<1x256xf32> to vector<16x256xf32>
      %51 = arith.addf %48, %50 : vector<16x256xf32>
      %cst_41 = arith.constant 0.000000e+00 : f32
      %52 = vector.broadcast %cst_41 : f32 to vector<16x256xf32>
      %53 = arith.maximumf %51, %52 : vector<16x256xf32>
      %54 = arith.truncf %53 : vector<16x256xf32> to vector<16x256xbf16>
      %c0_42 = arith.constant 0 : index
      %c0_43 = arith.constant 0 : index
      %55 = vector.load %arg14[%c0_42, %c0_43] : memref<256x128xbf16, #tpu.memory_space<vmem>>, vector<256x128xbf16>
      %cst_44 = arith.constant dense<0.000000e+00> : vector<16x128xf32>
      %56 = tpu.matmul %54, %55, %cst_44 {dimension_numbers = #tpu.dot_dimension_numbers<[1], [0], [0], [1], [0, 0, 1, 1], [], []>} : vector<16x256xbf16>, vector<256x128xbf16>, vector<16x128xf32> -> vector<16x128xf32>
      %c0_45 = arith.constant 0 : index
      %c0_46 = arith.constant 0 : index
      %57 = vector.load %arg15[%c0_45, %c0_46] : memref<1x128xf32, #tpu.memory_space<vmem>>, vector<1x128xf32>
      %58 = vector.broadcast %57 : vector<1x128xf32> to vector<16x128xf32>
      %59 = arith.addf %56, %58 : vector<16x128xf32>
      %60 = arith.negf %59 : vector<16x128xf32>
      %61 = math.exp %60 : vector<16x128xf32>
      %cst_47 = arith.constant 1.000000e+00 : f32
      %62 = vector.broadcast %cst_47 : f32 to vector<16x128xf32>
      %63 = arith.addf %62, %61 : vector<16x128xf32>
      %64 = arith.divf %62, %63 : vector<16x128xf32>
      %65 = math.tanh %64 : vector<16x128xf32>
      %66 = arith.mulf %37, %37 : vector<16x128xf32>
      %cst_48 = arith.constant dense<0.000000e+00> : vector<16xf32>
      %67 = vector.multi_reduction <add>, %66, %cst_48 [1] : vector<16x128xf32> to vector<16xf32>
      %68 = vector.shape_cast %67 : vector<16xf32> to vector<16x1xf32>
      %cst_49 = arith.constant 9.99999996E-13 : f32
      %69 = vector.broadcast %cst_49 : f32 to vector<16x1xf32>
      %70 = arith.addf %68, %69 : vector<16x1xf32>
      %71 = math.rsqrt %70 : vector<16x1xf32>
      %72 = vector.broadcast %71 : vector<16x1xf32> to vector<16x128xf32>
      %73 = arith.mulf %37, %72 : vector<16x128xf32>
      %c0_50 = arith.constant 0 : index
      %c0_51 = arith.constant 0 : index
      %74 = vector.load %arg16[%c0_50, %c0_51] : memref<16x128xf32, #tpu.memory_space<vmem>>, vector<16x128xf32>
      tpu.vector_store %arg16[%c0_50, %c0_51], %73 {strides = array<i32>} : memref<16x128xf32, #tpu.memory_space<vmem>>, vector<16x128xf32>,
      %75 = arith.truncf %65 : vector<16x128xf32> to vector<16x128xbf16>
      %c0_52 = arith.constant 0 : index
      %c0_53 = arith.constant 0 : index
      %76 = vector.load %arg17[%c0_52, %c0_53] : memref<16x128xbf16, #tpu.memory_space<vmem>>, vector<16x128xbf16>
      tpu.vector_store %arg17[%c0_52, %c0_53], %75 {strides = array<i32>} : memref<16x128xbf16, #tpu.memory_space<vmem>>, vector<16x128xbf16>,
    } else {
    }
    return
  }
  func.func @transform_0(%arg0: i32, %arg1: i32) -> (i32, i32) {
    %c0_i32 = arith.constant 0 : i32
    return %arg0, %arg1 : i32, i32
  }
  func.func @transform_1(%arg0: i32, %arg1: i32) -> (i32, i32) {
    %c0_i32 = arith.constant 0 : i32
    %c0_i32_0 = arith.constant 0 : i32
    return %arg1, %c0_i32 : i32, i32
  }
  func.func @transform_2(%arg0: i32, %arg1: i32) -> (i32, i32) {
    %c0_i32 = arith.constant 0 : i32
    %c0_i32_0 = arith.constant 0 : i32
    %c0_i32_1 = arith.constant 0 : i32
    return %c0_i32, %c0_i32_0 : i32, i32
  }
  func.func @transform_3(%arg0: i32, %arg1: i32) -> (i32, i32) {
    %c0_i32 = arith.constant 0 : i32
    %c0_i32_0 = arith.constant 0 : i32
    %c0_i32_1 = arith.constant 0 : i32
    return %c0_i32, %c0_i32_0 : i32, i32
  }
  func.func @transform_4(%arg0: i32, %arg1: i32) -> (i32, i32) {
    %c0_i32 = arith.constant 0 : i32
    %c0_i32_0 = arith.constant 0 : i32
    %c0_i32_1 = arith.constant 0 : i32
    return %c0_i32, %c0_i32_0 : i32, i32
  }
  func.func @transform_5(%arg0: i32, %arg1: i32) -> (i32, i32) {
    %c0_i32 = arith.constant 0 : i32
    %c0_i32_0 = arith.constant 0 : i32
    %c0_i32_1 = arith.constant 0 : i32
    return %c0_i32, %c0_i32_0 : i32, i32
  }
  func.func @transform_6(%arg0: i32, %arg1: i32) -> (i32, i32) {
    %c0_i32 = arith.constant 0 : i32
    %c0_i32_0 = arith.constant 0 : i32
    %c0_i32_1 = arith.constant 0 : i32
    return %c0_i32, %c0_i32_0 : i32, i32
  }
  func.func @transform_7(%arg0: i32, %arg1: i32) -> (i32, i32) {
    %c0_i32 = arith.constant 0 : i32
    %c0_i32_0 = arith.constant 0 : i32
    %c0_i32_1 = arith.constant 0 : i32
    return %c0_i32, %c0_i32_0 : i32, i32
  }
  func.func @transform_8(%arg0: i32, %arg1: i32) -> (i32, i32) {
    %c0_i32 = arith.constant 0 : i32
    %c0_i32_0 = arith.constant 0 : i32
    %c0_i32_1 = arith.constant 0 : i32
    return %c0_i32, %c0_i32_0 : i32, i32
  }
  func.func @transform_9(%arg0: i32, %arg1: i32) -> (i32, i32) {
    %c0_i32 = arith.constant 0 : i32
    %c0_i32_0 = arith.constant 0 : i32
    %c0_i32_1 = arith.constant 0 : i32
    return %c0_i32, %c0_i32_0 : i32, i32
  }
  func.func @transform_10(%arg0: i32, %arg1: i32) -> (i32, i32) {
    %c0_i32 = arith.constant 0 : i32
    %c0_i32_0 = arith.constant 0 : i32
    %c0_i32_1 = arith.constant 0 : i32
    return %c0_i32, %c0_i32_0 : i32, i32
  }
  func.func @transform_11(%arg0: i32, %arg1: i32) -> (i32, i32) {
    %c0_i32 = arith.constant 0 : i32
    %c0_i32_0 = arith.constant 0 : i32
    %c0_i32_1 = arith.constant 0 : i32
    return %c0_i32, %c0_i32_0 : i32, i32
  }
  func.func @transform_12(%arg0: i32, %arg1: i32) -> (i32, i32) {
    %c0_i32 = arith.constant 0 : i32
    %c0_i32_0 = arith.constant 0 : i32
    %c0_i32_1 = arith.constant 0 : i32
    return %c0_i32, %c0_i32_0 : i32, i32
  }
  func.func @transform_13(%arg0: i32, %arg1: i32) -> (i32, i32) {
    %c0_i32 = arith.constant 0 : i32
    %c0_i32_0 = arith.constant 0 : i32
    %c0_i32_1 = arith.constant 0 : i32
    return %c0_i32, %c0_i32_0 : i32, i32
  }
  func.func @transform_14(%arg0: i32, %arg1: i32) -> (i32, i32) {
    %c0_i32 = arith.constant 0 : i32
    %c0_i32_0 = arith.constant 0 : i32
    return %arg0, %c0_i32 : i32, i32
  }
  func.func @transform_15(%arg0: i32, %arg1: i32) -> (i32, i32) {
    %c0_i32 = arith.constant 0 : i32
    %c0_i32_0 = arith.constant 0 : i32
    return %arg0, %c0_i32 : i32, i32
  }
}

module attributes {stable_mosaic.version = 11 : i64} {
  func.func @kernel(%arg0: i32, %arg1: i32, %arg2: memref<16x1024xbf16, #tpu.memory_space<vmem>>, %arg3: memref<1024x128xbf16, #tpu.memory_space<vmem>>, %arg4: memref<128x256xbf16, #tpu.memory_space<vmem>>, %arg5: memref<1x256xf32, #tpu.memory_space<vmem>>, %arg6: memref<256x256xbf16, #tpu.memory_space<vmem>>, %arg7: memref<1x256xf32, #tpu.memory_space<vmem>>, %arg8: memref<256x128xbf16, #tpu.memory_space<vmem>>, %arg9: memref<1x128xf32, #tpu.memory_space<vmem>>, %arg10: memref<128x256xbf16, #tpu.memory_space<vmem>>, %arg11: memref<1x256xf32, #tpu.memory_space<vmem>>, %arg12: memref<256x256xbf16, #tpu.memory_space<vmem>>, %arg13: memref<1x256xf32, #tpu.memory_space<vmem>>, %arg14: memref<256x128xbf16, #tpu.memory_space<vmem>>, %arg15: memref<1x128xf32, #tpu.memory_space<vmem>>, %arg16: memref<16x128xf32, #tpu.memory_space<vmem>>, %arg17: memref<16x128xbf16, #tpu.memory_space<vmem>>, %arg18: memref<16x128xf32, #tpu.memory_space<vmem>>) attributes {dimension_semantics = [#tpu.dimension_semantics<parallel>, #tpu.dimension_semantics<arbitrary>], iteration_bounds = array<i64: 1, 1>, scalar_prefetch = 0 : i64, scratch_operands = 1 : i64, tpu.core_type = #tpu.core_type<tc>, window_params = [{transform_indices = @transform_0, window_bounds = array<i64: 16, 1024>}, {transform_indices = @transform_1, window_bounds = array<i64: 1024, 128>}, {pipeline_mode = #tpu.pipeline_mode<synchronous>, transform_indices = @transform_2, window_bounds = array<i64: 128, 256>}, {pipeline_mode = #tpu.pipeline_mode<synchronous>, transform_indices = @transform_3, window_bounds = array<i64: 1, 256>}, {pipeline_mode = #tpu.pipeline_mode<synchronous>, transform_indices = @transform_4, window_bounds = array<i64: 256, 256>}, {pipeline_mode = #tpu.pipeline_mode<synchronous>, transform_indices = @transform_5, window_bounds = array<i64: 1, 256>}, {pipeline_mode = #tpu.pipeline_mode<synchronous>, transform_indices = @transform_6, window_bounds = array<i64: 256, 128>}, {pipeline_mode = #tpu.pipeline_mode<synchronous>, transform_indices = @transform_7, window_bounds = array<i64: 1, 128>}, {pipeline_mode = #tpu.pipeline_mode<synchronous>, transform_indices = @transform_8, window_bounds = array<i64: 128, 256>}, {pipeline_mode = #tpu.pipeline_mode<synchronous>, transform_indices = @transform_9, window_bounds = array<i64: 1, 256>}, {pipeline_mode = #tpu.pipeline_mode<synchronous>, transform_indices = @transform_10, window_bounds = array<i64: 256, 256>}, {pipeline_mode = #tpu.pipeline_mode<synchronous>, transform_indices = @transform_11, window_bounds = array<i64: 1, 256>}, {pipeline_mode = #tpu.pipeline_mode<synchronous>, transform_indices = @transform_12, window_bounds = array<i64: 256, 128>}, {pipeline_mode = #tpu.pipeline_mode<synchronous>, transform_indices = @transform_13, window_bounds = array<i64: 1, 128>}, {transform_indices = @transform_14, window_bounds = array<i64: 16, 128>}, {transform_indices = @transform_15, window_bounds = array<i64: 16, 128>}]} {
    %c0_i32 = arith.constant 0 : i32
    %0 = arith.cmpi eq, %arg1, %c0_i32 : i32
    %1 = arith.extui %0 : i1 to i32
    %c0_i32_0 = arith.constant 0 : i32
    %2 = arith.cmpi ne, %1, %c0_i32_0 : i32
    scf.if %2 {
      %cst_10 = arith.constant 0.000000e+00 : f32
      %12 = vector.broadcast %cst_10 : f32 to vector<16x128xf32>
      %c0_11 = arith.constant 0 : index
      %c0_12 = arith.constant 0 : index
      %13 = vector.load %arg18[%c0_11, %c0_12] : memref<16x128xf32, #tpu.memory_space<vmem>>, vector<16x128xf32>
      tpu.vector_store %arg18[%c0_11, %c0_12], %12 {strides = array<i32>} : memref<16x128xf32, #tpu.memory_space<vmem>>, vector<16x128xf32>,
    } else {
    }
    %c0 = arith.constant 0 : index
    %c0_1 = arith.constant 0 : index
    %3 = vector.load %arg18[%c0, %c0_1] : memref<16x128xf32, #tpu.memory_space<vmem>>, vector<16x128xf32>
    %c0_2 = arith.constant 0 : index
    %c0_3 = arith.constant 0 : index
    %4 = vector.load %arg2[%c0_2, %c0_3] : memref<16x1024xbf16, #tpu.memory_space<vmem>>, vector<16x1024xbf16>
    %c0_4 = arith.constant 0 : index
    %c0_5 = arith.constant 0 : index
    %5 = vector.load %arg3[%c0_4, %c0_5] : memref<1024x128xbf16, #tpu.memory_space<vmem>>, vector<1024x128xbf16>
    %cst = arith.constant dense<0.000000e+00> : vector<16x128xf32>
    %6 = tpu.matmul %4, %5, %cst {dimension_numbers = #tpu.dot_dimension_numbers<[1], [0], [0], [1], [0, 0, 1, 1], [], []>} : vector<16x1024xbf16>, vector<1024x128xbf16>, vector<16x128xf32> -> vector<16x128xf32>
    %7 = arith.addf %3, %6 : vector<16x128xf32>
    %c0_6 = arith.constant 0 : index
    %c0_7 = arith.constant 0 : index
    %8 = vector.load %arg18[%c0_6, %c0_7] : memref<16x128xf32, #tpu.memory_space<vmem>>, vector<16x128xf32>
    tpu.vector_store %arg18[%c0_6, %c0_7], %7 {strides = array<i32>} : memref<16x128xf32, #tpu.memory_space<vmem>>, vector<16x128xf32>,
    %c0_i32_8 = arith.constant 0 : i32
    %9 = arith.cmpi eq, %arg1, %c0_i32_8 : i32
    %10 = arith.extui %9 : i1 to i32
    %c0_i32_9 = arith.constant 0 : i32
    %11 = arith.cmpi ne, %10, %c0_i32_9 : i32
    scf.if %11 {
      %c0_10 = arith.constant 0 : index
      %c0_11 = arith.constant 0 : index
      %12 = vector.load %arg18[%c0_10, %c0_11] : memref<16x128xf32, #tpu.memory_space<vmem>>, vector<16x128xf32>
      %13 = arith.truncf %12 : vector<16x128xf32> to vector<16x128xbf16>
      %c0_12 = arith.constant 0 : index
      %c0_13 = arith.constant 0 : index
      %14 = vector.load %arg4[%c0_12, %c0_13] : memref<128x256xbf16, #tpu.memory_space<vmem>>, vector<128x256xbf16>
      %cst_14 = arith.constant dense<0.000000e+00> : vector<16x256xf32>
      %15 = tpu.matmul %13, %14, %cst_14 {dimension_numbers = #tpu.dot_dimension_numbers<[1], [0], [0], [1], [0, 0, 1, 1], [], []>} : vector<16x128xbf16>, vector<128x256xbf16>, vector<16x256xf32> -> vector<16x256xf32>
      %c0_15 = arith.constant 0 : index
      %c0_16 = arith.constant 0 : index
      %16 = vector.load %arg5[%c0_15, %c0_16] : memref<1x256xf32, #tpu.memory_space<vmem>>, vector<1x256xf32>
      %17 = vector.broadcast %16 : vector<1x256xf32> to vector<16x256xf32>
      %18 = arith.addf %15, %17 : vector<16x256xf32>
      %cst_17 = arith.constant 0.000000e+00 : f32
      %19 = vector.broadcast %cst_17 : f32 to vector<16x256xf32>
      %20 = arith.maximumf %18, %19 : vector<16x256xf32>
      %21 = arith.truncf %20 : vector<16x256xf32> to vector<16x256xbf16>
      %c0_18 = arith.constant 0 : index
      %c0_19 = arith.constant 0 : index
      %22 = vector.load %arg6[%c0_18, %c0_19] : memref<256x256xbf16, #tpu.memory_space<vmem>>, vector<256x256xbf16>
      %cst_20 = arith.constant dense<0.000000e+00> : vector<16x256xf32>
      %23 = tpu.matmul %21, %22, %cst_20 {dimension_numbers = #tpu.dot_dimension_numbers<[1], [0], [0], [1], [0, 0, 1, 1], [], []>} : vector<16x256xbf16>, vector<256x256xbf16>, vector<16x256xf32> -> vector<16x256xf32>
      %c0_21 = arith.constant 0 : index
      %c0_22 = arith.constant 0 : index
      %24 = vector.load %arg7[%c0_21, %c0_22] : memref<1x256xf32, #tpu.memory_space<vmem>>, vector<1x256xf32>
      %25 = vector.broadcast %24 : vector<1x256xf32> to vector<16x256xf32>
      %26 = arith.addf %23, %25 : vector<16x256xf32>
      %cst_23 = arith.constant 0.000000e+00 : f32
      %27 = vector.broadcast %cst_23 : f32 to vector<16x256xf32>
      %28 = arith.maximumf %26, %27 : vector<16x256xf32>
      %29 = arith.truncf %28 : vector<16x256xf32> to vector<16x256xbf16>
      %c0_24 = arith.constant 0 : index
      %c0_25 = arith.constant 0 : index
      %30 = vector.load %arg8[%c0_24, %c0_25] : memref<256x128xbf16, #tpu.memory_space<vmem>>, vector<256x128xbf16>
      %cst_26 = arith.constant dense<0.000000e+00> : vector<16x128xf32>
      %31 = tpu.matmul %29, %30, %cst_26 {dimension_numbers = #tpu.dot_dimension_numbers<[1], [0], [0], [1], [0, 0, 1, 1], [], []>} : vector<16x256xbf16>, vector<256x128xbf16>, vector<16x128xf32> -> vector<16x128xf32>
      %c0_27 = arith.constant 0 : index
      %c0_28 = arith.constant 0 : index
      %32 = vector.load %arg9[%c0_27, %c0_28] : memref<1x128xf32, #tpu.memory_space<vmem>>, vector<1x128xf32>
      %33 = vector.broadcast %32 : vector<1x128xf32> to vector<16x128xf32>
      %34 = arith.addf %31, %33 : vector<16x128xf32>
      %cst_29 = arith.constant 1.000000e+00 : f32
      %35 = vector.broadcast %cst_29 : f32 to vector<16x128xf32>
      %36 = arith.mulf %35, %34 : vector<16x128xf32>
      %37 = math.tanh %36 : vector<16x128xf32>
      %38 = arith.truncf %37 : vector<16x128xf32> to vector<16x128xbf16>
      %c0_30 = arith.constant 0 : index
      %c0_31 = arith.constant 0 : index
      %39 = vector.load %arg10[%c0_30, %c0_31] : memref<128x256xbf16, #tpu.memory_space<vmem>>, vector<128x256xbf16>
      %cst_32 = arith.constant dense<0.000000e+00> : vector<16x256xf32>
      %40 = tpu.matmul %38, %39, %cst_32 {dimension_numbers = #tpu.dot_dimension_numbers<[1], [0], [0], [1], [0, 0, 1, 1], [], []>} : vector<16x128xbf16>, vector<128x256xbf16>, vector<16x256xf32> -> vector<16x256xf32>
      %c0_33 = arith.constant 0 : index
      %c0_34 = arith.constant 0 : index
      %41 = vector.load %arg11[%c0_33, %c0_34] : memref<1x256xf32, #tpu.memory_space<vmem>>, vector<1x256xf32>
      %42 = vector.broadcast %41 : vector<1x256xf32> to vector<16x256xf32>
      %43 = arith.addf %40, %42 : vector<16x256xf32>
      %cst_35 = arith.constant 0.000000e+00 : f32
      %44 = vector.broadcast %cst_35 : f32 to vector<16x256xf32>
      %45 = arith.maximumf %43, %44 : vector<16x256xf32>
      %46 = arith.truncf %45 : vector<16x256xf32> to vector<16x256xbf16>
      %c0_36 = arith.constant 0 : index
      %c0_37 = arith.constant 0 : index
      %47 = vector.load %arg12[%c0_36, %c0_37] : memref<256x256xbf16, #tpu.memory_space<vmem>>, vector<256x256xbf16>
      %cst_38 = arith.constant dense<0.000000e+00> : vector<16x256xf32>
      %48 = tpu.matmul %46, %47, %cst_38 {dimension_numbers = #tpu.dot_dimension_numbers<[1], [0], [0], [1], [0, 0, 1, 1], [], []>} : vector<16x256xbf16>, vector<256x256xbf16>, vector<16x256xf32> -> vector<16x256xf32>
      %c0_39 = arith.constant 0 : index
      %c0_40 = arith.constant 0 : index
      %49 = vector.load %arg13[%c0_39, %c0_40] : memref<1x256xf32, #tpu.memory_space<vmem>>, vector<1x256xf32>
      %50 = vector.broadcast %49 : vector<1x256xf32> to vector<16x256xf32>
      %51 = arith.addf %48, %50 : vector<16x256xf32>
      %cst_41 = arith.constant 0.000000e+00 : f32
      %52 = vector.broadcast %cst_41 : f32 to vector<16x256xf32>
      %53 = arith.maximumf %51, %52 : vector<16x256xf32>
      %54 = arith.truncf %53 : vector<16x256xf32> to vector<16x256xbf16>
      %c0_42 = arith.constant 0 : index
      %c0_43 = arith.constant 0 : index
      %55 = vector.load %arg14[%c0_42, %c0_43] : memref<256x128xbf16, #tpu.memory_space<vmem>>, vector<256x128xbf16>
      %cst_44 = arith.constant dense<0.000000e+00> : vector<16x128xf32>
      %56 = tpu.matmul %54, %55, %cst_44 {dimension_numbers = #tpu.dot_dimension_numbers<[1], [0], [0], [1], [0, 0, 1, 1], [], []>} : vector<16x256xbf16>, vector<256x128xbf16>, vector<16x128xf32> -> vector<16x128xf32>
      %c0_45 = arith.constant 0 : index
      %c0_46 = arith.constant 0 : index
      %57 = vector.load %arg15[%c0_45, %c0_46] : memref<1x128xf32, #tpu.memory_space<vmem>>, vector<1x128xf32>
      %58 = vector.broadcast %57 : vector<1x128xf32> to vector<16x128xf32>
      %59 = arith.addf %56, %58 : vector<16x128xf32>
      %60 = arith.negf %59 : vector<16x128xf32>
      %61 = math.exp %60 : vector<16x128xf32>
      %cst_47 = arith.constant 1.000000e+00 : f32
      %62 = vector.broadcast %cst_47 : f32 to vector<16x128xf32>
      %63 = arith.addf %62, %61 : vector<16x128xf32>
      %64 = arith.divf %62, %63 : vector<16x128xf32>
      %65 = math.tanh %64 : vector<16x128xf32>
      %66 = arith.mulf %37, %37 : vector<16x128xf32>
      %cst_48 = arith.constant dense<0.000000e+00> : vector<16xf32>
      %67 = vector.multi_reduction <add>, %66, %cst_48 [1] : vector<16x128xf32> to vector<16xf32>
      %68 = vector.shape_cast %67 : vector<16xf32> to vector<16x1xf32>
      %cst_49 = arith.constant 9.99999996E-13 : f32
      %69 = vector.broadcast %cst_49 : f32 to vector<16x1xf32>
      %70 = arith.addf %68, %69 : vector<16x1xf32>
      %71 = math.rsqrt %70 : vector<16x1xf32>
      %72 = vector.broadcast %71 : vector<16x1xf32> to vector<16x128xf32>
      %73 = arith.mulf %37, %72 : vector<16x128xf32>
      %c0_50 = arith.constant 0 : index
      %c0_51 = arith.constant 0 : index
      %74 = vector.load %arg16[%c0_50, %c0_51] : memref<16x128xf32, #tpu.memory_space<vmem>>, vector<16x128xf32>
      tpu.vector_store %arg16[%c0_50, %c0_51], %73 {strides = array<i32>} : memref<16x128xf32, #tpu.memory_space<vmem>>, vector<16x128xf32>,
      %75 = arith.truncf %65 : vector<16x128xf32> to vector<16x128xbf16>
      %c0_52 = arith.constant 0 : index
      %c0_53 = arith.constant 0 : index
      %76 = vector.load %arg17[%c0_52, %c0_53] : memref<16x128xbf16, #tpu.memory_space<vmem>>, vector<16x128xbf16>
      tpu.vector_store %arg17[%c0_52, %c0_53], %75 {strides = array<i32>} : memref<16x128xbf16, #tpu.memory_space<vmem>>, vector<16x128xbf16>,
    } else {
    }
    return
  }
  func.func @transform_0(%arg0: i32, %arg1: i32) -> (i32, i32) {
    %c0_i32 = arith.constant 0 : i32
    return %arg0, %arg1 : i32, i32
  }
  func.func @transform_1(%arg0: i32, %arg1: i32) -> (i32, i32) {
    %c0_i32 = arith.constant 0 : i32
    %c0_i32_0 = arith.constant 0 : i32
    return %arg1, %c0_i32 : i32, i32
  }
  func.func @transform_2(%arg0: i32, %arg1: i32) -> (i32, i32) {
    %c0_i32 = arith.constant 0 : i32
    %c0_i32_0 = arith.constant 0 : i32
    %c0_i32_1 = arith.constant 0 : i32
    return %c0_i32, %c0_i32_0 : i32, i32
  }
  func.func @transform_3(%arg0: i32, %arg1: i32) -> (i32, i32) {
    %c0_i32 = arith.constant 0 : i32
    %c0_i32_0 = arith.constant 0 : i32
    %c0_i32_1 = arith.constant 0 : i32
    return %c0_i32, %c0_i32_0 : i32, i32
  }
  func.func @transform_4(%arg0: i32, %arg1: i32) -> (i32, i32) {
    %c0_i32 = arith.constant 0 : i32
    %c0_i32_0 = arith.constant 0 : i32
    %c0_i32_1 = arith.constant 0 : i32
    return %c0_i32, %c0_i32_0 : i32, i32
  }
  func.func @transform_5(%arg0: i32, %arg1: i32) -> (i32, i32) {
    %c0_i32 = arith.constant 0 : i32
    %c0_i32_0 = arith.constant 0 : i32
    %c0_i32_1 = arith.constant 0 : i32
    return %c0_i32, %c0_i32_0 : i32, i32
  }
  func.func @transform_6(%arg0: i32, %arg1: i32) -> (i32, i32) {
    %c0_i32 = arith.constant 0 : i32
    %c0_i32_0 = arith.constant 0 : i32
    %c0_i32_1 = arith.constant 0 : i32
    return %c0_i32, %c0_i32_0 : i32, i32
  }
  func.func @transform_7(%arg0: i32, %arg1: i32) -> (i32, i32) {
    %c0_i32 = arith.constant 0 : i32
    %c0_i32_0 = arith.constant 0 : i32
    %c0_i32_1 = arith.constant 0 : i32
    return %c0_i32, %c0_i32_0 : i32, i32
  }
  func.func @transform_8(%arg0: i32, %arg1: i32) -> (i32, i32) {
    %c0_i32 = arith.constant 0 : i32
    %c0_i32_0 = arith.constant 0 : i32
    %c0_i32_1 = arith.constant 0 : i32
    return %c0_i32, %c0_i32_0 : i32, i32
  }
  func.func @transform_9(%arg0: i32, %arg1: i32) -> (i32, i32) {
    %c0_i32 = arith.constant 0 : i32
    %c0_i32_0 = arith.constant 0 : i32
    %c0_i32_1 = arith.constant 0 : i32
    return %c0_i32, %c0_i32_0 : i32, i32
  }
  func.func @transform_10(%arg0: i32, %arg1: i32) -> (i32, i32) {
    %c0_i32 = arith.constant 0 : i32
    %c0_i32_0 = arith.constant 0 : i32
    %c0_i32_1 = arith.constant 0 : i32
    return %c0_i32, %c0_i32_0 : i32, i32
  }
  func.func @transform_11(%arg0: i32, %arg1: i32) -> (i32, i32) {
    %c0_i32 = arith.constant 0 : i32
    %c0_i32_0 = arith.constant 0 : i32
    %c0_i32_1 = arith.constant 0 : i32
    return %c0_i32, %c0_i32_0 : i32, i32
  }
  func.func @transform_12(%arg0: i32, %arg1: i32) -> (i32, i32) {
    %c0_i32 = arith.constant 0 : i32
    %c0_i32_0 = arith.constant 0 : i32
    %c0_i32_1 = arith.constant 0 : i32
    return %c0_i32, %c0_i32_0 : i32, i32
  }
  func.func @transform_13(%arg0: i32, %arg1: i32) -> (i32, i32) {
    %c0_i32 = arith.constant 0 : i32
    %c0_i32_0 = arith.constant 0 : i32
    %c0_i32_1 = arith.constant 0 : i32
    return %c0_i32, %c0_i32_0 : i32, i32
  }
  func.func @transform_14(%arg0: i32, %arg1: i32) -> (i32, i32) {
    %c0_i32 = arith.constant 0 : i32
    %c0_i32_0 = arith.constant 0 : i32
    return %arg0, %c0_i32 : i32, i32
  }
  func.func @transform_15(%arg0: i32, %arg1: i32) -> (i32, i32) {
    %c0_i32 = arith.constant 0 : i32
    %c0_i32_0 = arith.constant 0 : i32
    return %arg0, %c0_i32 : i32, i32
  }
}

</mosaic_0001>

<llo_original>
// kernel: tpu_custom_call.1
$region0: #{tpu_custom_call.1}
  #allocation0 [shape = 'u32[]', space=smem, size = 0x4, offset = 0x4, fixed_abs, tag = 'smem constant byte address 0x4 - core index']
  #allocation1 [shape = 'u32[144,128]{1,0:T(1,128)}', space=vmem, size = 0x12000, scoped, tag = 'internal scratch']
  #allocation2 [shape = 'f32[16,128]{1,0:T(8,128)}', space=vmem, size = 0x2000, scoped, tag = 'scratch operand']
  %s0 = inlined_call_operand.hbm [shape: bf16[16,1024], index: 0, kind: input, shape index: {}]
  %s1 = inlined_call_operand.hbm [shape: bf16[1024,128], index: 1, kind: input, shape index: {}]
  %s2 = inlined_call_operand.hbm [shape: bf16[128,256], index: 2, kind: input, shape index: {}]
  %s3 = inlined_call_operand.vmem [shape: f32[1,256], index: 3, kind: input, shape index: {}]
  %s4 = inlined_call_operand.hbm [shape: bf16[256,256], index: 4, kind: input, shape index: {}]
  %s5 = inlined_call_operand.vmem [shape: f32[1,256], index: 5, kind: input, shape index: {}]
  %s6 = inlined_call_operand.hbm [shape: bf16[256,128], index: 6, kind: input, shape index: {}]
  %s7 = inlined_call_operand.vmem [shape: f32[1,128], index: 7, kind: input, shape index: {}]
  %s8 = inlined_call_operand.hbm [shape: bf16[128,256], index: 8, kind: input, shape index: {}]
  %s9 = inlined_call_operand.vmem [shape: f32[1,256], index: 9, kind: input, shape index: {}]
  %s10 = inlined_call_operand.hbm [shape: bf16[256,256], index: 10, kind: input, shape index: {}]
  %s11 = inlined_call_operand.vmem [shape: f32[1,256], index: 11, kind: input, shape index: {}]
  %s12 = inlined_call_operand.hbm [shape: bf16[256,128], index: 12, kind: input, shape index: {}]
  %s13 = inlined_call_operand.vmem [shape: f32[1,128], index: 13, kind: input, shape index: {}]
  %s14 = inlined_call_operand.hbm [shape: f32[16,128], index: 14, kind: output, shape index: {0}]
  %s15 = inlined_call_operand.hbm [shape: bf16[16,128], index: 15, kind: output, shape index: {1}]
  %16 = xla_tuple %s14, %s15
  %s17 = sld [smem:[#allocation0]]
  $region114: #{tpu_custom_call.1} parent=0
    _
  %s19 = ssub.s32 1, %s17
  %s20 = scalar_select 0, %s19, %s17
  $region1: #{tpu_custom_call.1} parent=0
    #allocation3 [shape = 'u8[32768]{0}', space=vmem, size = 0x8000, scoped, tag = 'input window, operand 0, single buffered']
    #allocation4 [shape = 's32[1]{0}', space=sflag, size = 0x4, scoped, tag = 'scoped memory for tpu_custom_call.1']
    #allocation5 [shape = 's32[1]{0}', space=sflag, size = 0x4, scoped, tag = 'scoped memory for tpu_custom_call.1']
    #allocation6 [shape = 'u8[262144]{0}', space=vmem, size = 0x40000, scoped, tag = 'input window, operand 1, single buffered']
    #allocation7 [shape = 's32[1]{0}', space=sflag, size = 0x4, scoped, tag = 'scoped memory for tpu_custom_call.1']
    #allocation8 [shape = 'u8[65536]{0}', space=vmem, size = 0x10000, scoped, tag = 'input window, operand 2, single buffered']
    #allocation9 [shape = 'u8[131072]{0}', space=vmem, size = 0x20000, scoped, tag = 'input window, operand 4, single buffered']
    #allocation10 [shape = 's32[1]{0}', space=sflag, size = 0x4, scoped, tag = 'scoped memory for tpu_custom_call.1']
    #allocation11 [shape = 'u8[65536]{0}', space=vmem, size = 0x10000, scoped, tag = 'input window, operand 6, single buffered']
    #allocation12 [shape = 'u8[65536]{0}', space=vmem, size = 0x10000, scoped, tag = 'input window, operand 8, single buffered']
    #allocation13 [shape = 's32[1]{0}', space=sflag, size = 0x4, scoped, tag = 'scoped memory for tpu_custom_call.1']
    #allocation14 [shape = 'u8[131072]{0}', space=vmem, size = 0x20000, scoped, tag = 'input window, operand 10, single buffered']
    #allocation15 [shape = 'u8[65536]{0}', space=vmem, size = 0x10000, scoped, tag = 'input window, operand 12, single buffered']
    #allocation16 [shape = 's32[1]{0}', space=sflag, size = 0x4, scoped, tag = 'scoped memory for tpu_custom_call.1']
    #allocation17 [shape = 'u8[8192]{0}', space=vmem, size = 0x2000, scoped, tag = 'output window, operand 0, single buffered']
    #allocation18 [shape = 'u8[4096]{0}', space=vmem, size = 0x1000, scoped, tag = 'output window, operand 1, single buffered']
    #allocation19 [shape = 's32[1]{0}', space=sflag, size = 0x4, scoped, tag = 'scoped memory for tpu_custom_call.1']
    %21 = vsyncpa [#allocation4], 0
    %22 = vsyncpa [#allocation7], 0
    %23 = vsyncpa [#allocation10], 0
    %24 = vsyncpa [#allocation13], 0
    %25 = vsyncpa [#allocation16], 0
    %26 = vsyncpa [#allocation5], 0
    %27 = vsyncpa [#allocation19], 0
    // Predicated region
    $region2: #{tpu_custom_call.1} parent=1 // pred_check
      _
    $region3: #{tpu_custom_call.1} parent=1 // pred_check_branch
      %29 = sbr.rel (0) target = $region5
    $region4: #{tpu_custom_call.1} parent=1 // pred_region
      %s31 = ssub.s32 1024, 1024
      %32 = vsyncadd [#allocation4], %s31
      %s33 = sshll.u32 [#allocation3], 4
      %s34 = int_to_ptr.vmem [resolvable:$true] %s33
      %39 = dma.hbm_to_vmem [thread:$0]  %s0, 1024, %s34, [#allocation4], 512, 512, 32
    $region5: #{tpu_custom_call.1} parent=1 // pred_fallthru
      _
    // Predicated region
    $region6: #{tpu_custom_call.1} parent=1 // pred_check
      _
    $region7: #{tpu_custom_call.1} parent=1 // pred_check_branch
      %41 = sbr.rel (0) target = $region9
    $region8: #{tpu_custom_call.1} parent=1 // pred_region
      %s43 = ssub.s32 8192, 8192
      %44 = vsyncadd [#allocation7], %s43
      %s45 = sshll.u32 [#allocation6], 4
      %s46 = int_to_ptr.vmem [resolvable:$true] %s45
      %51 = dma.hbm_to_vmem [thread:$0]  %s1, 8192, %s46, [#allocation7], 64, 64, 4
    $region9: #{tpu_custom_call.1} parent=1 // pred_fallthru
      _
    // Predicated region
    $region10: #{tpu_custom_call.1} parent=1 // pred_check
      _
    $region11: #{tpu_custom_call.1} parent=1 // pred_check_branch
      %53 = sbr.rel (0) target = $region13
    $region12: #{tpu_custom_call.1} parent=1 // pred_region
      %s55 = ssub.s32 2048, 2048
      %56 = vsyncadd [#allocation7], %s55
      %s57 = sshll.u32 [#allocation8], 4
      %s58 = int_to_ptr.vmem [resolvable:$true] %s57
      %63 = dma.hbm_to_vmem [thread:$0]  %s2, 2048, %s58, [#allocation7], 128, 128, 8
    $region13: #{tpu_custom_call.1} parent=1 // pred_fallthru
      _
    // Predicated region
    $region14: #{tpu_custom_call.1} parent=1 // pred_check
      _
    $region15: #{tpu_custom_call.1} parent=1 // pred_check_branch
      %65 = sbr.rel (0) target = $region17
    $region16: #{tpu_custom_call.1} parent=1 // pred_region
      _
    $region17: #{tpu_custom_call.1} parent=1 // pred_fallthru
      _
    // Predicated region
    $region18: #{tpu_custom_call.1} parent=1 // pred_check
      _
    $region19: #{tpu_custom_call.1} parent=1 // pred_check_branch
      %67 = sbr.rel (0) target = $region21
    $region20: #{tpu_custom_call.1} parent=1 // pred_region
      %s69 = ssub.s32 4096, 4096
      %70 = vsyncadd [#allocation10], %s69
      %s71 = sshll.u32 [#allocation9], 4
      %s72 = int_to_ptr.vmem [resolvable:$true] %s71
      %77 = dma.hbm_to_vmem [thread:$0]  %s4, 4096, %s72, [#allocation10], 128, 128, 8
    $region21: #{tpu_custom_call.1} parent=1 // pred_fallthru
      _
    // Predicated region
    $region22: #{tpu_custom_call.1} parent=1 // pred_check
      _
    $region23: #{tpu_custom_call.1} parent=1 // pred_check_branch
      %79 = sbr.rel (0) target = $region25
    $region24: #{tpu_custom_call.1} parent=1 // pred_region
      _
    $region25: #{tpu_custom_call.1} parent=1 // pred_fallthru
      _
    // Predicated region
    $region26: #{tpu_custom_call.1} parent=1 // pred_check
      _
    $region27: #{tpu_custom_call.1} parent=1 // pred_check_branch
      %81 = sbr.rel (0) target = $region29
    $region28: #{tpu_custom_call.1} parent=1 // pred_region
      %s83 = ssub.s32 2048, 2048
      %84 = vsyncadd [#allocation10], %s83
      %s85 = sshll.u32 [#allocation11], 4
      %s86 = int_to_ptr.vmem [resolvable:$true] %s85
      %91 = dma.hbm_to_vmem [thread:$0]  %s6, 2048, %s86, [#allocation10], 64, 64, 4
    $region29: #{tpu_custom_call.1} parent=1 // pred_fallthru
      _
    // Predicated region
    $region30: #{tpu_custom_call.1} parent=1 // pred_check
      _
    $region31: #{tpu_custom_call.1} parent=1 // pred_check_branch
      %93 = sbr.rel (0) target = $region33
    $region32: #{tpu_custom_call.1} parent=1 // pred_region
      _
    $region33: #{tpu_custom_call.1} parent=1 // pred_fallthru
      _
    // Predicated region
    $region34: #{tpu_custom_call.1} parent=1 // pred_check
      _
    $region35: #{tpu_custom_call.1} parent=1 // pred_check_branch
      %95 = sbr.rel (0) target = $region37
    $region36: #{tpu_custom_call.1} parent=1 // pred_region
      %s97 = ssub.s32 2048, 2048
      %98 = vsyncadd [#allocation13], %s97
      %s99 = sshll.u32 [#allocation12], 4
      %s100 = int_to_ptr.vmem [resolvable:$true] %s99
      %105 = dma.hbm_to_vmem [thread:$0]  %s8, 2048, %s100, [#allocation13], 128, 128, 8
    $region37: #{tpu_custom_call.1} parent=1 // pred_fallthru
      _
    // Predicated region
    $region38: #{tpu_custom_call.1} parent=1 // pred_check
      _
    $region39: #{tpu_custom_call.1} parent=1 // pred_check_branch
      %107 = sbr.rel (0) target = $region41
    $region40: #{tpu_custom_call.1} parent=1 // pred_region
      _
    $region41: #{tpu_custom_call.1} parent=1 // pred_fallthru
      _
    // Predicated region
    $region42: #{tpu_custom_call.1} parent=1 // pred_check
      _
    $region43: #{tpu_custom_call.1} parent=1 // pred_check_branch
      %109 = sbr.rel (0) target = $region45
    $region44: #{tpu_custom_call.1} parent=1 // pred_region
      %s111 = ssub.s32 4096, 4096
      %112 = vsyncadd [#allocation13], %s111
      %s113 = sshll.u32 [#allocation14], 4
      %s114 = int_to_ptr.vmem [resolvable:$true] %s113
      %119 = dma.hbm_to_vmem [thread:$0]  %s10, 4096, %s114, [#allocation13], 128, 128, 8
    $region45: #{tpu_custom_call.1} parent=1 // pred_fallthru
      _
    // Predicated region
    $region46: #{tpu_custom_call.1} parent=1 // pred_check
      _
    $region47: #{tpu_custom_call.1} parent=1 // pred_check_branch
      %121 = sbr.rel (0) target = $region49
    $region48: #{tpu_custom_call.1} parent=1 // pred_region
      _
    $region49: #{tpu_custom_call.1} parent=1 // pred_fallthru
      _
    // Predicated region
    $region50: #{tpu_custom_call.1} parent=1 // pred_check
      _
    $region51: #{tpu_custom_call.1} parent=1 // pred_check_branch
      %123 = sbr.rel (0) target = $region53
    $region52: #{tpu_custom_call.1} parent=1 // pred_region
      %s125 = ssub.s32 2048, 2048
      %126 = vsyncadd [#allocation16], %s125
      %s127 = sshll.u32 [#allocation15], 4
      %s128 = int_to_ptr.vmem [resolvable:$true] %s127
      %133 = dma.hbm_to_vmem [thread:$0]  %s12, 2048, %s128, [#allocation16], 64, 64, 4
    $region53: #{tpu_custom_call.1} parent=1 // pred_fallthru
      _
    // Predicated region
    $region54: #{tpu_custom_call.1} parent=1 // pred_check
      _
    $region55: #{tpu_custom_call.1} parent=1 // pred_check_branch
      %135 = sbr.rel (0) target = $region57
    $region56: #{tpu_custom_call.1} parent=1 // pred_region
      _
    $region57: #{tpu_custom_call.1} parent=1 // pred_fallthru
      _
    // Predicated region
    $region58: #{tpu_custom_call.1} parent=1 // pred_check
      _
    $region59: #{tpu_custom_call.1} parent=1 // pred_check_branch
      %137 = sbr.rel (0) target = $region61
    $region60: #{tpu_custom_call.1} parent=1 // pred_region
      %138 = dma.done [#allocation4], 1024
    $region61: #{tpu_custom_call.1} parent=1 // pred_fallthru
      _
    // Predicated region
    $region62: #{tpu_custom_call.1} parent=1 // pred_check
      _
    $region63: #{tpu_custom_call.1} parent=1 // pred_check_branch
      %140 = sbr.rel (0) target = $region65
    $region64: #{tpu_custom_call.1} parent=1 // pred_region
      %141 = dma.done [#allocation7], 8192
    $region65: #{tpu_custom_call.1} parent=1 // pred_fallthru
      _
    // Predicated region
    $region66: #{tpu_custom_call.1} parent=1 // pred_check
      _
    $region67: #{tpu_custom_call.1} parent=1 // pred_check_branch
      %143 = sbr.rel (0) target = $region69
    $region68: #{tpu_custom_call.1} parent=1 // pred_region
      %144 = dma.done [#allocation7], 2048
    $region69: #{tpu_custom_call.1} parent=1 // pred_fallthru
      _
    // Predicated region
    $region70: #{tpu_custom_call.1} parent=1 // pred_check
      _
    $region71: #{tpu_custom_call.1} parent=1 // pred_check_branch
      %146 = sbr.rel (0) target = $region73
    $region72: #{tpu_custom_call.1} parent=1 // pred_region
      %147 = dma.done [#allocation10], 4096
    $region73: #{tpu_custom_call.1} parent=1 // pred_fallthru
      _
    // Predicated region
    $region74: #{tpu_custom_call.1} parent=1 // pred_check
      _
    $region75: #{tpu_custom_call.1} parent=1 // pred_check_branch
      %149 = sbr.rel (0) target = $region77
    $region76: #{tpu_custom_call.1} parent=1 // pred_region
      %150 = dma.done [#allocation10], 2048
    $region77: #{tpu_custom_call.1} parent=1 // pred_fallthru
      _
    // Predicated region
    $region78: #{tpu_custom_call.1} parent=1 // pred_check
      _
    $region79: #{tpu_custom_call.1} parent=1 // pred_check_branch
      %152 = sbr.rel (0) target = $region81
    $region80: #{tpu_custom_call.1} parent=1 // pred_region
      %153 = dma.done [#allocation13], 2048
    $region81: #{tpu_custom_call.1} parent=1 // pred_fallthru
      _
    // Predicated region
    $region82: #{tpu_custom_call.1} parent=1 // pred_check
      _
    $region83: #{tpu_custom_call.1} parent=1 // pred_check_branch
      %155 = sbr.rel (0) target = $region85
    $region84: #{tpu_custom_call.1} parent=1 // pred_region
      %156 = dma.done [#allocation13], 4096
    $region85: #{tpu_custom_call.1} parent=1 // pred_fallthru
      _
    // Predicated region
    $region86: #{tpu_custom_call.1} parent=1 // pred_check
      _
    $region87: #{tpu_custom_call.1} parent=1 // pred_check_branch
      %158 = sbr.rel (0) target = $region89
    $region88: #{tpu_custom_call.1} parent=1 // pred_region
      %159 = dma.done [#allocation16], 2048
    $region89: #{tpu_custom_call.1} parent=1 // pred_fallthru
      _
    %p161 = scmp.eq.s32.totalorder 0, 0
    // Predicated region
    $region90: #{tpu_custom_call.1} parent=1 // pred_check
      %p162 = pneg %p161
    $region91: #{tpu_custom_call.1} parent=1 // pred_check_branch
      %164 = sbr.rel (%p162) target = $region93
    $region92: #{tpu_custom_call.1} parent=1 // pred_region
      %165 = vst [vmem:[#allocation2] sm:$0xff] 0.0
      %166 = vst [vmem:[#allocation2 + $0x8] sm:$0xff] 0.0
    $region93: #{tpu_custom_call.1} parent=1 // pred_fallthru
      _
    %v167 = vld [vmem:[#allocation2] sm:$0xff]
    %v168 = vld [vmem:[#allocation2 + $0x8] sm:$0xff]
    %v169 = vld [vmem:[#allocation3] sm:$0xff]
    %v170 = vld [vmem:[#allocation3 + $0x8] sm:$0xff]
    %v171 = vld [vmem:[#allocation3 + $0x10] sm:$0xff]
    %v172 = vld [vmem:[#allocation3 + $0x18] sm:$0xff]
    %v173 = vld [vmem:[#allocation3 + $0x20] sm:$0xff]
    %v174 = vld [vmem:[#allocation3 + $0x28] sm:$0xff]
    %v175 = vld [vmem:[#allocation3 + $0x30] sm:$0xff]
    %v176 = vld [vmem:[#allocation3 + $0x38] sm:$0xff]
    %v177 = vld [vmem:[#allocation6] sm:$0xf]
    %v178 = vld [vmem:[#allocation6 + $0x4] sm:$0xf]
    %v179 = vld [vmem:[#allocation6 + $0x8] sm:$0xf]
    %v180 = vld [vmem:[#allocation6 + $0xc] sm:$0xf]
    %v181 = vld [vmem:[#allocation6 + $0x10] sm:$0xf]
    %v182 = vld [vmem:[#allocation6 + $0x14] sm:$0xf]
    %v183 = vld [vmem:[#allocation6 + $0x18] sm:$0xf]
    %v184 = vld [vmem:[#allocation6 + $0x1c] sm:$0xf]
    %v185 = vld [vmem:[#allocation6 + $0x20] sm:$0xf]
    %v186 = vld [vmem:[#allocation6 + $0x24] sm:$0xf]
    %v187 = vld [vmem:[#allocation6 + $0x28] sm:$0xf]
    %v188 = vld [vmem:[#allocation6 + $0x2c] sm:$0xf]
    %v189 = vld [vmem:[#allocation6 + $0x30] sm:$0xf]
    %v190 = vld [vmem:[#allocation6 + $0x34] sm:$0xf]
    %v191 = vld [vmem:[#allocation6 + $0x38] sm:$0xf]
    %v192 = vld [vmem:[#allocation6 + $0x3c] sm:$0xf]
    %v193 = vld [vmem:[#allocation6 + $0x40] sm:$0xf]
    %v194 = vld [vmem:[#allocation6 + $0x44] sm:$0xf]
    %v195 = vld [vmem:[#allocation6 + $0x48] sm:$0xf]
    %v196 = vld [vmem:[#allocation6 + $0x4c] sm:$0xf]
    %v197 = vld [vmem:[#allocation6 + $0x50] sm:$0xf]
    %v198 = vld [vmem:[#allocation6 + $0x54] sm:$0xf]
    %v199 = vld [vmem:[#allocation6 + $0x58] sm:$0xf]
    %v200 = vld [vmem:[#allocation6 + $0x5c] sm:$0xf]
    %v201 = vld [vmem:[#allocation6 + $0x60] sm:$0xf]
    %v202 = vld [vmem:[#allocation6 + $0x64] sm:$0xf]
    %v203 = vld [vmem:[#allocation6 + $0x68] sm:$0xf]
    %v204 = vld [vmem:[#allocation6 + $0x6c] sm:$0xf]
    %v205 = vld [vmem:[#allocation6 + $0x70] sm:$0xf]
    %v206 = vld [vmem:[#allocation6 + $0x74] sm:$0xf]
    %v207 = vld [vmem:[#allocation6 + $0x78] sm:$0xf]
    %v208 = vld [vmem:[#allocation6 + $0x7c] sm:$0xf]
    %v209 = vld [vmem:[#allocation6 + $0x80] sm:$0xf]
    %v210 = vld [vmem:[#allocation6 + $0x84] sm:$0xf]
    %v211 = vld [vmem:[#allocation6 + $0x88] sm:$0xf]
    %v212 = vld [vmem:[#allocation6 + $0x8c] sm:$0xf]
    %v213 = vld [vmem:[#allocation6 + $0x90] sm:$0xf]
    %v214 = vld [vmem:[#allocation6 + $0x94] sm:$0xf]
    %v215 = vld [vmem:[#allocation6 + $0x98] sm:$0xf]
    %v216 = vld [vmem:[#allocation6 + $0x9c] sm:$0xf]
    %v217 = vld [vmem:[#allocation6 + $0xa0] sm:$0xf]
    %v218 = vld [vmem:[#allocation6 + $0xa4] sm:$0xf]
    %v219 = vld [vmem:[#allocation6 + $0xa8] sm:$0xf]
    %v220 = vld [vmem:[#allocation6 + $0xac] sm:$0xf]
    %v221 = vld [vmem:[#allocation6 + $0xb0] sm:$0xf]
    %v222 = vld [vmem:[#allocation6 + $0xb4] sm:$0xf]
    %v223 = vld [vmem:[#allocation6 + $0xb8] sm:$0xf]
    %v224 = vld [vmem:[#allocation6 + $0xbc] sm:$0xf]
    %v225 = vld [vmem:[#allocation6 + $0xc0] sm:$0xf]
    %v226 = vld [vmem:[#allocation6 + $0xc4] sm:$0xf]
    %v227 = vld [vmem:[#allocation6 + $0xc8] sm:$0xf]
    %v228 = vld [vmem:[#allocation6 + $0xcc] sm:$0xf]
    %v229 = vld [vmem:[#allocation6 + $0xd0] sm:$0xf]
    %v230 = vld [vmem:[#allocation6 + $0xd4] sm:$0xf]
    %v231 = vld [vmem:[#allocation6 + $0xd8] sm:$0xf]
    %v232 = vld [vmem:[#allocation6 + $0xdc] sm:$0xf]
    %v233 = vld [vmem:[#allocation6 + $0xe0] sm:$0xf]
    %v234 = vld [vmem:[#allocation6 + $0xe4] sm:$0xf]
    %v235 = vld [vmem:[#allocation6 + $0xe8] sm:$0xf]
    %v236 = vld [vmem:[#allocation6 + $0xec] sm:$0xf]
    %v237 = vld [vmem:[#allocation6 + $0xf0] sm:$0xf]
    %v238 = vld [vmem:[#allocation6 + $0xf4] sm:$0xf]
    %v239 = vld [vmem:[#allocation6 + $0xf8] sm:$0xf]
    %v240 = vld [vmem:[#allocation6 + $0xfc] sm:$0xf]
    %v241 = vld [vmem:[#allocation6 + $0x100] sm:$0xf]
    %v242 = vld [vmem:[#allocation6 + $0x104] sm:$0xf]
    %v243 = vld [vmem:[#allocation6 + $0x108] sm:$0xf]
    %v244 = vld [vmem:[#allocation6 + $0x10c] sm:$0xf]
    %v245 = vld [vmem:[#allocation6 + $0x110] sm:$0xf]
    %v246 = vld [vmem:[#allocation6 + $0x114] sm:$0xf]
    %v247 = vld [vmem:[#allocation6 + $0x118] sm:$0xf]
    %v248 = vld [vmem:[#allocation6 + $0x11c] sm:$0xf]
    %v249 = vld [vmem:[#allocation6 + $0x120] sm:$0xf]
    %v250 = vld [vmem:[#allocation6 + $0x124] sm:$0xf]
    %v251 = vld [vmem:[#allocation6 + $0x128] sm:$0xf]
    %v252 = vld [vmem:[#allocation6 + $0x12c] sm:$0xf]
    %v253 = vld [vmem:[#allocation6 + $0x130] sm:$0xf]
    %v254 = vld [vmem:[#allocation6 + $0x134] sm:$0xf]
    %v255 = vld [vmem:[#allocation6 + $0x138] sm:$0xf]
    %v256 = vld [vmem:[#allocation6 + $0x13c] sm:$0xf]
    %v257 = vld [vmem:[#allocation6 + $0x140] sm:$0xf]
    %v258 = vld [vmem:[#allocation6 + $0x144] sm:$0xf]
    %v259 = vld [vmem:[#allocation6 + $0x148] sm:$0xf]
    %v260 = vld [vmem:[#allocation6 + $0x14c] sm:$0xf]
    %v261 = vld [vmem:[#allocation6 + $0x150] sm:$0xf]
    %v262 = vld [vmem:[#allocation6 + $0x154] sm:$0xf]
    %v263 = vld [vmem:[#allocation6 + $0x158] sm:$0xf]
    %v264 = vld [vmem:[#allocation6 + $0x15c] sm:$0xf]
    %v265 = vld [vmem:[#allocation6 + $0x160] sm:$0xf]
    %v266 = vld [vmem:[#allocation6 + $0x164] sm:$0xf]
    %v267 = vld [vmem:[#allocation6 + $0x168] sm:$0xf]
    %v268 = vld [vmem:[#allocation6 + $0x16c] sm:$0xf]
    %v269 = vld [vmem:[#allocation6 + $0x170] sm:$0xf]
    %v270 = vld [vmem:[#allocation6 + $0x174] sm:$0xf]
    %v271 = vld [vmem:[#allocation6 + $0x178] sm:$0xf]
    %v272 = vld [vmem:[#allocation6 + $0x17c] sm:$0xf]
    %v273 = vld [vmem:[#allocation6 + $0x180] sm:$0xf]
    %v274 = vld [vmem:[#allocation6 + $0x184] sm:$0xf]
    %v275 = vld [vmem:[#allocation6 + $0x188] sm:$0xf]
    %v276 = vld [vmem:[#allocation6 + $0x18c] sm:$0xf]
    %v277 = vld [vmem:[#allocation6 + $0x190] sm:$0xf]
    %v278 = vld [vmem:[#allocation6 + $0x194] sm:$0xf]
    %v279 = vld [vmem:[#allocation6 + $0x198] sm:$0xf]
    %v280 = vld [vmem:[#allocation6 + $0x19c] sm:$0xf]
    %v281 = vld [vmem:[#allocation6 + $0x1a0] sm:$0xf]
    %v282 = vld [vmem:[#allocation6 + $0x1a4] sm:$0xf]
    %v283 = vld [vmem:[#allocation6 + $0x1a8] sm:$0xf]
    %v284 = vld [vmem:[#allocation6 + $0x1ac] sm:$0xf]
    %v285 = vld [vmem:[#allocation6 + $0x1b0] sm:$0xf]
    %v286 = vld [vmem:[#allocation6 + $0x1b4] sm:$0xf]
    %v287 = vld [vmem:[#allocation6 + $0x1b8] sm:$0xf]
    %v288 = vld [vmem:[#allocation6 + $0x1bc] sm:$0xf]
    %v289 = vld [vmem:[#allocation6 + $0x1c0] sm:$0xf]
    %v290 = vld [vmem:[#allocation6 + $0x1c4] sm:$0xf]
    %v291 = vld [vmem:[#allocation6 + $0x1c8] sm:$0xf]
    %v292 = vld [vmem:[#allocation6 + $0x1cc] sm:$0xf]
    %v293 = vld [vmem:[#allocation6 + $0x1d0] sm:$0xf]
    %v294 = vld [vmem:[#allocation6 + $0x1d4] sm:$0xf]
    %v295 = vld [vmem:[#allocation6 + $0x1d8] sm:$0xf]
    %v296 = vld [vmem:[#allocation6 + $0x1dc] sm:$0xf]
    %v297 = vld [vmem:[#allocation6 + $0x1e0] sm:$0xf]
    %v298 = vld [vmem:[#allocation6 + $0x1e4] sm:$0xf]
    %v299 = vld [vmem:[#allocation6 + $0x1e8] sm:$0xf]
    %v300 = vld [vmem:[#allocation6 + $0x1ec] sm:$0xf]
    %v301 = vld [vmem:[#allocation6 + $0x1f0] sm:$0xf]
    %v302 = vld [vmem:[#allocation6 + $0x1f4] sm:$0xf]
    %v303 = vld [vmem:[#allocation6 + $0x1f8] sm:$0xf]
    %v304 = vld [vmem:[#allocation6 + $0x1fc] sm:$0xf]
    %v313 = vunpack.c.l.b16 %v169
    %v314 = vunpack.c.h.b16 %v169
    %v315 = vunpack.c.l.b16 %v170
    %v316 = vunpack.c.h.b16 %v170
    %v317 = vunpack.c.l.b16 %v171
    %v318 = vunpack.c.h.b16 %v171
    %v319 = vunpack.c.l.b16 %v172
    %v320 = vunpack.c.h.b16 %v172
    %v321 = vunpack.c.l.b16 %v173
    %v322 = vunpack.c.h.b16 %v173
    %v323 = vunpack.c.l.b16 %v174
    %v324 = vunpack.c.h.b16 %v174
    %v325 = vunpack.c.l.b16 %v175
    %v326 = vunpack.c.h.b16 %v175
    %v327 = vunpack.c.l.b16 %v176
    %v328 = vunpack.c.h.b16 %v176
    %v329 = vpack.c.b16 %v321, %v313
    %v330 = vpack.c.b16 %v322, %v314
    %v331 = vpack.c.b16 %v323, %v315
    %v332 = vpack.c.b16 %v324, %v316
    %v333 = vpack.c.b16 %v325, %v317
    %v334 = vpack.c.b16 %v326, %v318
    %v335 = vpack.c.b16 %v327, %v319
    %v336 = vpack.c.b16 %v328, %v320
    %v473 = vunpack.c.l.b16 %v177
    %v474 = vunpack.c.l.b16 %v178
    %v475 = vunpack.c.l.b16 %v179
    %v476 = vunpack.c.l.b16 %v180
    %v477 = vunpack.c.l.b16 %v181
    %v478 = vunpack.c.l.b16 %v182
    %v479 = vunpack.c.l.b16 %v183
    %v480 = vunpack.c.l.b16 %v184
    %v481 = vunpack.c.l.b16 %v185
    %v482 = vunpack.c.l.b16 %v186
    %v483 = vunpack.c.l.b16 %v187
    %v484 = vunpack.c.l.b16 %v188
    %v485 = vunpack.c.l.b16 %v189
    %v486 = vunpack.c.l.b16 %v190
    %v487 = vunpack.c.l.b16 %v191
    %v488 = vunpack.c.l.b16 %v192
    %v489 = vunpack.c.l.b16 %v193
    %v490 = vunpack.c.l.b16 %v194
    %v491 = vunpack.c.l.b16 %v195
    %v492 = vunpack.c.l.b16 %v196
    %v493 = vunpack.c.l.b16 %v197
    %v494 = vunpack.c.l.b16 %v198
    %v495 = vunpack.c.l.b16 %v199
    %v496 = vunpack.c.l.b16 %v200
    %v497 = vunpack.c.l.b16 %v201
    %v498 = vunpack.c.l.b16 %v202
    %v499 = vunpack.c.l.b16 %v203
    %v500 = vunpack.c.l.b16 %v204
    %v501 = vunpack.c.l.b16 %v205
    %v502 = vunpack.c.l.b16 %v206
    %v503 = vunpack.c.l.b16 %v207
    %v504 = vunpack.c.l.b16 %v208
    %v505 = vunpack.c.l.b16 %v209
    %v506 = vunpack.c.l.b16 %v210
    %v507 = vunpack.c.l.b16 %v211
    %v508 = vunpack.c.l.b16 %v212
    %v509 = vunpack.c.l.b16 %v213
    %v510 = vunpack.c.l.b16 %v214
    %v511 = vunpack.c.l.b16 %v215
    %v512 = vunpack.c.l.b16 %v216
    %v513 = vunpack.c.l.b16 %v217
    %v514 = vunpack.c.l.b16 %v218
    %v515 = vunpack.c.l.b16 %v219
    %v516 = vunpack.c.l.b16 %v220
    %v517 = vunpack.c.l.b16 %v221
    %v518 = vunpack.c.l.b16 %v222
    %v519 = vunpack.c.l.b16 %v223
    %v520 = vunpack.c.l.b16 %v224
    %v521 = vunpack.c.l.b16 %v225
    %v522 = vunpack.c.l.b16 %v226
    %v523 = vunpack.c.l.b16 %v227
    %v524 = vunpack.c.l.b16 %v228
    %v525 = vunpack.c.l.b16 %v229
    %v526 = vunpack.c.l.b16 %v230
    %v527 = vunpack.c.l.b16 %v231
    %v528 = vunpack.c.l.b16 %v232
    %v529 = vunpack.c.l.b16 %v233
    %v530 = vunpack.c.l.b16 %v234
    %v531 = vunpack.c.l.b16 %v235
    %v532 = vunpack.c.l.b16 %v236
    %v533 = vunpack.c.l.b16 %v237
    %v534 = vunpack.c.l.b16 %v238
    %v535 = vunpack.c.l.b16 %v239
    %v536 = vunpack.c.l.b16 %v240
    %v537 = vunpack.c.l.b16 %v241
    %v538 = vunpack.c.l.b16 %v242
    %v539 = vunpack.c.l.b16 %v243
    %v540 = vunpack.c.l.b16 %v244
    %v541 = vunpack.c.l.b16 %v245
    %v542 = vunpack.c.l.b16 %v246
    %v543 = vunpack.c.l.b16 %v247
    %v544 = vunpack.c.l.b16 %v248
    %v545 = vunpack.c.l.b16 %v249
    %v546 = vunpack.c.l.b16 %v250
    %v547 = vunpack.c.l.b16 %v251
    %v548 = vunpack.c.l.b16 %v252
    %v549 = vunpack.c.l.b16 %v253
    %v550 = vunpack.c.l.b16 %v254
    %v551 = vunpack.c.l.b16 %v255
    %v552 = vunpack.c.l.b16 %v256
    %v553 = vunpack.c.l.b16 %v257
    %v554 = vunpack.c.l.b16 %v258
    %v555 = vunpack.c.l.b16 %v259
    %v556 = vunpack.c.l.b16 %v260
    %v557 = vunpack.c.l.b16 %v261
    %v558 = vunpack.c.l.b16 %v262
    %v559 = vunpack.c.l.b16 %v263
    %v560 = vunpack.c.l.b16 %v264
    %v561 = vunpack.c.l.b16 %v265
    %v562 = vunpack.c.l.b16 %v266
    %v563 = vunpack.c.l.b16 %v267
    %v564 = vunpack.c.l.b16 %v268
    %v565 = vunpack.c.l.b16 %v269
    %v566 = vunpack.c.l.b16 %v270
    %v567 = vunpack.c.l.b16 %v271
    %v568 = vunpack.c.l.b16 %v272
    %v569 = vunpack.c.l.b16 %v273
    %v570 = vunpack.c.l.b16 %v274
    %v571 = vunpack.c.l.b16 %v275
    %v572 = vunpack.c.l.b16 %v276
    %v573 = vunpack.c.l.b16 %v277
    %v574 = vunpack.c.l.b16 %v278
    %v575 = vunpack.c.l.b16 %v279
    %v576 = vunpack.c.l.b16 %v280
    %v577 = vunpack.c.l.b16 %v281
    %v578 = vunpack.c.l.b16 %v282
    %v579 = vunpack.c.l.b16 %v283
    %v580 = vunpack.c.l.b16 %v284
    %v581 = vunpack.c.l.b16 %v285
    %v582 = vunpack.c.l.b16 %v286
    %v583 = vunpack.c.l.b16 %v287
    %v584 = vunpack.c.l.b16 %v288
    %v585 = vunpack.c.l.b16 %v289
    %v586 = vunpack.c.l.b16 %v290
    %v587 = vunpack.c.l.b16 %v291
    %v588 = vunpack.c.l.b16 %v292
    %v589 = vunpack.c.l.b16 %v293
    %v590 = vunpack.c.l.b16 %v294
    %v591 = vunpack.c.l.b16 %v295
    %v592 = vunpack.c.l.b16 %v296
    %v593 = vunpack.c.l.b16 %v297
    %v594 = vunpack.c.l.b16 %v298
    %v595 = vunpack.c.l.b16 %v299
    %v596 = vunpack.c.l.b16 %v300
    %v597 = vunpack.c.l.b16 %v301
    %v598 = vunpack.c.l.b16 %v302
    %v599 = vunpack.c.l.b16 %v303
    %v600 = vunpack.c.l.b16 %v304
    %v601 = vpack.c.b16 %v474, %v473
    %v602 = vpack.c.b16 %v476, %v475
    %v603 = vpack.c.b16 %v478, %v477
    %v604 = vpack.c.b16 %v480, %v479
    %v605 = vpack.c.b16 %v482, %v481
    %v606 = vpack.c.b16 %v484, %v483
    %v607 = vpack.c.b16 %v486, %v485
    %v608 = vpack.c.b16 %v488, %v487
    %v609 = vpack.c.b16 %v490, %v489
    %v610 = vpack.c.b16 %v492, %v491
    %v611 = vpack.c.b16 %v494, %v493
    %v612 = vpack.c.b16 %v496, %v495
    %v613 = vpack.c.b16 %v498, %v497
    %v614 = vpack.c.b16 %v500, %v499
    %v615 = vpack.c.b16 %v502, %v501
    %v616 = vpack.c.b16 %v504, %v503
    %v617 = vpack.c.b16 %v506, %v505
    %v618 = vpack.c.b16 %v508, %v507
    %v619 = vpack.c.b16 %v510, %v509
    %v620 = vpack.c.b16 %v512, %v511
    %v621 = vpack.c.b16 %v514, %v513
    %v622 = vpack.c.b16 %v516, %v515
    %v623 = vpack.c.b16 %v518, %v517
    %v624 = vpack.c.b16 %v520, %v519
    %v625 = vpack.c.b16 %v522, %v521
    %v626 = vpack.c.b16 %v524, %v523
    %v627 = vpack.c.b16 %v526, %v525
    %v628 = vpack.c.b16 %v528, %v527
    %v629 = vpack.c.b16 %v530, %v529
    %v630 = vpack.c.b16 %v532, %v531
    %v631 = vpack.c.b16 %v534, %v533
    %v632 = vpack.c.b16 %v536, %v535
    %v633 = vpack.c.b16 %v538, %v537
    %v634 = vpack.c.b16 %v540, %v539
    %v635 = vpack.c.b16 %v542, %v541
    %v636 = vpack.c.b16 %v544, %v543
    %v637 = vpack.c.b16 %v546, %v545
    %v638 = vpack.c.b16 %v548, %v547
    %v639 = vpack.c.b16 %v550, %v549
    %v640 = vpack.c.b16 %v552, %v551
    %v641 = vpack.c.b16 %v554, %v553
    %v642 = vpack.c.b16 %v556, %v555
    %v643 = vpack.c.b16 %v558, %v557
    %v644 = vpack.c.b16 %v560, %v559
    %v645 = vpack.c.b16 %v562, %v561
    %v646 = vpack.c.b16 %v564, %v563
    %v647 = vpack.c.b16 %v566, %v565
    %v648 = vpack.c.b16 %v568, %v567
    %v649 = vpack.c.b16 %v570, %v569
    %v650 = vpack.c.b16 %v572, %v571
    %v651 = vpack.c.b16 %v574, %v573
    %v652 = vpack.c.b16 %v576, %v575
    %v653 = vpack.c.b16 %v578, %v577
    %v654 = vpack.c.b16 %v580, %v579
    %v655 = vpack.c.b16 %v582, %v581
    %v656 = vpack.c.b16 %v584, %v583
    %v657 = vpack.c.b16 %v586, %v585
    %v658 = vpack.c.b16 %v588, %v587
    %v659 = vpack.c.b16 %v590, %v589
    %v660 = vpack.c.b16 %v592, %v591
    %v661 = vpack.c.b16 %v594, %v593
    %v662 = vpack.c.b16 %v596, %v595
    %v663 = vpack.c.b16 %v598, %v597
    %v664 = vpack.c.b16 %v600, %v599
    %729 = vmatprep.subr.bf16.mxu0 0
    %730 = vmatpush1.bf16.msra.mxu0 %v601
    %731 = vmatprep.subr.bf16.mxu0 0
    %732 = vmatpush1.bf16.msra.mxu0 %v602
    %733 = vmatprep.subr.bf16.mxu0 0
    %734 = vmatpush1.bf16.msra.mxu0 %v603
    %735 = vmatprep.subr.bf16.mxu0 0
    %736 = vmatpush1.bf16.msra.mxu0 %v604
    %737 = vmatprep.subr.bf16.mxu0 0
    %738 = vmatpush1.bf16.msra.mxu0 %v605
    %739 = vmatprep.subr.bf16.mxu0 0
    %740 = vmatpush1.bf16.msra.mxu0 %v606
    %741 = vmatprep.subr.bf16.mxu0 0
    %742 = vmatpush1.bf16.msra.mxu0 %v607
    %743 = vmatprep.subr.bf16.mxu0 0
    %744 = vmatpush1.bf16.msra.mxu0 %v608
    %745 = vmatprep.subr.bf16.mxu0 0
    %746 = vmatpush1.bf16.msra.mxu0 %v609
    %747 = vmatprep.subr.bf16.mxu0 0
    %748 = vmatpush1.bf16.msra.mxu0 %v610
    %749 = vmatprep.subr.bf16.mxu0 0
    %750 = vmatpush1.bf16.msra.mxu0 %v611
    %751 = vmatprep.subr.bf16.mxu0 0
    %752 = vmatpush1.bf16.msra.mxu0 %v612
    %753 = vmatprep.subr.bf16.mxu0 0
    %754 = vmatpush1.bf16.msra.mxu0 %v613
    %755 = vmatprep.subr.bf16.mxu0 0
    %756 = vmatpush1.bf16.msra.mxu0 %v614
    %757 = vmatprep.subr.bf16.mxu0 0
    %758 = vmatpush1.bf16.msra.mxu0 %v615
    %759 = vmatprep.subr.bf16.mxu0 0
    %760 = vmatpush1.bf16.msra.mxu0 %v616
    %761 = vmatprep.mubr.bf16.mxu0 %v330
    %762 = vmatmul.mubr.bf16.gmra.mrb[0].mxu0 %v329
    %v763 = vpop.f32.mrb[0].mxu0
    %v764 = vadd.f32 0.0, %v763
    %v765 = vpop.f32.mrb[0].mxu0
    %v766 = vpop.f32.mrb[0].mxu0
    %v767 = vadd.f32 0.0, %v766
    %v768 = vpop.f32.mrb[0].mxu0
    %769 = vdwg.mxu0
    %770 = vmatprep.subr.bf16.mxu0 0
    %771 = vmatpush1.bf16.msra.mxu0 %v617
    %772 = vmatprep.subr.bf16.mxu0 0
    %773 = vmatpush1.bf16.msra.mxu0 %v618
    %774 = vmatprep.subr.bf16.mxu0 0
    %775 = vmatpush1.bf16.msra.mxu0 %v619
    %776 = vmatprep.subr.bf16.mxu0 0
    %777 = vmatpush1.bf16.msra.mxu0 %v620
    %778 = vmatprep.subr.bf16.mxu0 0
    %779 = vmatpush1.bf16.msra.mxu0 %v621
    %780 = vmatprep.subr.bf16.mxu0 0
    %781 = vmatpush1.bf16.msra.mxu0 %v622
    %782 = vmatprep.subr.bf16.mxu0 0
    %783 = vmatpush1.bf16.msra.mxu0 %v623
    %784 = vmatprep.subr.bf16.mxu0 0
    %785 = vmatpush1.bf16.msra.mxu0 %v624
    %786 = vmatprep.subr.bf16.mxu0 0
    %787 = vmatpush1.bf16.msra.mxu0 %v625
    %788 = vmatprep.subr.bf16.mxu0 0
    %789 = vmatpush1.bf16.msra.mxu0 %v626
    %790 = vmatprep.subr.bf16.mxu0 0
    %791 = vmatpush1.bf16.msra.mxu0 %v627
    %792 = vmatprep.subr.bf16.mxu0 0
    %793 = vmatpush1.bf16.msra.mxu0 %v628
    %794 = vmatprep.subr.bf16.mxu0 0
    %795 = vmatpush1.bf16.msra.mxu0 %v629
    %796 = vmatprep.subr.bf16.mxu0 0
    %797 = vmatpush1.bf16.msra.mxu0 %v630
    %798 = vmatprep.subr.bf16.mxu0 0
    %799 = vmatpush1.bf16.msra.mxu0 %v631
    %800 = vmatprep.subr.bf16.mxu0 0
    %801 = vmatpush1.bf16.msra.mxu0 %v632
    %802 = vmatprep.mubr.bf16.mxu0 %v332
    %803 = vmatmul.mubr.bf16.gmra.mrb[0].mxu0 %v331
    %v804 = vpop.f32.mrb[0].mxu0
    %v805 = vadd.f32 %v764, %v804
    %v806 = vpop.f32.mrb[0].mxu0
    %v807 = vpop.f32.mrb[0].mxu0
    %v808 = vadd.f32 %v767, %v807
    %v809 = vpop.f32.mrb[0].mxu0
    %810 = vdwg.mxu0
    %811 = vmatprep.subr.bf16.mxu0 0
    %812 = vmatpush1.bf16.msra.mxu0 %v633
    %813 = vmatprep.subr.bf16.mxu0 0
    %814 = vmatpush1.bf16.msra.mxu0 %v634
    %815 = vmatprep.subr.bf16.mxu0 0
    %816 = vmatpush1.bf16.msra.mxu0 %v635
    %817 = vmatprep.subr.bf16.mxu0 0
    %818 = vmatpush1.bf16.msra.mxu0 %v636
    %819 = vmatprep.subr.bf16.mxu0 0
    %820 = vmatpush1.bf16.msra.mxu0 %v637
    %821 = vmatprep.subr.bf16.mxu0 0
    %822 = vmatpush1.bf16.msra.mxu0 %v638
    %823 = vmatprep.subr.bf16.mxu0 0
    %824 = vmatpush1.bf16.msra.mxu0 %v639
    %825 = vmatprep.subr.bf16.mxu0 0
    %826 = vmatpush1.bf16.msra.mxu0 %v640
    %827 = vmatprep.subr.bf16.mxu0 0
    %828 = vmatpush1.bf16.msra.mxu0 %v641
    %829 = vmatprep.subr.bf16.mxu0 0
    %830 = vmatpush1.bf16.msra.mxu0 %v642
    %831 = vmatprep.subr.bf16.mxu0 0
    %832 = vmatpush1.bf16.msra.mxu0 %v643
    %833 = vmatprep.subr.bf16.mxu0 0
    %834 = vmatpush1.bf16.msra.mxu0 %v644
    %835 = vmatprep.subr.bf16.mxu0 0
    %836 = vmatpush1.bf16.msra.mxu0 %v645
    %837 = vmatprep.subr.bf16.mxu0 0
    %838 = vmatpush1.bf16.msra.mxu0 %v646
    %839 = vmatprep.subr.bf16.mxu0 0
    %840 = vmatpush1.bf16.msra.mxu0 %v647
    %841 = vmatprep.subr.bf16.mxu0 0
    %842 = vmatpush1.bf16.msra.mxu0 %v648
    %843 = vmatprep.mubr.bf16.mxu0 %v334
    %844 = vmatmul.mubr.bf16.gmra.mrb[0].mxu0 %v333
    %v845 = vpop.f32.mrb[0].mxu0
    %v846 = vadd.f32 %v805, %v845
    %v847 = vpop.f32.mrb[0].mxu0
    %v848 = vpop.f32.mrb[0].mxu0
    %v849 = vadd.f32 %v808, %v848
    %v850 = vpop.f32.mrb[0].mxu0
    %851 = vdwg.mxu0
    %852 = vmatprep.subr.bf16.mxu0 0
    %853 = vmatpush1.bf16.msra.mxu0 %v649
    %854 = vmatprep.subr.bf16.mxu0 0
    %855 = vmatpush1.bf16.msra.mxu0 %v650
    %856 = vmatprep.subr.bf16.mxu0 0
    %857 = vmatpush1.bf16.msra.mxu0 %v651
    %858 = vmatprep.subr.bf16.mxu0 0
    %859 = vmatpush1.bf16.msra.mxu0 %v652
    %860 = vmatprep.subr.bf16.mxu0 0
    %861 = vmatpush1.bf16.msra.mxu0 %v653
    %862 = vmatprep.subr.bf16.mxu0 0
    %863 = vmatpush1.bf16.msra.mxu0 %v654
    %864 = vmatprep.subr.bf16.mxu0 0
    %865 = vmatpush1.bf16.msra.mxu0 %v655
    %866 = vmatprep.subr.bf16.mxu0 0
    %867 = vmatpush1.bf16.msra.mxu0 %v656
    %868 = vmatprep.subr.bf16.mxu0 0
    %869 = vmatpush1.bf16.msra.mxu0 %v657
    %870 = vmatprep.subr.bf16.mxu0 0
    %871 = vmatpush1.bf16.msra.mxu0 %v658
    %872 = vmatprep.subr.bf16.mxu0 0
    %873 = vmatpush1.bf16.msra.mxu0 %v659
    %874 = vmatprep.subr.bf16.mxu0 0
    %875 = vmatpush1.bf16.msra.mxu0 %v660
    %876 = vmatprep.subr.bf16.mxu0 0
    %877 = vmatpush1.bf16.msra.mxu0 %v661
    %878 = vmatprep.subr.bf16.mxu0 0
    %879 = vmatpush1.bf16.msra.mxu0 %v662
    %880 = vmatprep.subr.bf16.mxu0 0
    %881 = vmatpush1.bf16.msra.mxu0 %v663
    %882 = vmatprep.subr.bf16.mxu0 0
    %883 = vmatpush1.bf16.msra.mxu0 %v664
    %884 = vmatprep.mubr.bf16.mxu0 %v336
    %885 = vmatmul.mubr.bf16.gmra.mrb[0].mxu0 %v335
    %v886 = vpop.f32.mrb[0].mxu0
    %v887 = vadd.f32 %v846, %v886
    %v888 = vpop.f32.mrb[0].mxu0
    %v889 = vpop.f32.mrb[0].mxu0
    %v890 = vadd.f32 %v849, %v889
    %v891 = vpop.f32.mrb[0].mxu0
    %892 = vdwg.mxu0
    %v893 = vadd.f32 %v167, %v887
    %v894 = vadd.f32 %v168, %v890
    %895 = vst [vmem:[#allocation2] sm:$0xff] %v893
    %896 = vst [vmem:[#allocation2 + $0x8] sm:$0xff] %v894
    // Predicated region
    $region94: #{tpu_custom_call.1} parent=1 // pred_check
      %p897 = pneg %p161
    $region95: #{tpu_custom_call.1} parent=1 // pred_check_branch
      %899 = sbr.rel (%p897) target = $region97
    $region96: #{tpu_custom_call.1} parent=1 // pred_region
      %v900 = vld [vmem:[#allocation2] sm:$0xff]
      %v901 = vld [vmem:[#allocation2 + $0x8] sm:$0xff]
      %v902 = vpack.c.bf16 %v901, %v900
      %v903 = vld [vmem:[#allocation8] sm:$0xff]
      %v904 = vld [vmem:[#allocation8 + $0x8] sm:$0xff]
      %v905 = vld [vmem:[#allocation8 + $0x10] sm:$0xff]
      %v906 = vld [vmem:[#allocation8 + $0x18] sm:$0xff]
      %v907 = vld [vmem:[#allocation8 + $0x20] sm:$0xff]
      %v908 = vld [vmem:[#allocation8 + $0x28] sm:$0xff]
      %v909 = vld [vmem:[#allocation8 + $0x30] sm:$0xff]
      %v910 = vld [vmem:[#allocation8 + $0x38] sm:$0xff]
      %v911 = vld [vmem:[#allocation8 + $0x40] sm:$0xff]
      %v912 = vld [vmem:[#allocation8 + $0x48] sm:$0xff]
      %v913 = vld [vmem:[#allocation8 + $0x50] sm:$0xff]
      %v914 = vld [vmem:[#allocation8 + $0x58] sm:$0xff]
      %v915 = vld [vmem:[#allocation8 + $0x60] sm:$0xff]
      %v916 = vld [vmem:[#allocation8 + $0x68] sm:$0xff]
      %v917 = vld [vmem:[#allocation8 + $0x70] sm:$0xff]
      %v918 = vld [vmem:[#allocation8 + $0x78] sm:$0xff]
      %v919 = vld [vmem:[%s3] sm:$0x3]
      %v921 = vlaneseq
      %v922 = vshrl.u32 %v921, 7
      %v923 = vsub.s32 0, %v922
      %v924 = vrot.slane %v919, %v923
      %v925 = vlaneseq
      %v926 = vshrl.u32 %v925, 7
      %v927 = vsub.s32 1, %v926
      %v928 = vrot.slane %v919, %v927
      %v947 = vunpack.c.l.b16 %v903
      %v948 = vunpack.c.h.b16 %v903
      %v949 = vunpack.c.l.b16 %v904
      %v950 = vunpack.c.h.b16 %v904
      %v951 = vunpack.c.l.b16 %v905
      %v952 = vunpack.c.h.b16 %v905
      %v953 = vunpack.c.l.b16 %v906
      %v954 = vunpack.c.h.b16 %v906
      %v955 = vunpack.c.l.b16 %v907
      %v956 = vunpack.c.h.b16 %v907
      %v957 = vunpack.c.l.b16 %v908
      %v958 = vunpack.c.h.b16 %v908
      %v959 = vunpack.c.l.b16 %v909
      %v960 = vunpack.c.h.b16 %v909
      %v961 = vunpack.c.l.b16 %v910
      %v962 = vunpack.c.h.b16 %v910
      %v963 = vunpack.c.l.b16 %v911
      %v964 = vunpack.c.h.b16 %v911
      %v965 = vunpack.c.l.b16 %v912
      %v966 = vunpack.c.h.b16 %v912
      %v967 = vunpack.c.l.b16 %v913
      %v968 = vunpack.c.h.b16 %v913
      %v969 = vunpack.c.l.b16 %v914
      %v970 = vunpack.c.h.b16 %v914
      %v971 = vunpack.c.l.b16 %v915
      %v972 = vunpack.c.h.b16 %v915
      %v973 = vunpack.c.l.b16 %v916
      %v974 = vunpack.c.h.b16 %v916
      %v975 = vunpack.c.l.b16 %v917
      %v976 = vunpack.c.h.b16 %v917
      %v977 = vunpack.c.l.b16 %v918
      %v978 = vunpack.c.h.b16 %v918
      %v979 = vpack.c.b16 %v949, %v947
      %v980 = vpack.c.b16 %v950, %v948
      %v981 = vpack.c.b16 %v953, %v951
      %v982 = vpack.c.b16 %v954, %v952
      %v983 = vpack.c.b16 %v957, %v955
      %v984 = vpack.c.b16 %v958, %v956
      %v985 = vpack.c.b16 %v961, %v959
      %v986 = vpack.c.b16 %v962, %v960
      %v987 = vpack.c.b16 %v965, %v963
      %v988 = vpack.c.b16 %v966, %v964
      %v989 = vpack.c.b16 %v969, %v967
      %v990 = vpack.c.b16 %v970, %v968
      %v991 = vpack.c.b16 %v973, %v971
      %v992 = vpack.c.b16 %v974, %v972
      %v993 = vpack.c.b16 %v977, %v975
      %v994 = vpack.c.b16 %v978, %v976
      %1011 = vmatprep.subr.bf16.mxu0 %v980
      %1012 = vmatpush1.bf16.msra.mxu0 %v979
      %1013 = vmatprep.subr.bf16.mxu0 %v982
      %1014 = vmatpush1.bf16.msra.mxu0 %v981
      %1015 = vmatprep.subr.bf16.mxu0 %v984
      %1016 = vmatpush1.bf16.msra.mxu0 %v983
      %1017 = vmatprep.subr.bf16.mxu0 %v986
      %1018 = vmatpush1.bf16.msra.mxu0 %v985
      %1019 = vmatprep.subr.bf16.mxu0 %v988
      %1020 = vmatpush1.bf16.msra.mxu0 %v987
      %1021 = vmatprep.subr.bf16.mxu0 %v990
      %1022 = vmatpush1.bf16.msra.mxu0 %v989
      %1023 = vmatprep.subr.bf16.mxu0 %v992
      %1024 = vmatpush1.bf16.msra.mxu0 %v991
      %1025 = vmatprep.subr.bf16.mxu0 %v994
      %1026 = vmatpush1.bf16.msra.mxu0 %v993
      %1027 = vmatprep.subr.bf16.mxu0 0
      %1028 = vmatpush1.bf16.msra.mxu0 0
      %1029 = vmatprep.subr.bf16.mxu0 0
      %1030 = vmatpush1.bf16.msra.mxu0 0
      %1031 = vmatprep.subr.bf16.mxu0 0
      %1032 = vmatpush1.bf16.msra.mxu0 0
      %1033 = vmatprep.subr.bf16.mxu0 0
      %1034 = vmatpush1.bf16.msra.mxu0 0
      %1035 = vmatprep.subr.bf16.mxu0 0
      %1036 = vmatpush1.bf16.msra.mxu0 0
      %1037 = vmatprep.subr.bf16.mxu0 0
      %1038 = vmatpush1.bf16.msra.mxu0 0
      %1039 = vmatprep.subr.bf16.mxu0 0
      %1040 = vmatpush1.bf16.msra.mxu0 0
      %1041 = vmatprep.subr.bf16.mxu0 0
      %1042 = vmatpush1.bf16.msra.mxu0 0
      %1043 = vmatprep.mubr.bf16.mxu0 0
      %1044 = vmatmul.mubr.bf16.gmra.mrb[0].mxu0 %v902
      %v1045 = vpop.f32.mrb[0].mxu0
      %v1046 = vadd.f32 %v924, %v1045
      %v1047 = vpop.f32.mrb[0].mxu0
      %v1048 = vadd.f32 %v928, %v1047
      %v1049 = vpop.f32.mrb[0].mxu0
      %v1050 = vadd.f32 %v924, %v1049
      %v1051 = vpop.f32.mrb[0].mxu0
      %v1052 = vadd.f32 %v928, %v1051
      %1053 = vdwg.mxu0
      %v1054 = vmax.f32 %v1046, 0.0
      %v1055 = vmax.f32 %v1048, 0.0
      %v1056 = vmax.f32 %v1050, 0.0
      %v1057 = vmax.f32 %v1052, 0.0
      %v1058 = vpack.c.bf16 %v1056, %v1054
      %v1059 = vpack.c.bf16 %v1057, %v1055
      %v1060 = vld [vmem:[#allocation9] sm:$0xff]
      %v1061 = vld [vmem:[#allocation9 + $0x8] sm:$0xff]
      %v1062 = vld [vmem:[#allocation9 + $0x10] sm:$0xff]
      %v1063 = vld [vmem:[#allocation9 + $0x18] sm:$0xff]
      %v1064 = vld [vmem:[#allocation9 + $0x20] sm:$0xff]
      %v1065 = vld [vmem:[#allocation9 + $0x28] sm:$0xff]
      %v1066 = vld [vmem:[#allocation9 + $0x30] sm:$0xff]
      %v1067 = vld [vmem:[#allocation9 + $0x38] sm:$0xff]
      %v1068 = vld [vmem:[#allocation9 + $0x40] sm:$0xff]
      %v1069 = vld [vmem:[#allocation9 + $0x48] sm:$0xff]
      %v1070 = vld [vmem:[#allocation9 + $0x50] sm:$0xff]
      %v1071 = vld [vmem:[#allocation9 + $0x58] sm:$0xff]
      %v1072 = vld [vmem:[#allocation9 + $0x60] sm:$0xff]
      %v1073 = vld [vmem:[#allocation9 + $0x68] sm:$0xff]
      %v1074 = vld [vmem:[#allocation9 + $0x70] sm:$0xff]
      %v1075 = vld [vmem:[#allocation9 + $0x78] sm:$0xff]
      %v1076 = vld [vmem:[#allocation9 + $0x80] sm:$0xff]
      %v1077 = vld [vmem:[#allocation9 + $0x88] sm:$0xff]
      %v1078 = vld [vmem:[#allocation9 + $0x90] sm:$0xff]
      %v1079 = vld [vmem:[#allocation9 + $0x98] sm:$0xff]
      %v1080 = vld [vmem:[#allocation9 + $0xa0] sm:$0xff]
      %v1081 = vld [vmem:[#allocation9 + $0xa8] sm:$0xff]
      %v1082 = vld [vmem:[#allocation9 + $0xb0] sm:$0xff]
      %v1083 = vld [vmem:[#allocation9 + $0xb8] sm:$0xff]
      %v1084 = vld [vmem:[#allocation9 + $0xc0] sm:$0xff]
      %v1085 = vld [vmem:[#allocation9 + $0xc8] sm:$0xff]
      %v1086 = vld [vmem:[#allocation9 + $0xd0] sm:$0xff]
      %v1087 = vld [vmem:[#allocation9 + $0xd8] sm:$0xff]
      %v1088 = vld [vmem:[#allocation9 + $0xe0] sm:$0xff]
      %v1089 = vld [vmem:[#allocation9 + $0xe8] sm:$0xff]
      %v1090 = vld [vmem:[#allocation9 + $0xf0] sm:$0xff]
      %v1091 = vld [vmem:[#allocation9 + $0xf8] sm:$0xff]
      %v1092 = vld [vmem:[%s5] sm:$0x3]
      %v1094 = vlaneseq
      %v1095 = vshrl.u32 %v1094, 7
      %v1096 = vsub.s32 0, %v1095
      %v1097 = vrot.slane %v1092, %v1096
      %v1098 = vlaneseq
      %v1099 = vshrl.u32 %v1098, 7
      %v1100 = vsub.s32 1, %v1099
      %v1101 = vrot.slane %v1092, %v1100
      %v1136 = vunpack.c.l.b16 %v1060
      %v1137 = vunpack.c.h.b16 %v1060
      %v1138 = vunpack.c.l.b16 %v1061
      %v1139 = vunpack.c.h.b16 %v1061
      %v1140 = vunpack.c.l.b16 %v1062
      %v1141 = vunpack.c.h.b16 %v1062
      %v1142 = vunpack.c.l.b16 %v1063
      %v1143 = vunpack.c.h.b16 %v1063
      %v1144 = vunpack.c.l.b16 %v1064
      %v1145 = vunpack.c.h.b16 %v1064
      %v1146 = vunpack.c.l.b16 %v1065
      %v1147 = vunpack.c.h.b16 %v1065
      %v1148 = vunpack.c.l.b16 %v1066
      %v1149 = vunpack.c.h.b16 %v1066
      %v1150 = vunpack.c.l.b16 %v1067
      %v1151 = vunpack.c.h.b16 %v1067
      %v1152 = vunpack.c.l.b16 %v1068
      %v1153 = vunpack.c.h.b16 %v1068
      %v1154 = vunpack.c.l.b16 %v1069
      %v1155 = vunpack.c.h.b16 %v1069
      %v1156 = vunpack.c.l.b16 %v1070
      %v1157 = vunpack.c.h.b16 %v1070
      %v1158 = vunpack.c.l.b16 %v1071
      %v1159 = vunpack.c.h.b16 %v1071
      %v1160 = vunpack.c.l.b16 %v1072
      %v1161 = vunpack.c.h.b16 %v1072
      %v1162 = vunpack.c.l.b16 %v1073
      %v1163 = vunpack.c.h.b16 %v1073
      %v1164 = vunpack.c.l.b16 %v1074
      %v1165 = vunpack.c.h.b16 %v1074
      %v1166 = vunpack.c.l.b16 %v1075
      %v1167 = vunpack.c.h.b16 %v1075
      %v1168 = vunpack.c.l.b16 %v1076
      %v1169 = vunpack.c.h.b16 %v1076
      %v1170 = vunpack.c.l.b16 %v1077
      %v1171 = vunpack.c.h.b16 %v1077
      %v1172 = vunpack.c.l.b16 %v1078
      %v1173 = vunpack.c.h.b16 %v1078
      %v1174 = vunpack.c.l.b16 %v1079
      %v1175 = vunpack.c.h.b16 %v1079
      %v1176 = vunpack.c.l.b16 %v1080
      %v1177 = vunpack.c.h.b16 %v1080
      %v1178 = vunpack.c.l.b16 %v1081
      %v1179 = vunpack.c.h.b16 %v1081
      %v1180 = vunpack.c.l.b16 %v1082
      %v1181 = vunpack.c.h.b16 %v1082
      %v1182 = vunpack.c.l.b16 %v1083
      %v1183 = vunpack.c.h.b16 %v1083
      %v1184 = vunpack.c.l.b16 %v1084
      %v1185 = vunpack.c.h.b16 %v1084
      %v1186 = vunpack.c.l.b16 %v1085
      %v1187 = vunpack.c.h.b16 %v1085
      %v1188 = vunpack.c.l.b16 %v1086
      %v1189 = vunpack.c.h.b16 %v1086
      %v1190 = vunpack.c.l.b16 %v1087
      %v1191 = vunpack.c.h.b16 %v1087
      %v1192 = vunpack.c.l.b16 %v1088
      %v1193 = vunpack.c.h.b16 %v1088
      %v1194 = vunpack.c.l.b16 %v1089
      %v1195 = vunpack.c.h.b16 %v1089
      %v1196 = vunpack.c.l.b16 %v1090
      %v1197 = vunpack.c.h.b16 %v1090
      %v1198 = vunpack.c.l.b16 %v1091
      %v1199 = vunpack.c.h.b16 %v1091
      %v1200 = vpack.c.b16 %v1138, %v1136
      %v1201 = vpack.c.b16 %v1139, %v1137
      %v1202 = vpack.c.b16 %v1142, %v1140
      %v1203 = vpack.c.b16 %v1143, %v1141
      %v1204 = vpack.c.b16 %v1146, %v1144
      %v1205 = vpack.c.b16 %v1147, %v1145
      %v1206 = vpack.c.b16 %v1150, %v1148
      %v1207 = vpack.c.b16 %v1151, %v1149
      %v1208 = vpack.c.b16 %v1154, %v1152
      %v1209 = vpack.c.b16 %v1155, %v1153
      %v1210 = vpack.c.b16 %v1158, %v1156
      %v1211 = vpack.c.b16 %v1159, %v1157
      %v1212 = vpack.c.b16 %v1162, %v1160
      %v1213 = vpack.c.b16 %v1163, %v1161
      %v1214 = vpack.c.b16 %v1166, %v1164
      %v1215 = vpack.c.b16 %v1167, %v1165
      %v1216 = vpack.c.b16 %v1170, %v1168
      %v1217 = vpack.c.b16 %v1171, %v1169
      %v1218 = vpack.c.b16 %v1174, %v1172
      %v1219 = vpack.c.b16 %v1175, %v1173
      %v1220 = vpack.c.b16 %v1178, %v1176
      %v1221 = vpack.c.b16 %v1179, %v1177
      %v1222 = vpack.c.b16 %v1182, %v1180
      %v1223 = vpack.c.b16 %v1183, %v1181
      %v1224 = vpack.c.b16 %v1186, %v1184
      %v1225 = vpack.c.b16 %v1187, %v1185
      %v1226 = vpack.c.b16 %v1190, %v1188
      %v1227 = vpack.c.b16 %v1191, %v1189
      %v1228 = vpack.c.b16 %v1194, %v1192
      %v1229 = vpack.c.b16 %v1195, %v1193
      %v1230 = vpack.c.b16 %v1198, %v1196
      %v1231 = vpack.c.b16 %v1199, %v1197
      %1264 = vmatprep.subr.bf16.mxu0 %v1201
      %1265 = vmatpush1.bf16.msra.mxu0 %v1200
      %1266 = vmatprep.subr.bf16.mxu0 %v1203
      %1267 = vmatpush1.bf16.msra.mxu0 %v1202
      %1268 = vmatprep.subr.bf16.mxu0 %v1205
      %1269 = vmatpush1.bf16.msra.mxu0 %v1204
      %1270 = vmatprep.subr.bf16.mxu0 %v1207
      %1271 = vmatpush1.bf16.msra.mxu0 %v1206
      %1272 = vmatprep.subr.bf16.mxu0 %v1209
      %1273 = vmatpush1.bf16.msra.mxu0 %v1208
      %1274 = vmatprep.subr.bf16.mxu0 %v1211
      %1275 = vmatpush1.bf16.msra.mxu0 %v1210
      %1276 = vmatprep.subr.bf16.mxu0 %v1213
      %1277 = vmatpush1.bf16.msra.mxu0 %v1212
      %1278 = vmatprep.subr.bf16.mxu0 %v1215
      %1279 = vmatpush1.bf16.msra.mxu0 %v1214
      %1280 = vmatprep.subr.bf16.mxu0 %v1217
      %1281 = vmatpush1.bf16.msra.mxu0 %v1216
      %1282 = vmatprep.subr.bf16.mxu0 %v1219
      %1283 = vmatpush1.bf16.msra.mxu0 %v1218
      %1284 = vmatprep.subr.bf16.mxu0 %v1221
      %1285 = vmatpush1.bf16.msra.mxu0 %v1220
      %1286 = vmatprep.subr.bf16.mxu0 %v1223
      %1287 = vmatpush1.bf16.msra.mxu0 %v1222
      %1288 = vmatprep.subr.bf16.mxu0 %v1225
      %1289 = vmatpush1.bf16.msra.mxu0 %v1224
      %1290 = vmatprep.subr.bf16.mxu0 %v1227
      %1291 = vmatpush1.bf16.msra.mxu0 %v1226
      %1292 = vmatprep.subr.bf16.mxu0 %v1229
      %1293 = vmatpush1.bf16.msra.mxu0 %v1228
      %1294 = vmatprep.subr.bf16.mxu0 %v1231
      %1295 = vmatpush1.bf16.msra.mxu0 %v1230
      %1296 = vmatprep.mubr.bf16.mxu0 %v1059
      %1297 = vmatmul.mubr.bf16.gmra.mrb[0].mxu0 %v1058
      %v1298 = vpop.f32.mrb[0].mxu0
      %v1299 = vadd.f32 %v1097, %v1298
      %v1300 = vpop.f32.mrb[0].mxu0
      %v1301 = vadd.f32 %v1101, %v1300
      %v1302 = vpop.f32.mrb[0].mxu0
      %v1303 = vadd.f32 %v1097, %v1302
      %v1304 = vpop.f32.mrb[0].mxu0
      %v1305 = vadd.f32 %v1101, %v1304
      %1306 = vdwg.mxu0
      %v1307 = vmax.f32 %v1299, 0.0
      %v1308 = vmax.f32 %v1301, 0.0
      %v1309 = vmax.f32 %v1303, 0.0
      %v1310 = vmax.f32 %v1305, 0.0
      %v1311 = vpack.c.bf16 %v1309, %v1307
      %v1312 = vpack.c.bf16 %v1310, %v1308
      %v1313 = vld [vmem:[#allocation11] sm:$0xf]
      %v1314 = vld [vmem:[#allocation11 + $0x4] sm:$0xf]
      %v1315 = vld [vmem:[#allocation11 + $0x8] sm:$0xf]
      %v1316 = vld [vmem:[#allocation11 + $0xc] sm:$0xf]
      %v1317 = vld [vmem:[#allocation11 + $0x10] sm:$0xf]
      %v1318 = vld [vmem:[#allocation11 + $0x14] sm:$0xf]
      %v1319 = vld [vmem:[#allocation11 + $0x18] sm:$0xf]
      %v1320 = vld [vmem:[#allocation11 + $0x1c] sm:$0xf]
      %v1321 = vld [vmem:[#allocation11 + $0x20] sm:$0xf]
      %v1322 = vld [vmem:[#allocation11 + $0x24] sm:$0xf]
      %v1323 = vld [vmem:[#allocation11 + $0x28] sm:$0xf]
      %v1324 = vld [vmem:[#allocation11 + $0x2c] sm:$0xf]
      %v1325 = vld [vmem:[#allocation11 + $0x30] sm:$0xf]
      %v1326 = vld [vmem:[#allocation11 + $0x34] sm:$0xf]
      %v1327 = vld [vmem:[#allocation11 + $0x38] sm:$0xf]
      %v1328 = vld [vmem:[#allocation11 + $0x3c] sm:$0xf]
      %v1329 = vld [vmem:[#allocation11 + $0x40] sm:$0xf]
      %v1330 = vld [vmem:[#allocation11 + $0x44] sm:$0xf]
      %v1331 = vld [vmem:[#allocation11 + $0x48] sm:$0xf]
      %v1332 = vld [vmem:[#allocation11 + $0x4c] sm:$0xf]
      %v1333 = vld [vmem:[#allocation11 + $0x50] sm:$0xf]
      %v1334 = vld [vmem:[#allocation11 + $0x54] sm:$0xf]
      %v1335 = vld [vmem:[#allocation11 + $0x58] sm:$0xf]
      %v1336 = vld [vmem:[#allocation11 + $0x5c] sm:$0xf]
      %v1337 = vld [vmem:[#allocation11 + $0x60] sm:$0xf]
      %v1338 = vld [vmem:[#allocation11 + $0x64] sm:$0xf]
      %v1339 = vld [vmem:[#allocation11 + $0x68] sm:$0xf]
      %v1340 = vld [vmem:[#allocation11 + $0x6c] sm:$0xf]
      %v1341 = vld [vmem:[#allocation11 + $0x70] sm:$0xf]
      %v1342 = vld [vmem:[#allocation11 + $0x74] sm:$0xf]
      %v1343 = vld [vmem:[#allocation11 + $0x78] sm:$0xf]
      %v1344 = vld [vmem:[#allocation11 + $0x7c] sm:$0xf]
      %v1345 = vld [vmem:[%s7] sm:$0x1]
      %v1347 = vlaneseq
      %v1348 = vshrl.u32 %v1347, 7
      %v1349 = vsub.s32 0, %v1348
      %v1350 = vrot.slane %v1345, %v1349
      %v1384 = vunpack.c.l.b16 %v1313
      %v1385 = vunpack.c.l.b16 %v1314
      %v1386 = vunpack.c.l.b16 %v1315
      %v1387 = vunpack.c.l.b16 %v1316
      %v1388 = vunpack.c.l.b16 %v1317
      %v1389 = vunpack.c.l.b16 %v1318
      %v1390 = vunpack.c.l.b16 %v1319
      %v1391 = vunpack.c.l.b16 %v1320
      %v1392 = vunpack.c.l.b16 %v1321
      %v1393 = vunpack.c.l.b16 %v1322
      %v1394 = vunpack.c.l.b16 %v1323
      %v1395 = vunpack.c.l.b16 %v1324
      %v1396 = vunpack.c.l.b16 %v1325
      %v1397 = vunpack.c.l.b16 %v1326
      %v1398 = vunpack.c.l.b16 %v1327
      %v1399 = vunpack.c.l.b16 %v1328
      %v1400 = vunpack.c.l.b16 %v1329
      %v1401 = vunpack.c.l.b16 %v1330
      %v1402 = vunpack.c.l.b16 %v1331
      %v1403 = vunpack.c.l.b16 %v1332
      %v1404 = vunpack.c.l.b16 %v1333
      %v1405 = vunpack.c.l.b16 %v1334
      %v1406 = vunpack.c.l.b16 %v1335
      %v1407 = vunpack.c.l.b16 %v1336
      %v1408 = vunpack.c.l.b16 %v1337
      %v1409 = vunpack.c.l.b16 %v1338
      %v1410 = vunpack.c.l.b16 %v1339
      %v1411 = vunpack.c.l.b16 %v1340
      %v1412 = vunpack.c.l.b16 %v1341
      %v1413 = vunpack.c.l.b16 %v1342
      %v1414 = vunpack.c.l.b16 %v1343
      %v1415 = vunpack.c.l.b16 %v1344
      %v1416 = vpack.c.b16 %v1385, %v1384
      %v1417 = vpack.c.b16 %v1387, %v1386
      %v1418 = vpack.c.b16 %v1389, %v1388
      %v1419 = vpack.c.b16 %v1391, %v1390
      %v1420 = vpack.c.b16 %v1393, %v1392
      %v1421 = vpack.c.b16 %v1395, %v1394
      %v1422 = vpack.c.b16 %v1397, %v1396
      %v1423 = vpack.c.b16 %v1399, %v1398
      %v1424 = vpack.c.b16 %v1401, %v1400
      %v1425 = vpack.c.b16 %v1403, %v1402
      %v1426 = vpack.c.b16 %v1405, %v1404
      %v1427 = vpack.c.b16 %v1407, %v1406
      %v1428 = vpack.c.b16 %v1409, %v1408
      %v1429 = vpack.c.b16 %v1411, %v1410
      %v1430 = vpack.c.b16 %v1413, %v1412
      %v1431 = vpack.c.b16 %v1415, %v1414
      %1448 = vmatprep.subr.bf16.mxu0 0
      %1449 = vmatpush1.bf16.msra.mxu0 %v1416
      %1450 = vmatprep.subr.bf16.mxu0 0
      %1451 = vmatpush1.bf16.msra.mxu0 %v1417
      %1452 = vmatprep.subr.bf16.mxu0 0
      %1453 = vmatpush1.bf16.msra.mxu0 %v1418
      %1454 = vmatprep.subr.bf16.mxu0 0
      %1455 = vmatpush1.bf16.msra.mxu0 %v1419
      %1456 = vmatprep.subr.bf16.mxu0 0
      %1457 = vmatpush1.bf16.msra.mxu0 %v1420
      %1458 = vmatprep.subr.bf16.mxu0 0
      %1459 = vmatpush1.bf16.msra.mxu0 %v1421
      %1460 = vmatprep.subr.bf16.mxu0 0
      %1461 = vmatpush1.bf16.msra.mxu0 %v1422
      %1462 = vmatprep.subr.bf16.mxu0 0
      %1463 = vmatpush1.bf16.msra.mxu0 %v1423
      %1464 = vmatprep.subr.bf16.mxu0 0
      %1465 = vmatpush1.bf16.msra.mxu0 %v1424
      %1466 = vmatprep.subr.bf16.mxu0 0
      %1467 = vmatpush1.bf16.msra.mxu0 %v1425
      %1468 = vmatprep.subr.bf16.mxu0 0
      %1469 = vmatpush1.bf16.msra.mxu0 %v1426
      %1470 = vmatprep.subr.bf16.mxu0 0
      %1471 = vmatpush1.bf16.msra.mxu0 %v1427
      %1472 = vmatprep.subr.bf16.mxu0 0
      %1473 = vmatpush1.bf16.msra.mxu0 %v1428
      %1474 = vmatprep.subr.bf16.mxu0 0
      %1475 = vmatpush1.bf16.msra.mxu0 %v1429
      %1476 = vmatprep.subr.bf16.mxu0 0
      %1477 = vmatpush1.bf16.msra.mxu0 %v1430
      %1478 = vmatprep.subr.bf16.mxu0 0
      %1479 = vmatpush1.bf16.msra.mxu0 %v1431
      %1480 = vmatprep.mubr.bf16.mxu0 %v1312
      %1481 = vmatmul.mubr.bf16.gmra.mrb[0].mxu0 %v1311
      %v1482 = vpop.f32.mrb[0].mxu0
      %v1483 = vadd.f32 %v1350, %v1482
      %v1484 = vpop.f32.mrb[0].mxu0
      %v1485 = vpop.f32.mrb[0].mxu0
      %v1486 = vadd.f32 %v1350, %v1485
      %v1487 = vpop.f32.mrb[0].mxu0
      %1488 = vdwg.mxu0
      %v1489 = vtanh.pop %v1483
      %v1490 = vtanh.pop %v1486
      %v1491 = vpack.c.bf16 %v1490, %v1489
      %v1492 = vld [vmem:[#allocation12] sm:$0xff]
      %v1493 = vld [vmem:[#allocation12 + $0x8] sm:$0xff]
      %v1494 = vld [vmem:[#allocation12 + $0x10] sm:$0xff]
      %v1495 = vld [vmem:[#allocation12 + $0x18] sm:$0xff]
      %v1496 = vld [vmem:[#allocation12 + $0x20] sm:$0xff]
      %v1497 = vld [vmem:[#allocation12 + $0x28] sm:$0xff]
      %v1498 = vld [vmem:[#allocation12 + $0x30] sm:$0xff]
      %v1499 = vld [vmem:[#allocation12 + $0x38] sm:$0xff]
      %v1500 = vld [vmem:[#allocation12 + $0x40] sm:$0xff]
      %v1501 = vld [vmem:[#allocation12 + $0x48] sm:$0xff]
      %v1502 = vld [vmem:[#allocation12 + $0x50] sm:$0xff]
      %v1503 = vld [vmem:[#allocation12 + $0x58] sm:$0xff]
      %v1504 = vld [vmem:[#allocation12 + $0x60] sm:$0xff]
      %v1505 = vld [vmem:[#allocation12 + $0x68] sm:$0xff]
      %v1506 = vld [vmem:[#allocation12 + $0x70] sm:$0xff]
      %v1507 = vld [vmem:[#allocation12 + $0x78] sm:$0xff]
      %v1508 = vld [vmem:[%s9] sm:$0x3]
      %v1510 = vlaneseq
      %v1511 = vshrl.u32 %v1510, 7
      %v1512 = vsub.s32 0, %v1511
      %v1513 = vrot.slane %v1508, %v1512
      %v1514 = vlaneseq
      %v1515 = vshrl.u32 %v1514, 7
      %v1516 = vsub.s32 1, %v1515
      %v1517 = vrot.slane %v1508, %v1516
      %v1536 = vunpack.c.l.b16 %v1492
      %v1537 = vunpack.c.h.b16 %v1492
      %v1538 = vunpack.c.l.b16 %v1493
      %v1539 = vunpack.c.h.b16 %v1493
      %v1540 = vunpack.c.l.b16 %v1494
      %v1541 = vunpack.c.h.b16 %v1494
      %v1542 = vunpack.c.l.b16 %v1495
      %v1543 = vunpack.c.h.b16 %v1495
      %v1544 = vunpack.c.l.b16 %v1496
      %v1545 = vunpack.c.h.b16 %v1496
      %v1546 = vunpack.c.l.b16 %v1497
      %v1547 = vunpack.c.h.b16 %v1497
      %v1548 = vunpack.c.l.b16 %v1498
      %v1549 = vunpack.c.h.b16 %v1498
      %v1550 = vunpack.c.l.b16 %v1499
      %v1551 = vunpack.c.h.b16 %v1499
      %v1552 = vunpack.c.l.b16 %v1500
      %v1553 = vunpack.c.h.b16 %v1500
      %v1554 = vunpack.c.l.b16 %v1501
      %v1555 = vunpack.c.h.b16 %v1501
      %v1556 = vunpack.c.l.b16 %v1502
      %v1557 = vunpack.c.h.b16 %v1502
      %v1558 = vunpack.c.l.b16 %v1503
      %v1559 = vunpack.c.h.b16 %v1503
      %v1560 = vunpack.c.l.b16 %v1504
      %v1561 = vunpack.c.h.b16 %v1504
      %v1562 = vunpack.c.l.b16 %v1505
      %v1563 = vunpack.c.h.b16 %v1505
      %v1564 = vunpack.c.l.b16 %v1506
      %v1565 = vunpack.c.h.b16 %v1506
      %v1566 = vunpack.c.l.b16 %v1507
      %v1567 = vunpack.c.h.b16 %v1507
      %v1568 = vpack.c.b16 %v1538, %v1536
      %v1569 = vpack.c.b16 %v1539, %v1537
      %v1570 = vpack.c.b16 %v1542, %v1540
      %v1571 = vpack.c.b16 %v1543, %v1541
      %v1572 = vpack.c.b16 %v1546, %v1544
      %v1573 = vpack.c.b16 %v1547, %v1545
      %v1574 = vpack.c.b16 %v1550, %v1548
      %v1575 = vpack.c.b16 %v1551, %v1549
      %v1576 = vpack.c.b16 %v1554, %v1552
      %v1577 = vpack.c.b16 %v1555, %v1553
      %v1578 = vpack.c.b16 %v1558, %v1556
      %v1579 = vpack.c.b16 %v1559, %v1557
      %v1580 = vpack.c.b16 %v1562, %v1560
      %v1581 = vpack.c.b16 %v1563, %v1561
      %v1582 = vpack.c.b16 %v1566, %v1564
      %v1583 = vpack.c.b16 %v1567, %v1565
      %1600 = vmatprep.subr.bf16.mxu0 %v1569
      %1601 = vmatpush1.bf16.msra.mxu0 %v1568
      %1602 = vmatprep.subr.bf16.mxu0 %v1571
      %1603 = vmatpush1.bf16.msra.mxu0 %v1570
      %1604 = vmatprep.subr.bf16.mxu0 %v1573
      %1605 = vmatpush1.bf16.msra.mxu0 %v1572
      %1606 = vmatprep.subr.bf16.mxu0 %v1575
      %1607 = vmatpush1.bf16.msra.mxu0 %v1574
      %1608 = vmatprep.subr.bf16.mxu0 %v1577
      %1609 = vmatpush1.bf16.msra.mxu0 %v1576
      %1610 = vmatprep.subr.bf16.mxu0 %v1579
      %1611 = vmatpush1.bf16.msra.mxu0 %v1578
      %1612 = vmatprep.subr.bf16.mxu0 %v1581
      %1613 = vmatpush1.bf16.msra.mxu0 %v1580
      %1614 = vmatprep.subr.bf16.mxu0 %v1583
      %1615 = vmatpush1.bf16.msra.mxu0 %v1582
      %1616 = vmatprep.subr.bf16.mxu0 0
      %1617 = vmatpush1.bf16.msra.mxu0 0
      %1618 = vmatprep.subr.bf16.mxu0 0
      %1619 = vmatpush1.bf16.msra.mxu0 0
      %1620 = vmatprep.subr.bf16.mxu0 0
      %1621 = vmatpush1.bf16.msra.mxu0 0
      %1622 = vmatprep.subr.bf16.mxu0 0
      %1623 = vmatpush1.bf16.msra.mxu0 0
      %1624 = vmatprep.subr.bf16.mxu0 0
      %1625 = vmatpush1.bf16.msra.mxu0 0
      %1626 = vmatprep.subr.bf16.mxu0 0
      %1627 = vmatpush1.bf16.msra.mxu0 0
      %1628 = vmatprep.subr.bf16.mxu0 0
      %1629 = vmatpush1.bf16.msra.mxu0 0
      %1630 = vmatprep.subr.bf16.mxu0 0
      %1631 = vmatpush1.bf16.msra.mxu0 0
      %1632 = vmatprep.mubr.bf16.mxu0 0
      %1633 = vmatmul.mubr.bf16.gmra.mrb[0].mxu0 %v1491
      %v1634 = vpop.f32.mrb[0].mxu0
      %v1635 = vadd.f32 %v1513, %v1634
      %v1636 = vpop.f32.mrb[0].mxu0
      %v1637 = vadd.f32 %v1517, %v1636
      %v1638 = vpop.f32.mrb[0].mxu0
      %v1639 = vadd.f32 %v1513, %v1638
      %v1640 = vpop.f32.mrb[0].mxu0
      %v1641 = vadd.f32 %v1517, %v1640
      %1642 = vdwg.mxu0
      %v1643 = vmax.f32 %v1635, 0.0
      %v1644 = vmax.f32 %v1637, 0.0
      %v1645 = vmax.f32 %v1639, 0.0
      %v1646 = vmax.f32 %v1641, 0.0
      %v1647 = vpack.c.bf16 %v1645, %v1643
      %v1648 = vpack.c.bf16 %v1646, %v1644
      %v1649 = vld [vmem:[#allocation14] sm:$0xff]
      %v1650 = vld [vmem:[#allocation14 + $0x8] sm:$0xff]
      %v1651 = vld [vmem:[#allocation14 + $0x10] sm:$0xff]
      %v1652 = vld [vmem:[#allocation14 + $0x18] sm:$0xff]
      %v1653 = vld [vmem:[#allocation14 + $0x20] sm:$0xff]
      %v1654 = vld [vmem:[#allocation14 + $0x28] sm:$0xff]
      %v1655 = vld [vmem:[#allocation14 + $0x30] sm:$0xff]
      %v1656 = vld [vmem:[#allocation14 + $0x38] sm:$0xff]
      %v1657 = vld [vmem:[#allocation14 + $0x40] sm:$0xff]
      %v1658 = vld [vmem:[#allocation14 + $0x48] sm:$0xff]
      %v1659 = vld [vmem:[#allocation14 + $0x50] sm:$0xff]
      %v1660 = vld [vmem:[#allocation14 + $0x58] sm:$0xff]
      %v1661 = vld [vmem:[#allocation14 + $0x60] sm:$0xff]
      %v1662 = vld [vmem:[#allocation14 + $0x68] sm:$0xff]
      %v1663 = vld [vmem:[#allocation14 + $0x70] sm:$0xff]
      %v1664 = vld [vmem:[#allocation14 + $0x78] sm:$0xff]
      %v1665 = vld [vmem:[#allocation14 + $0x80] sm:$0xff]
      %v1666 = vld [vmem:[#allocation14 + $0x88] sm:$0xff]
      %v1667 = vld [vmem:[#allocation14 + $0x90] sm:$0xff]
      %v1668 = vld [vmem:[#allocation14 + $0x98] sm:$0xff]
      %v1669 = vld [vmem:[#allocation14 + $0xa0] sm:$0xff]
      %v1670 = vld [vmem:[#allocation14 + $0xa8] sm:$0xff]
      %v1671 = vld [vmem:[#allocation14 + $0xb0] sm:$0xff]
      %v1672 = vld [vmem:[#allocation14 + $0xb8] sm:$0xff]
      %v1673 = vld [vmem:[#allocation14 + $0xc0] sm:$0xff]
      %v1674 = vld [vmem:[#allocation14 + $0xc8] sm:$0xff]
      %v1675 = vld [vmem:[#allocation14 + $0xd0] sm:$0xff]
      %v1676 = vld [vmem:[#allocation14 + $0xd8] sm:$0xff]
      %v1677 = vld [vmem:[#allocation14 + $0xe0] sm:$0xff]
      %v1678 = vld [vmem:[#allocation14 + $0xe8] sm:$0xff]
      %v1679 = vld [vmem:[#allocation14 + $0xf0] sm:$0xff]
      %v1680 = vld [vmem:[#allocation14 + $0xf8] sm:$0xff]
      %v1681 = vld [vmem:[%s11] sm:$0x3]
      %v1683 = vlaneseq
      %v1684 = vshrl.u32 %v1683, 7
      %v1685 = vsub.s32 0, %v1684
      %v1686 = vrot.slane %v1681, %v1685
      %v1687 = vlaneseq
      %v1688 = vshrl.u32 %v1687, 7
      %v1689 = vsub.s32 1, %v1688
      %v1690 = vrot.slane %v1681, %v1689
      %v1725 = vunpack.c.l.b16 %v1649
      %v1726 = vunpack.c.h.b16 %v1649
      %v1727 = vunpack.c.l.b16 %v1650
      %v1728 = vunpack.c.h.b16 %v1650
      %v1729 = vunpack.c.l.b16 %v1651
      %v1730 = vunpack.c.h.b16 %v1651
      %v1731 = vunpack.c.l.b16 %v1652
      %v1732 = vunpack.c.h.b16 %v1652
      %v1733 = vunpack.c.l.b16 %v1653
      %v1734 = vunpack.c.h.b16 %v1653
      %v1735 = vunpack.c.l.b16 %v1654
      %v1736 = vunpack.c.h.b16 %v1654
      %v1737 = vunpack.c.l.b16 %v1655
      %v1738 = vunpack.c.h.b16 %v1655
      %v1739 = vunpack.c.l.b16 %v1656
      %v1740 = vunpack.c.h.b16 %v1656
      %v1741 = vunpack.c.l.b16 %v1657
      %v1742 = vunpack.c.h.b16 %v1657
      %v1743 = vunpack.c.l.b16 %v1658
      %v1744 = vunpack.c.h.b16 %v1658
      %v1745 = vunpack.c.l.b16 %v1659
      %v1746 = vunpack.c.h.b16 %v1659
      %v1747 = vunpack.c.l.b16 %v1660
      %v1748 = vunpack.c.h.b16 %v1660
      %v1749 = vunpack.c.l.b16 %v1661
      %v1750 = vunpack.c.h.b16 %v1661
      %v1751 = vunpack.c.l.b16 %v1662
      %v1752 = vunpack.c.h.b16 %v1662
      %v1753 = vunpack.c.l.b16 %v1663
      %v1754 = vunpack.c.h.b16 %v1663
      %v1755 = vunpack.c.l.b16 %v1664
      %v1756 = vunpack.c.h.b16 %v1664
      %v1757 = vunpack.c.l.b16 %v1665
      %v1758 = vunpack.c.h.b16 %v1665
      %v1759 = vunpack.c.l.b16 %v1666
      %v1760 = vunpack.c.h.b16 %v1666
      %v1761 = vunpack.c.l.b16 %v1667
      %v1762 = vunpack.c.h.b16 %v1667
      %v1763 = vunpack.c.l.b16 %v1668
      %v1764 = vunpack.c.h.b16 %v1668
      %v1765 = vunpack.c.l.b16 %v1669
      %v1766 = vunpack.c.h.b16 %v1669
      %v1767 = vunpack.c.l.b16 %v1670
      %v1768 = vunpack.c.h.b16 %v1670
      %v1769 = vunpack.c.l.b16 %v1671
      %v1770 = vunpack.c.h.b16 %v1671
      %v1771 = vunpack.c.l.b16 %v1672
      %v1772 = vunpack.c.h.b16 %v1672
      %v1773 = vunpack.c.l.b16 %v1673
      %v1774 = vunpack.c.h.b16 %v1673
      %v1775 = vunpack.c.l.b16 %v1674
      %v1776 = vunpack.c.h.b16 %v1674
      %v1777 = vunpack.c.l.b16 %v1675
      %v1778 = vunpack.c.h.b16 %v1675
      %v1779 = vunpack.c.l.b16 %v1676
      %v1780 = vunpack.c.h.b16 %v1676
      %v1781 = vunpack.c.l.b16 %v1677
      %v1782 = vunpack.c.h.b16 %v1677
      %v1783 = vunpack.c.l.b16 %v1678
      %v1784 = vunpack.c.h.b16 %v1678
      %v1785 = vunpack.c.l.b16 %v1679
      %v1786 = vunpack.c.h.b16 %v1679
      %v1787 = vunpack.c.l.b16 %v1680
      %v1788 = vunpack.c.h.b16 %v1680
      %v1789 = vpack.c.b16 %v1727, %v1725
      %v1790 = vpack.c.b16 %v1728, %v1726
      %v1791 = vpack.c.b16 %v1731, %v1729
      %v1792 = vpack.c.b16 %v1732, %v1730
      %v1793 = vpack.c.b16 %v1735, %v1733
      %v1794 = vpack.c.b16 %v1736, %v1734
      %v1795 = vpack.c.b16 %v1739, %v1737
      %v1796 = vpack.c.b16 %v1740, %v1738
      %v1797 = vpack.c.b16 %v1743, %v1741
      %v1798 = vpack.c.b16 %v1744, %v1742
      %v1799 = vpack.c.b16 %v1747, %v1745
      %v1800 = vpack.c.b16 %v1748, %v1746
      %v1801 = vpack.c.b16 %v1751, %v1749
      %v1802 = vpack.c.b16 %v1752, %v1750
      %v1803 = vpack.c.b16 %v1755, %v1753
      %v1804 = vpack.c.b16 %v1756, %v1754
      %v1805 = vpack.c.b16 %v1759, %v1757
      %v1806 = vpack.c.b16 %v1760, %v1758
      %v1807 = vpack.c.b16 %v1763, %v1761
      %v1808 = vpack.c.b16 %v1764, %v1762
      %v1809 = vpack.c.b16 %v1767, %v1765
      %v1810 = vpack.c.b16 %v1768, %v1766
      %v1811 = vpack.c.b16 %v1771, %v1769
      %v1812 = vpack.c.b16 %v1772, %v1770
      %v1813 = vpack.c.b16 %v1775, %v1773
      %v1814 = vpack.c.b16 %v1776, %v1774
      %v1815 = vpack.c.b16 %v1779, %v1777
      %v1816 = vpack.c.b16 %v1780, %v1778
      %v1817 = vpack.c.b16 %v1783, %v1781
      %v1818 = vpack.c.b16 %v1784, %v1782
      %v1819 = vpack.c.b16 %v1787, %v1785
      %v1820 = vpack.c.b16 %v1788, %v1786
      %1853 = vmatprep.subr.bf16.mxu0 %v1790
      %1854 = vmatpush1.bf16.msra.mxu0 %v1789
      %1855 = vmatprep.subr.bf16.mxu0 %v1792
      %1856 = vmatpush1.bf16.msra.mxu0 %v1791
      %1857 = vmatprep.subr.bf16.mxu0 %v1794
      %1858 = vmatpush1.bf16.msra.mxu0 %v1793
      %1859 = vmatprep.subr.bf16.mxu0 %v1796
      %1860 = vmatpush1.bf16.msra.mxu0 %v1795
      %1861 = vmatprep.subr.bf16.mxu0 %v1798
      %1862 = vmatpush1.bf16.msra.mxu0 %v1797
      %1863 = vmatprep.subr.bf16.mxu0 %v1800
      %1864 = vmatpush1.bf16.msra.mxu0 %v1799
      %1865 = vmatprep.subr.bf16.mxu0 %v1802
      %1866 = vmatpush1.bf16.msra.mxu0 %v1801
      %1867 = vmatprep.subr.bf16.mxu0 %v1804
      %1868 = vmatpush1.bf16.msra.mxu0 %v1803
      %1869 = vmatprep.subr.bf16.mxu0 %v1806
      %1870 = vmatpush1.bf16.msra.mxu0 %v1805
      %1871 = vmatprep.subr.bf16.mxu0 %v1808
      %1872 = vmatpush1.bf16.msra.mxu0 %v1807
      %1873 = vmatprep.subr.bf16.mxu0 %v1810
      %1874 = vmatpush1.bf16.msra.mxu0 %v1809
      %1875 = vmatprep.subr.bf16.mxu0 %v1812
      %1876 = vmatpush1.bf16.msra.mxu0 %v1811
      %1877 = vmatprep.subr.bf16.mxu0 %v1814
      %1878 = vmatpush1.bf16.msra.mxu0 %v1813
      %1879 = vmatprep.subr.bf16.mxu0 %v1816
      %1880 = vmatpush1.bf16.msra.mxu0 %v1815
      %1881 = vmatprep.subr.bf16.mxu0 %v1818
      %1882 = vmatpush1.bf16.msra.mxu0 %v1817
      %1883 = vmatprep.subr.bf16.mxu0 %v1820
      %1884 = vmatpush1.bf16.msra.mxu0 %v1819
      %1885 = vmatprep.mubr.bf16.mxu0 %v1648
      %1886 = vmatmul.mubr.bf16.gmra.mrb[0].mxu0 %v1647
      %v1887 = vpop.f32.mrb[0].mxu0
      %v1888 = vadd.f32 %v1686, %v1887
      %v1889 = vpop.f32.mrb[0].mxu0
      %v1890 = vadd.f32 %v1690, %v1889
      %v1891 = vpop.f32.mrb[0].mxu0
      %v1892 = vadd.f32 %v1686, %v1891
      %v1893 = vpop.f32.mrb[0].mxu0
      %v1894 = vadd.f32 %v1690, %v1893
      %1895 = vdwg.mxu0
      %v1896 = vmax.f32 %v1888, 0.0
      %v1897 = vmax.f32 %v1890, 0.0
      %v1898 = vmax.f32 %v1892, 0.0
      %v1899 = vmax.f32 %v1894, 0.0
      %v1900 = vpack.c.bf16 %v1898, %v1896
      %v1901 = vpack.c.bf16 %v1899, %v1897
      %v1902 = vld [vmem:[#allocation15] sm:$0xf]
      %v1903 = vld [vmem:[#allocation15 + $0x4] sm:$0xf]
      %v1904 = vld [vmem:[#allocation15 + $0x8] sm:$0xf]
      %v1905 = vld [vmem:[#allocation15 + $0xc] sm:$0xf]
      %v1906 = vld [vmem:[#allocation15 + $0x10] sm:$0xf]
      %v1907 = vld [vmem:[#allocation15 + $0x14] sm:$0xf]
      %v1908 = vld [vmem:[#allocation15 + $0x18] sm:$0xf]
      %v1909 = vld [vmem:[#allocation15 + $0x1c] sm:$0xf]
      %v1910 = vld [vmem:[#allocation15 + $0x20] sm:$0xf]
      %v1911 = vld [vmem:[#allocation15 + $0x24] sm:$0xf]
      %v1912 = vld [vmem:[#allocation15 + $0x28] sm:$0xf]
      %v1913 = vld [vmem:[#allocation15 + $0x2c] sm:$0xf]
      %v1914 = vld [vmem:[#allocation15 + $0x30] sm:$0xf]
      %v1915 = vld [vmem:[#allocation15 + $0x34] sm:$0xf]
      %v1916 = vld [vmem:[#allocation15 + $0x38] sm:$0xf]
      %v1917 = vld [vmem:[#allocation15 + $0x3c] sm:$0xf]
      %v1918 = vld [vmem:[#allocation15 + $0x40] sm:$0xf]
      %v1919 = vld [vmem:[#allocation15 + $0x44] sm:$0xf]
      %v1920 = vld [vmem:[#allocation15 + $0x48] sm:$0xf]
      %v1921 = vld [vmem:[#allocation15 + $0x4c] sm:$0xf]
      %v1922 = vld [vmem:[#allocation15 + $0x50] sm:$0xf]
      %v1923 = vld [vmem:[#allocation15 + $0x54] sm:$0xf]
      %v1924 = vld [vmem:[#allocation15 + $0x58] sm:$0xf]
      %v1925 = vld [vmem:[#allocation15 + $0x5c] sm:$0xf]
      %v1926 = vld [vmem:[#allocation15 + $0x60] sm:$0xf]
      %v1927 = vld [vmem:[#allocation15 + $0x64] sm:$0xf]
      %v1928 = vld [vmem:[#allocation15 + $0x68] sm:$0xf]
      %v1929 = vld [vmem:[#allocation15 + $0x6c] sm:$0xf]
      %v1930 = vld [vmem:[#allocation15 + $0x70] sm:$0xf]
      %v1931 = vld [vmem:[#allocation15 + $0x74] sm:$0xf]
      %v1932 = vld [vmem:[#allocation15 + $0x78] sm:$0xf]
      %v1933 = vld [vmem:[#allocation15 + $0x7c] sm:$0xf]
      %v1934 = vld [vmem:[%s13] sm:$0x1]
      %v1936 = vlaneseq
      %v1937 = vshrl.u32 %v1936, 7
      %v1938 = vsub.s32 0, %v1937
      %v1939 = vrot.slane %v1934, %v1938
      %v1973 = vunpack.c.l.b16 %v1902
      %v1974 = vunpack.c.l.b16 %v1903
      %v1975 = vunpack.c.l.b16 %v1904
      %v1976 = vunpack.c.l.b16 %v1905
      %v1977 = vunpack.c.l.b16 %v1906
      %v1978 = vunpack.c.l.b16 %v1907
      %v1979 = vunpack.c.l.b16 %v1908
      %v1980 = vunpack.c.l.b16 %v1909
      %v1981 = vunpack.c.l.b16 %v1910
      %v1982 = vunpack.c.l.b16 %v1911
      %v1983 = vunpack.c.l.b16 %v1912
      %v1984 = vunpack.c.l.b16 %v1913
      %v1985 = vunpack.c.l.b16 %v1914
      %v1986 = vunpack.c.l.b16 %v1915
      %v1987 = vunpack.c.l.b16 %v1916
      %v1988 = vunpack.c.l.b16 %v1917
      %v1989 = vunpack.c.l.b16 %v1918
      %v1990 = vunpack.c.l.b16 %v1919
      %v1991 = vunpack.c.l.b16 %v1920
      %v1992 = vunpack.c.l.b16 %v1921
      %v1993 = vunpack.c.l.b16 %v1922
      %v1994 = vunpack.c.l.b16 %v1923
      %v1995 = vunpack.c.l.b16 %v1924
      %v1996 = vunpack.c.l.b16 %v1925
      %v1997 = vunpack.c.l.b16 %v1926
      %v1998 = vunpack.c.l.b16 %v1927
      %v1999 = vunpack.c.l.b16 %v1928
      %v2000 = vunpack.c.l.b16 %v1929
      %v2001 = vunpack.c.l.b16 %v1930
      %v2002 = vunpack.c.l.b16 %v1931
      %v2003 = vunpack.c.l.b16 %v1932
      %v2004 = vunpack.c.l.b16 %v1933
      %v2005 = vpack.c.b16 %v1974, %v1973
      %v2006 = vpack.c.b16 %v1976, %v1975
      %v2007 = vpack.c.b16 %v1978, %v1977
      %v2008 = vpack.c.b16 %v1980, %v1979
      %v2009 = vpack.c.b16 %v1982, %v1981
      %v2010 = vpack.c.b16 %v1984, %v1983
      %v2011 = vpack.c.b16 %v1986, %v1985
      %v2012 = vpack.c.b16 %v1988, %v1987
      %v2013 = vpack.c.b16 %v1990, %v1989
      %v2014 = vpack.c.b16 %v1992, %v1991
      %v2015 = vpack.c.b16 %v1994, %v1993
      %v2016 = vpack.c.b16 %v1996, %v1995
      %v2017 = vpack.c.b16 %v1998, %v1997
      %v2018 = vpack.c.b16 %v2000, %v1999
      %v2019 = vpack.c.b16 %v2002, %v2001
      %v2020 = vpack.c.b16 %v2004, %v2003
      %2037 = vmatprep.subr.bf16.mxu0 0
      %2038 = vmatpush1.bf16.msra.mxu0 %v2005
      %2039 = vmatprep.subr.bf16.mxu0 0
      %2040 = vmatpush1.bf16.msra.mxu0 %v2006
      %2041 = vmatprep.subr.bf16.mxu0 0
      %2042 = vmatpush1.bf16.msra.mxu0 %v2007
      %2043 = vmatprep.subr.bf16.mxu0 0
      %2044 = vmatpush1.bf16.msra.mxu0 %v2008
      %2045 = vmatprep.subr.bf16.mxu0 0
      %2046 = vmatpush1.bf16.msra.mxu0 %v2009
      %2047 = vmatprep.subr.bf16.mxu0 0
      %2048 = vmatpush1.bf16.msra.mxu0 %v2010
      %2049 = vmatprep.subr.bf16.mxu0 0
      %2050 = vmatpush1.bf16.msra.mxu0 %v2011
      %2051 = vmatprep.subr.bf16.mxu0 0
      %2052 = vmatpush1.bf16.msra.mxu0 %v2012
      %2053 = vmatprep.subr.bf16.mxu0 0
      %2054 = vmatpush1.bf16.msra.mxu0 %v2013
      %2055 = vmatprep.subr.bf16.mxu0 0
      %2056 = vmatpush1.bf16.msra.mxu0 %v2014
      %2057 = vmatprep.subr.bf16.mxu0 0
      %2058 = vmatpush1.bf16.msra.mxu0 %v2015
      %2059 = vmatprep.subr.bf16.mxu0 0
      %2060 = vmatpush1.bf16.msra.mxu0 %v2016
      %2061 = vmatprep.subr.bf16.mxu0 0
      %2062 = vmatpush1.bf16.msra.mxu0 %v2017
      %2063 = vmatprep.subr.bf16.mxu0 0
      %2064 = vmatpush1.bf16.msra.mxu0 %v2018
      %2065 = vmatprep.subr.bf16.mxu0 0
      %2066 = vmatpush1.bf16.msra.mxu0 %v2019
      %2067 = vmatprep.subr.bf16.mxu0 0
      %2068 = vmatpush1.bf16.msra.mxu0 %v2020
      %2069 = vmatprep.mubr.bf16.mxu0 %v1901
      %2070 = vmatmul.mubr.bf16.gmra.mrb[0].mxu0 %v1900
      %v2071 = vpop.f32.mrb[0].mxu0
      %v2072 = vadd.f32 %v1939, %v2071
      %v2073 = vpop.f32.mrb[0].mxu0
      %v2074 = vpop.f32.mrb[0].mxu0
      %v2075 = vadd.f32 %v1939, %v2074
      %v2076 = vpop.f32.mrb[0].mxu0
      %2077 = vdwg.mxu0
      %v2078 = vxor.u32 %v2072, 2147483648
      %v2079 = vxor.u32 %v2075, 2147483648
      %v2080 = vmul.f32 %v2078, 1.442695
      %v2081 = vpow.pop %v2080
      %v2082 = vmul.f32 %v2079, 1.442695
      %v2083 = vpow.pop %v2082
      %v2084 = vadd.f32 %v2081, 1.0
      %v2085 = vadd.f32 %v2083, 1.0
      %v2086 = vrcp.pop %v2084
      %v2087 = vmul.f32 1.0, %v2086
      %v2088 = vrcp.pop %v2085
      %v2089 = vmul.f32 1.0, %v2088
      %v2090 = vtanh.pop %v2087
      %v2091 = vtanh.pop %v2089
      %v2092 = vmul.f32 %v1489, %v1489
      %v2093 = vmul.f32 %v1490, %v1490
      %2094 = vadd.xlane.f32.xlu0 %v2092
      %v2095 = vpop.xlane.xlu0 %2094
      %2096 = vadd.xlane.f32.xlu0 %v2093
      %v2097 = vpop.xlane.xlu0 %2096
      %v2098 = vadd.f32 %v2095, 1e-12
      %v2099 = vadd.f32 %v2097, 1e-12
      %v2100 = vrsqrt.pop %v2098
      %v2101 = vrsqrt.pop %v2099
      %v2102 = vmul.f32 %v1489, %v2100
      %v2103 = vmul.f32 %v1490, %v2101
      %2104 = vst [vmem:[#allocation17] sm:$0xff] %v2102
      %2105 = vst [vmem:[#allocation17 + $0x8] sm:$0xff] %v2103
      %v2106 = vpack.c.bf16 %v2091, %v2090
      %v2108 = vunpack.c.l.b16 %v2106
      %v2109 = vunpack.c.h.b16 %v2106
      %v2110 = vpack.c.b16 %v2108, %v2108
      %v2111 = vpack.c.b16 %v2109, %v2109
      %2114 = vst [vmem:[#allocation18] sm:$0xf] %v2110
      %2115 = vst [vmem:[#allocation18 + $0x4] sm:$0xf] %v2111
    $region97: #{tpu_custom_call.1} parent=1 // pred_fallthru
      _
    // Predicated region
    $region98: #{tpu_custom_call.1} parent=1 // pred_check
      _
    $region99: #{tpu_custom_call.1} parent=1 // pred_check_branch
      %2117 = sbr.rel (0) target = $region101
    $region100: #{tpu_custom_call.1} parent=1 // pred_region
      %s2119 = ssub.s32 256, 256
      %2120 = vsyncadd [#allocation5], %s2119
      %s2121 = sshll.u32 [#allocation17], 4
      %s2122 = int_to_ptr.vmem [resolvable:$true] %s2121
      %2127 = dma.vmem_to_hbm [thread:$0]  %s2122, 256, %s14, [#allocation5], 128, 128, 8
    $region101: #{tpu_custom_call.1} parent=1 // pred_fallthru
      _
    // Predicated region
    $region102: #{tpu_custom_call.1} parent=1 // pred_check
      _
    $region103: #{tpu_custom_call.1} parent=1 // pred_check_branch
      %2129 = sbr.rel (0) target = $region105
    $region104: #{tpu_custom_call.1} parent=1 // pred_region
      %s2131 = ssub.s32 128, 128
      %2132 = vsyncadd [#allocation19], %s2131
      %s2133 = sshll.u32 [#allocation18], 4
      %s2134 = int_to_ptr.vmem [resolvable:$true] %s2133
      %2139 = dma.vmem_to_hbm [thread:$0]  %s2134, 128, %s15, [#allocation19], 64, 64, 4
    $region105: #{tpu_custom_call.1} parent=1 // pred_fallthru
      _
    // Predicated region
    $region106: #{tpu_custom_call.1} parent=1 // pred_check
      _
    $region107: #{tpu_custom_call.1} parent=1 // pred_check_branch
      %2141 = sbr.rel (0) target = $region109
    $region108: #{tpu_custom_call.1} parent=1 // pred_region
      %2142 = dma.done [#allocation5], 256
    $region109: #{tpu_custom_call.1} parent=1 // pred_fallthru
      _
    // Predicated region
    $region110: #{tpu_custom_call.1} parent=1 // pred_check
      _
    $region111: #{tpu_custom_call.1} parent=1 // pred_check_branch
      %2144 = sbr.rel (0) target = $region113
    $region112: #{tpu_custom_call.1} parent=1 // pred_region
      %2145 = dma.done [#allocation19], 128
    $region113: #{tpu_custom_call.1} parent=1 // pred_fallthru
      _
    %2146 = vsyncpa [#allocation4], 1
    %2147 = vsyncpa [#allocation7], 1
    %2148 = vsyncpa [#allocation10], 1
    %2149 = vsyncpa [#allocation13], 1
    %2150 = vsyncpa [#allocation16], 1
    %2151 = vsyncpa [#allocation5], 1
    %2152 = vsyncpa [#allocation19], 1

// kernel: tpu_custom_call.1
$region0: #{tpu_custom_call.1}
  #allocation0 [shape = 'u32[]', space=smem, size = 0x4, offset = 0x4, fixed_abs, tag = 'smem constant byte address 0x4 - core index']
  #allocation1 [shape = 'u32[144,128]{1,0:T(1,128)}', space=vmem, size = 0x12000, scoped, tag = 'internal scratch']
  #allocation2 [shape = 'f32[16,128]{1,0:T(8,128)}', space=vmem, size = 0x2000, scoped, tag = 'scratch operand']
  %s0 = inlined_call_operand.hbm [shape: bf16[16,1024], index: 0, kind: input, shape index: {}]
  %s1 = inlined_call_operand.hbm [shape: bf16[1024,128], index: 1, kind: input, shape index: {}]
  %s2 = inlined_call_operand.hbm [shape: bf16[128,256], index: 2, kind: input, shape index: {}]
  %s3 = inlined_call_operand.vmem [shape: f32[1,256], index: 3, kind: input, shape index: {}]
  %s4 = inlined_call_operand.hbm [shape: bf16[256,256], index: 4, kind: input, shape index: {}]
  %s5 = inlined_call_operand.vmem [shape: f32[1,256], index: 5, kind: input, shape index: {}]
  %s6 = inlined_call_operand.hbm [shape: bf16[256,128], index: 6, kind: input, shape index: {}]
  %s7 = inlined_call_operand.vmem [shape: f32[1,128], index: 7, kind: input, shape index: {}]
  %s8 = inlined_call_operand.hbm [shape: bf16[128,256], index: 8, kind: input, shape index: {}]
  %s9 = inlined_call_operand.vmem [shape: f32[1,256], index: 9, kind: input, shape index: {}]
  %s10 = inlined_call_operand.hbm [shape: bf16[256,256], index: 10, kind: input, shape index: {}]
  %s11 = inlined_call_operand.vmem [shape: f32[1,256], index: 11, kind: input, shape index: {}]
  %s12 = inlined_call_operand.hbm [shape: bf16[256,128], index: 12, kind: input, shape index: {}]
  %s13 = inlined_call_operand.vmem [shape: f32[1,128], index: 13, kind: input, shape index: {}]
  %s14 = inlined_call_operand.hbm [shape: f32[16,128], index: 14, kind: output, shape index: {0}]
  %s15 = inlined_call_operand.hbm [shape: bf16[16,128], index: 15, kind: output, shape index: {1}]
  %16 = xla_tuple %s14, %s15
  %s17 = sld [smem:[#allocation0]]
  $region114: #{tpu_custom_call.1} parent=0
    _
  %s19 = ssub.s32 1, %s17
  %s20 = scalar_select 0, %s19, %s17
  $region1: #{tpu_custom_call.1} parent=0
    #allocation3 [shape = 'u8[32768]{0}', space=vmem, size = 0x8000, scoped, tag = 'input window, operand 0, single buffered']
    #allocation4 [shape = 's32[1]{0}', space=sflag, size = 0x4, scoped, tag = 'scoped memory for tpu_custom_call.1']
    #allocation5 [shape = 's32[1]{0}', space=sflag, size = 0x4, scoped, tag = 'scoped memory for tpu_custom_call.1']
    #allocation6 [shape = 'u8[262144]{0}', space=vmem, size = 0x40000, scoped, tag = 'input window, operand 1, single buffered']
    #allocation7 [shape = 's32[1]{0}', space=sflag, size = 0x4, scoped, tag = 'scoped memory for tpu_custom_call.1']
    #allocation8 [shape = 'u8[65536]{0}', space=vmem, size = 0x10000, scoped, tag = 'input window, operand 2, single buffered']
    #allocation9 [shape = 'u8[131072]{0}', space=vmem, size = 0x20000, scoped, tag = 'input window, operand 4, single buffered']
    #allocation10 [shape = 's32[1]{0}', space=sflag, size = 0x4, scoped, tag = 'scoped memory for tpu_custom_call.1']
    #allocation11 [shape = 'u8[65536]{0}', space=vmem, size = 0x10000, scoped, tag = 'input window, operand 6, single buffered']
    #allocation12 [shape = 'u8[65536]{0}', space=vmem, size = 0x10000, scoped, tag = 'input window, operand 8, single buffered']
    #allocation13 [shape = 's32[1]{0}', space=sflag, size = 0x4, scoped, tag = 'scoped memory for tpu_custom_call.1']
    #allocation14 [shape = 'u8[131072]{0}', space=vmem, size = 0x20000, scoped, tag = 'input window, operand 10, single buffered']
    #allocation15 [shape = 'u8[65536]{0}', space=vmem, size = 0x10000, scoped, tag = 'input window, operand 12, single buffered']
    #allocation16 [shape = 's32[1]{0}', space=sflag, size = 0x4, scoped, tag = 'scoped memory for tpu_custom_call.1']
    #allocation17 [shape = 'u8[8192]{0}', space=vmem, size = 0x2000, scoped, tag = 'output window, operand 0, single buffered']
    #allocation18 [shape = 'u8[4096]{0}', space=vmem, size = 0x1000, scoped, tag = 'output window, operand 1, single buffered']
    #allocation19 [shape = 's32[1]{0}', space=sflag, size = 0x4, scoped, tag = 'scoped memory for tpu_custom_call.1']
    %21 = vsyncpa [#allocation4], 0
    %22 = vsyncpa [#allocation7], 0
    %23 = vsyncpa [#allocation10], 0
    %24 = vsyncpa [#allocation13], 0
    %25 = vsyncpa [#allocation16], 0
    %26 = vsyncpa [#allocation5], 0
    %27 = vsyncpa [#allocation19], 0
    // Predicated region
    $region2: #{tpu_custom_call.1} parent=1 // pred_check
      _
    $region3: #{tpu_custom_call.1} parent=1 // pred_check_branch
      %29 = sbr.rel (0) target = $region5
    $region4: #{tpu_custom_call.1} parent=1 // pred_region
      %s31 = ssub.s32 1024, 1024
      %32 = vsyncadd [#allocation4], %s31
      %s33 = sshll.u32 [#allocation3], 4
      %s34 = int_to_ptr.vmem [resolvable:$true] %s33
      %39 = dma.hbm_to_vmem [thread:$0]  %s0, 1024, %s34, [#allocation4], 512, 512, 32
    $region5: #{tpu_custom_call.1} parent=1 // pred_fallthru
      _
    // Predicated region
    $region6: #{tpu_custom_call.1} parent=1 // pred_check
      _
    $region7: #{tpu_custom_call.1} parent=1 // pred_check_branch
      %41 = sbr.rel (0) target = $region9
    $region8: #{tpu_custom_call.1} parent=1 // pred_region
      %s43 = ssub.s32 8192, 8192
      %44 = vsyncadd [#allocation7], %s43
      %s45 = sshll.u32 [#allocation6], 4
      %s46 = int_to_ptr.vmem [resolvable:$true] %s45
      %51 = dma.hbm_to_vmem [thread:$0]  %s1, 8192, %s46, [#allocation7], 64, 64, 4
    $region9: #{tpu_custom_call.1} parent=1 // pred_fallthru
      _
    // Predicated region
    $region10: #{tpu_custom_call.1} parent=1 // pred_check
      _
    $region11: #{tpu_custom_call.1} parent=1 // pred_check_branch
      %53 = sbr.rel (0) target = $region13
    $region12: #{tpu_custom_call.1} parent=1 // pred_region
      %s55 = ssub.s32 2048, 2048
      %56 = vsyncadd [#allocation7], %s55
      %s57 = sshll.u32 [#allocation8], 4
      %s58 = int_to_ptr.vmem [resolvable:$true] %s57
      %63 = dma.hbm_to_vmem [thread:$0]  %s2, 2048, %s58, [#allocation7], 128, 128, 8
    $region13: #{tpu_custom_call.1} parent=1 // pred_fallthru
      _
    // Predicated region
    $region14: #{tpu_custom_call.1} parent=1 // pred_check
      _
    $region15: #{tpu_custom_call.1} parent=1 // pred_check_branch
      %65 = sbr.rel (0) target = $region17
    $region16: #{tpu_custom_call.1} parent=1 // pred_region
      _
    $region17: #{tpu_custom_call.1} parent=1 // pred_fallthru
      _
    // Predicated region
    $region18: #{tpu_custom_call.1} parent=1 // pred_check
      _
    $region19: #{tpu_custom_call.1} parent=1 // pred_check_branch
      %67 = sbr.rel (0) target = $region21
    $region20: #{tpu_custom_call.1} parent=1 // pred_region
      %s69 = ssub.s32 4096, 4096
      %70 = vsyncadd [#allocation10], %s69
      %s71 = sshll.u32 [#allocation9], 4
      %s72 = int_to_ptr.vmem [resolvable:$true] %s71
      %77 = dma.hbm_to_vmem [thread:$0]  %s4, 4096, %s72, [#allocation10], 128, 128, 8
    $region21: #{tpu_custom_call.1} parent=1 // pred_fallthru
      _
    // Predicated region
    $region22: #{tpu_custom_call.1} parent=1 // pred_check
      _
    $region23: #{tpu_custom_call.1} parent=1 // pred_check_branch
      %79 = sbr.rel (0) target = $region25
    $region24: #{tpu_custom_call.1} parent=1 // pred_region
      _
    $region25: #{tpu_custom_call.1} parent=1 // pred_fallthru
      _
    // Predicated region
    $region26: #{tpu_custom_call.1} parent=1 // pred_check
      _
    $region27: #{tpu_custom_call.1} parent=1 // pred_check_branch
      %81 = sbr.rel (0) target = $region29
    $region28: #{tpu_custom_call.1} parent=1 // pred_region
      %s83 = ssub.s32 2048, 2048
      %84 = vsyncadd [#allocation10], %s83
      %s85 = sshll.u32 [#allocation11], 4
      %s86 = int_to_ptr.vmem [resolvable:$true] %s85
      %91 = dma.hbm_to_vmem [thread:$0]  %s6, 2048, %s86, [#allocation10], 64, 64, 4
    $region29: #{tpu_custom_call.1} parent=1 // pred_fallthru
      _
    // Predicated region
    $region30: #{tpu_custom_call.1} parent=1 // pred_check
      _
    $region31: #{tpu_custom_call.1} parent=1 // pred_check_branch
      %93 = sbr.rel (0) target = $region33
    $region32: #{tpu_custom_call.1} parent=1 // pred_region
      _
    $region33: #{tpu_custom_call.1} parent=1 // pred_fallthru
      _
    // Predicated region
    $region34: #{tpu_custom_call.1} parent=1 // pred_check
      _
    $region35: #{tpu_custom_call.1} parent=1 // pred_check_branch
      %95 = sbr.rel (0) target = $region37
    $region36: #{tpu_custom_call.1} parent=1 // pred_region
      %s97 = ssub.s32 2048, 2048
      %98 = vsyncadd [#allocation13], %s97
      %s99 = sshll.u32 [#allocation12], 4
      %s100 = int_to_ptr.vmem [resolvable:$true] %s99
      %105 = dma.hbm_to_vmem [thread:$0]  %s8, 2048, %s100, [#allocation13], 128, 128, 8
    $region37: #{tpu_custom_call.1} parent=1 // pred_fallthru
      _
    // Predicated region
    $region38: #{tpu_custom_call.1} parent=1 // pred_check
      _
    $region39: #{tpu_custom_call.1} parent=1 // pred_check_branch
      %107 = sbr.rel (0) target = $region41
    $region40: #{tpu_custom_call.1} parent=1 // pred_region
      _
    $region41: #{tpu_custom_call.1} parent=1 // pred_fallthru
      _
    // Predicated region
    $region42: #{tpu_custom_call.1} parent=1 // pred_check
      _
    $region43: #{tpu_custom_call.1} parent=1 // pred_check_branch
      %109 = sbr.rel (0) target = $region45
    $region44: #{tpu_custom_call.1} parent=1 // pred_region
      %s111 = ssub.s32 4096, 4096
      %112 = vsyncadd [#allocation13], %s111
      %s113 = sshll.u32 [#allocation14], 4
      %s114 = int_to_ptr.vmem [resolvable:$true] %s113
      %119 = dma.hbm_to_vmem [thread:$0]  %s10, 4096, %s114, [#allocation13], 128, 128, 8
    $region45: #{tpu_custom_call.1} parent=1 // pred_fallthru
      _
    // Predicated region
    $region46: #{tpu_custom_call.1} parent=1 // pred_check
      _
    $region47: #{tpu_custom_call.1} parent=1 // pred_check_branch
      %121 = sbr.rel (0) target = $region49
    $region48: #{tpu_custom_call.1} parent=1 // pred_region
      _
    $region49: #{tpu_custom_call.1} parent=1 // pred_fallthru
      _
    // Predicated region
    $region50: #{tpu_custom_call.1} parent=1 // pred_check
      _
    $region51: #{tpu_custom_call.1} parent=1 // pred_check_branch
      %123 = sbr.rel (0) target = $region53
    $region52: #{tpu_custom_call.1} parent=1 // pred_region
      %s125 = ssub.s32 2048, 2048
      %126 = vsyncadd [#allocation16], %s125
      %s127 = sshll.u32 [#allocation15], 4
      %s128 = int_to_ptr.vmem [resolvable:$true] %s127
      %133 = dma.hbm_to_vmem [thread:$0]  %s12, 2048, %s128, [#allocation16], 64, 64, 4
    $region53: #{tpu_custom_call.1} parent=1 // pred_fallthru
      _
    // Predicated region
    $region54: #{tpu_custom_call.1} parent=1 // pred_check
      _
    $region55: #{tpu_custom_call.1} parent=1 // pred_check_branch
      %135 = sbr.rel (0) target = $region57
    $region56: #{tpu_custom_call.1} parent=1 // pred_region
      _
    $region57: #{tpu_custom_call.1} parent=1 // pred_fallthru
      _
    // Predicated region
    $region58: #{tpu_custom_call.1} parent=1 // pred_check
      _
    $region59: #{tpu_custom_call.1} parent=1 // pred_check_branch
      %137 = sbr.rel (0) target = $region61
    $region60: #{tpu_custom_call.1} parent=1 // pred_region
      %138 = dma.done [#allocation4], 1024
    $region61: #{tpu_custom_call.1} parent=1 // pred_fallthru
      _
    // Predicated region
    $region62: #{tpu_custom_call.1} parent=1 // pred_check
      _
    $region63: #{tpu_custom_call.1} parent=1 // pred_check_branch
      %140 = sbr.rel (0) target = $region65
    $region64: #{tpu_custom_call.1} parent=1 // pred_region
      %141 = dma.done [#allocation7], 8192
    $region65: #{tpu_custom_call.1} parent=1 // pred_fallthru
      _
    // Predicated region
    $region66: #{tpu_custom_call.1} parent=1 // pred_check
      _
    $region67: #{tpu_custom_call.1} parent=1 // pred_check_branch
      %143 = sbr.rel (0) target = $region69
    $region68: #{tpu_custom_call.1} parent=1 // pred_region
      %144 = dma.done [#allocation7], 2048
    $region69: #{tpu_custom_call.1} parent=1 // pred_fallthru
      _
    // Predicated region
    $region70: #{tpu_custom_call.1} parent=1 // pred_check
      _
    $region71: #{tpu_custom_call.1} parent=1 // pred_check_branch
      %146 = sbr.rel (0) target = $region73
    $region72: #{tpu_custom_call.1} parent=1 // pred_region
      %147 = dma.done [#allocation10], 4096
    $region73: #{tpu_custom_call.1} parent=1 // pred_fallthru
      _
    // Predicated region
    $region74: #{tpu_custom_call.1} parent=1 // pred_check
      _
    $region75: #{tpu_custom_call.1} parent=1 // pred_check_branch
      %149 = sbr.rel (0) target = $region77
    $region76: #{tpu_custom_call.1} parent=1 // pred_region
      %150 = dma.done [#allocation10], 2048
    $region77: #{tpu_custom_call.1} parent=1 // pred_fallthru
      _
    // Predicated region
    $region78: #{tpu_custom_call.1} parent=1 // pred_check
      _
    $region79: #{tpu_custom_call.1} parent=1 // pred_check_branch
      %152 = sbr.rel (0) target = $region81
    $region80: #{tpu_custom_call.1} parent=1 // pred_region
      %153 = dma.done [#allocation13], 2048
    $region81: #{tpu_custom_call.1} parent=1 // pred_fallthru
      _
    // Predicated region
    $region82: #{tpu_custom_call.1} parent=1 // pred_check
      _
    $region83: #{tpu_custom_call.1} parent=1 // pred_check_branch
      %155 = sbr.rel (0) target = $region85
    $region84: #{tpu_custom_call.1} parent=1 // pred_region
      %156 = dma.done [#allocation13], 4096
    $region85: #{tpu_custom_call.1} parent=1 // pred_fallthru
      _
    // Predicated region
    $region86: #{tpu_custom_call.1} parent=1 // pred_check
      _
    $region87: #{tpu_custom_call.1} parent=1 // pred_check_branch
      %158 = sbr.rel (0) target = $region89
    $region88: #{tpu_custom_call.1} parent=1 // pred_region
      %159 = dma.done [#allocation16], 2048
    $region89: #{tpu_custom_call.1} parent=1 // pred_fallthru
      _
    %p161 = scmp.eq.s32.totalorder 0, 0
    // Predicated region
    $region90: #{tpu_custom_call.1} parent=1 // pred_check
      %p162 = pneg %p161
    $region91: #{tpu_custom_call.1} parent=1 // pred_check_branch
      %164 = sbr.rel (%p162) target = $region93
    $region92: #{tpu_custom_call.1} parent=1 // pred_region
      %165 = vst [vmem:[#allocation2] sm:$0xff] 0.0
      %166 = vst [vmem:[#allocation2 + $0x8] sm:$0xff] 0.0
    $region93: #{tpu_custom_call.1} parent=1 // pred_fallthru
      _
    %v167 = vld [vmem:[#allocation2] sm:$0xff]
    %v168 = vld [vmem:[#allocation2 + $0x8] sm:$0xff]
    %v169 = vld [vmem:[#allocation3] sm:$0xff]
    %v170 = vld [vmem:[#allocation3 + $0x8] sm:$0xff]
    %v171 = vld [vmem:[#allocation3 + $0x10] sm:$0xff]
    %v172 = vld [vmem:[#allocation3 + $0x18] sm:$0xff]
    %v173 = vld [vmem:[#allocation3 + $0x20] sm:$0xff]
    %v174 = vld [vmem:[#allocation3 + $0x28] sm:$0xff]
    %v175 = vld [vmem:[#allocation3 + $0x30] sm:$0xff]
    %v176 = vld [vmem:[#allocation3 + $0x38] sm:$0xff]
    %v177 = vld [vmem:[#allocation6] sm:$0xf]
    %v178 = vld [vmem:[#allocation6 + $0x4] sm:$0xf]
    %v179 = vld [vmem:[#allocation6 + $0x8] sm:$0xf]
    %v180 = vld [vmem:[#allocation6 + $0xc] sm:$0xf]
    %v181 = vld [vmem:[#allocation6 + $0x10] sm:$0xf]
    %v182 = vld [vmem:[#allocation6 + $0x14] sm:$0xf]
    %v183 = vld [vmem:[#allocation6 + $0x18] sm:$0xf]
    %v184 = vld [vmem:[#allocation6 + $0x1c] sm:$0xf]
    %v185 = vld [vmem:[#allocation6 + $0x20] sm:$0xf]
    %v186 = vld [vmem:[#allocation6 + $0x24] sm:$0xf]
    %v187 = vld [vmem:[#allocation6 + $0x28] sm:$0xf]
    %v188 = vld [vmem:[#allocation6 + $0x2c] sm:$0xf]
    %v189 = vld [vmem:[#allocation6 + $0x30] sm:$0xf]
    %v190 = vld [vmem:[#allocation6 + $0x34] sm:$0xf]
    %v191 = vld [vmem:[#allocation6 + $0x38] sm:$0xf]
    %v192 = vld [vmem:[#allocation6 + $0x3c] sm:$0xf]
    %v193 = vld [vmem:[#allocation6 + $0x40] sm:$0xf]
    %v194 = vld [vmem:[#allocation6 + $0x44] sm:$0xf]
    %v195 = vld [vmem:[#allocation6 + $0x48] sm:$0xf]
    %v196 = vld [vmem:[#allocation6 + $0x4c] sm:$0xf]
    %v197 = vld [vmem:[#allocation6 + $0x50] sm:$0xf]
    %v198 = vld [vmem:[#allocation6 + $0x54] sm:$0xf]
    %v199 = vld [vmem:[#allocation6 + $0x58] sm:$0xf]
    %v200 = vld [vmem:[#allocation6 + $0x5c] sm:$0xf]
    %v201 = vld [vmem:[#allocation6 + $0x60] sm:$0xf]
    %v202 = vld [vmem:[#allocation6 + $0x64] sm:$0xf]
    %v203 = vld [vmem:[#allocation6 + $0x68] sm:$0xf]
    %v204 = vld [vmem:[#allocation6 + $0x6c] sm:$0xf]
    %v205 = vld [vmem:[#allocation6 + $0x70] sm:$0xf]
    %v206 = vld [vmem:[#allocation6 + $0x74] sm:$0xf]
    %v207 = vld [vmem:[#allocation6 + $0x78] sm:$0xf]
    %v208 = vld [vmem:[#allocation6 + $0x7c] sm:$0xf]
    %v209 = vld [vmem:[#allocation6 + $0x80] sm:$0xf]
    %v210 = vld [vmem:[#allocation6 + $0x84] sm:$0xf]
    %v211 = vld [vmem:[#allocation6 + $0x88] sm:$0xf]
    %v212 = vld [vmem:[#allocation6 + $0x8c] sm:$0xf]
    %v213 = vld [vmem:[#allocation6 + $0x90] sm:$0xf]
    %v214 = vld [vmem:[#allocation6 + $0x94] sm:$0xf]
    %v215 = vld [vmem:[#allocation6 + $0x98] sm:$0xf]
    %v216 = vld [vmem:[#allocation6 + $0x9c] sm:$0xf]
    %v217 = vld [vmem:[#allocation6 + $0xa0] sm:$0xf]
    %v218 = vld [vmem:[#allocation6 + $0xa4] sm:$0xf]
    %v219 = vld [vmem:[#allocation6 + $0xa8] sm:$0xf]
    %v220 = vld [vmem:[#allocation6 + $0xac] sm:$0xf]
    %v221 = vld [vmem:[#allocation6 + $0xb0] sm:$0xf]
    %v222 = vld [vmem:[#allocation6 + $0xb4] sm:$0xf]
    %v223 = vld [vmem:[#allocation6 + $0xb8] sm:$0xf]
    %v224 = vld [vmem:[#allocation6 + $0xbc] sm:$0xf]
    %v225 = vld [vmem:[#allocation6 + $0xc0] sm:$0xf]
    %v226 = vld [vmem:[#allocation6 + $0xc4] sm:$0xf]
    %v227 = vld [vmem:[#allocation6 + $0xc8] sm:$0xf]
    %v228 = vld [vmem:[#allocation6 + $0xcc] sm:$0xf]
    %v229 = vld [vmem:[#allocation6 + $0xd0] sm:$0xf]
    %v230 = vld [vmem:[#allocation6 + $0xd4] sm:$0xf]
    %v231 = vld [vmem:[#allocation6 + $0xd8] sm:$0xf]
    %v232 = vld [vmem:[#allocation6 + $0xdc] sm:$0xf]
    %v233 = vld [vmem:[#allocation6 + $0xe0] sm:$0xf]
    %v234 = vld [vmem:[#allocation6 + $0xe4] sm:$0xf]
    %v235 = vld [vmem:[#allocation6 + $0xe8] sm:$0xf]
    %v236 = vld [vmem:[#allocation6 + $0xec] sm:$0xf]
    %v237 = vld [vmem:[#allocation6 + $0xf0] sm:$0xf]
    %v238 = vld [vmem:[#allocation6 + $0xf4] sm:$0xf]
    %v239 = vld [vmem:[#allocation6 + $0xf8] sm:$0xf]
    %v240 = vld [vmem:[#allocation6 + $0xfc] sm:$0xf]
    %v241 = vld [vmem:[#allocation6 + $0x100] sm:$0xf]
    %v242 = vld [vmem:[#allocation6 + $0x104] sm:$0xf]
    %v243 = vld [vmem:[#allocation6 + $0x108] sm:$0xf]
    %v244 = vld [vmem:[#allocation6 + $0x10c] sm:$0xf]
    %v245 = vld [vmem:[#allocation6 + $0x110] sm:$0xf]
    %v246 = vld [vmem:[#allocation6 + $0x114] sm:$0xf]
    %v247 = vld [vmem:[#allocation6 + $0x118] sm:$0xf]
    %v248 = vld [vmem:[#allocation6 + $0x11c] sm:$0xf]
    %v249 = vld [vmem:[#allocation6 + $0x120] sm:$0xf]
    %v250 = vld [vmem:[#allocation6 + $0x124] sm:$0xf]
    %v251 = vld [vmem:[#allocation6 + $0x128] sm:$0xf]
    %v252 = vld [vmem:[#allocation6 + $0x12c] sm:$0xf]
    %v253 = vld [vmem:[#allocation6 + $0x130] sm:$0xf]
    %v254 = vld [vmem:[#allocation6 + $0x134] sm:$0xf]
    %v255 = vld [vmem:[#allocation6 + $0x138] sm:$0xf]
    %v256 = vld [vmem:[#allocation6 + $0x13c] sm:$0xf]
    %v257 = vld [vmem:[#allocation6 + $0x140] sm:$0xf]
    %v258 = vld [vmem:[#allocation6 + $0x144] sm:$0xf]
    %v259 = vld [vmem:[#allocation6 + $0x148] sm:$0xf]
    %v260 = vld [vmem:[#allocation6 + $0x14c] sm:$0xf]
    %v261 = vld [vmem:[#allocation6 + $0x150] sm:$0xf]
    %v262 = vld [vmem:[#allocation6 + $0x154] sm:$0xf]
    %v263 = vld [vmem:[#allocation6 + $0x158] sm:$0xf]
    %v264 = vld [vmem:[#allocation6 + $0x15c] sm:$0xf]
    %v265 = vld [vmem:[#allocation6 + $0x160] sm:$0xf]
    %v266 = vld [vmem:[#allocation6 + $0x164] sm:$0xf]
    %v267 = vld [vmem:[#allocation6 + $0x168] sm:$0xf]
    %v268 = vld [vmem:[#allocation6 + $0x16c] sm:$0xf]
    %v269 = vld [vmem:[#allocation6 + $0x170] sm:$0xf]
    %v270 = vld [vmem:[#allocation6 + $0x174] sm:$0xf]
    %v271 = vld [vmem:[#allocation6 + $0x178] sm:$0xf]
    %v272 = vld [vmem:[#allocation6 + $0x17c] sm:$0xf]
    %v273 = vld [vmem:[#allocation6 + $0x180] sm:$0xf]
    %v274 = vld [vmem:[#allocation6 + $0x184] sm:$0xf]
    %v275 = vld [vmem:[#allocation6 + $0x188] sm:$0xf]
    %v276 = vld [vmem:[#allocation6 + $0x18c] sm:$0xf]
    %v277 = vld [vmem:[#allocation6 + $0x190] sm:$0xf]
    %v278 = vld [vmem:[#allocation6 + $0x194] sm:$0xf]
    %v279 = vld [vmem:[#allocation6 + $0x198] sm:$0xf]
    %v280 = vld [vmem:[#allocation6 + $0x19c] sm:$0xf]
    %v281 = vld [vmem:[#allocation6 + $0x1a0] sm:$0xf]
    %v282 = vld [vmem:[#allocation6 + $0x1a4] sm:$0xf]
    %v283 = vld [vmem:[#allocation6 + $0x1a8] sm:$0xf]
    %v284 = vld [vmem:[#allocation6 + $0x1ac] sm:$0xf]
    %v285 = vld [vmem:[#allocation6 + $0x1b0] sm:$0xf]
    %v286 = vld [vmem:[#allocation6 + $0x1b4] sm:$0xf]
    %v287 = vld [vmem:[#allocation6 + $0x1b8] sm:$0xf]
    %v288 = vld [vmem:[#allocation6 + $0x1bc] sm:$0xf]
    %v289 = vld [vmem:[#allocation6 + $0x1c0] sm:$0xf]
    %v290 = vld [vmem:[#allocation6 + $0x1c4] sm:$0xf]
    %v291 = vld [vmem:[#allocation6 + $0x1c8] sm:$0xf]
    %v292 = vld [vmem:[#allocation6 + $0x1cc] sm:$0xf]
    %v293 = vld [vmem:[#allocation6 + $0x1d0] sm:$0xf]
    %v294 = vld [vmem:[#allocation6 + $0x1d4] sm:$0xf]
    %v295 = vld [vmem:[#allocation6 + $0x1d8] sm:$0xf]
    %v296 = vld [vmem:[#allocation6 + $0x1dc] sm:$0xf]
    %v297 = vld [vmem:[#allocation6 + $0x1e0] sm:$0xf]
    %v298 = vld [vmem:[#allocation6 + $0x1e4] sm:$0xf]
    %v299 = vld [vmem:[#allocation6 + $0x1e8] sm:$0xf]
    %v300 = vld [vmem:[#allocation6 + $0x1ec] sm:$0xf]
    %v301 = vld [vmem:[#allocation6 + $0x1f0] sm:$0xf]
    %v302 = vld [vmem:[#allocation6 + $0x1f4] sm:$0xf]
    %v303 = vld [vmem:[#allocation6 + $0x1f8] sm:$0xf]
    %v304 = vld [vmem:[#allocation6 + $0x1fc] sm:$0xf]
    %v313 = vunpack.c.l.b16 %v169
    %v314 = vunpack.c.h.b16 %v169
    %v315 = vunpack.c.l.b16 %v170
    %v316 = vunpack.c.h.b16 %v170
    %v317 = vunpack.c.l.b16 %v171
    %v318 = vunpack.c.h.b16 %v171
    %v319 = vunpack.c.l.b16 %v172
    %v320 = vunpack.c.h.b16 %v172
    %v321 = vunpack.c.l.b16 %v173
    %v322 = vunpack.c.h.b16 %v173
    %v323 = vunpack.c.l.b16 %v174
    %v324 = vunpack.c.h.b16 %v174
    %v325 = vunpack.c.l.b16 %v175
    %v326 = vunpack.c.h.b16 %v175
    %v327 = vunpack.c.l.b16 %v176
    %v328 = vunpack.c.h.b16 %v176
    %v329 = vpack.c.b16 %v321, %v313
    %v330 = vpack.c.b16 %v322, %v314
    %v331 = vpack.c.b16 %v323, %v315
    %v332 = vpack.c.b16 %v324, %v316
    %v333 = vpack.c.b16 %v325, %v317
    %v334 = vpack.c.b16 %v326, %v318
    %v335 = vpack.c.b16 %v327, %v319
    %v336 = vpack.c.b16 %v328, %v320
    %v473 = vunpack.c.l.b16 %v177
    %v474 = vunpack.c.l.b16 %v178
    %v475 = vunpack.c.l.b16 %v179
    %v476 = vunpack.c.l.b16 %v180
    %v477 = vunpack.c.l.b16 %v181
    %v478 = vunpack.c.l.b16 %v182
    %v479 = vunpack.c.l.b16 %v183
    %v480 = vunpack.c.l.b16 %v184
    %v481 = vunpack.c.l.b16 %v185
    %v482 = vunpack.c.l.b16 %v186
    %v483 = vunpack.c.l.b16 %v187
    %v484 = vunpack.c.l.b16 %v188
    %v485 = vunpack.c.l.b16 %v189
    %v486 = vunpack.c.l.b16 %v190
    %v487 = vunpack.c.l.b16 %v191
    %v488 = vunpack.c.l.b16 %v192
    %v489 = vunpack.c.l.b16 %v193
    %v490 = vunpack.c.l.b16 %v194
    %v491 = vunpack.c.l.b16 %v195
    %v492 = vunpack.c.l.b16 %v196
    %v493 = vunpack.c.l.b16 %v197
    %v494 = vunpack.c.l.b16 %v198
    %v495 = vunpack.c.l.b16 %v199
    %v496 = vunpack.c.l.b16 %v200
    %v497 = vunpack.c.l.b16 %v201
    %v498 = vunpack.c.l.b16 %v202
    %v499 = vunpack.c.l.b16 %v203
    %v500 = vunpack.c.l.b16 %v204
    %v501 = vunpack.c.l.b16 %v205
    %v502 = vunpack.c.l.b16 %v206
    %v503 = vunpack.c.l.b16 %v207
    %v504 = vunpack.c.l.b16 %v208
    %v505 = vunpack.c.l.b16 %v209
    %v506 = vunpack.c.l.b16 %v210
    %v507 = vunpack.c.l.b16 %v211
    %v508 = vunpack.c.l.b16 %v212
    %v509 = vunpack.c.l.b16 %v213
    %v510 = vunpack.c.l.b16 %v214
    %v511 = vunpack.c.l.b16 %v215
    %v512 = vunpack.c.l.b16 %v216
    %v513 = vunpack.c.l.b16 %v217
    %v514 = vunpack.c.l.b16 %v218
    %v515 = vunpack.c.l.b16 %v219
    %v516 = vunpack.c.l.b16 %v220
    %v517 = vunpack.c.l.b16 %v221
    %v518 = vunpack.c.l.b16 %v222
    %v519 = vunpack.c.l.b16 %v223
    %v520 = vunpack.c.l.b16 %v224
    %v521 = vunpack.c.l.b16 %v225
    %v522 = vunpack.c.l.b16 %v226
    %v523 = vunpack.c.l.b16 %v227
    %v524 = vunpack.c.l.b16 %v228
    %v525 = vunpack.c.l.b16 %v229
    %v526 = vunpack.c.l.b16 %v230
    %v527 = vunpack.c.l.b16 %v231
    %v528 = vunpack.c.l.b16 %v232
    %v529 = vunpack.c.l.b16 %v233
    %v530 = vunpack.c.l.b16 %v234
    %v531 = vunpack.c.l.b16 %v235
    %v532 = vunpack.c.l.b16 %v236
    %v533 = vunpack.c.l.b16 %v237
    %v534 = vunpack.c.l.b16 %v238
    %v535 = vunpack.c.l.b16 %v239
    %v536 = vunpack.c.l.b16 %v240
    %v537 = vunpack.c.l.b16 %v241
    %v538 = vunpack.c.l.b16 %v242
    %v539 = vunpack.c.l.b16 %v243
    %v540 = vunpack.c.l.b16 %v244
    %v541 = vunpack.c.l.b16 %v245
    %v542 = vunpack.c.l.b16 %v246
    %v543 = vunpack.c.l.b16 %v247
    %v544 = vunpack.c.l.b16 %v248
    %v545 = vunpack.c.l.b16 %v249
    %v546 = vunpack.c.l.b16 %v250
    %v547 = vunpack.c.l.b16 %v251
    %v548 = vunpack.c.l.b16 %v252
    %v549 = vunpack.c.l.b16 %v253
    %v550 = vunpack.c.l.b16 %v254
    %v551 = vunpack.c.l.b16 %v255
    %v552 = vunpack.c.l.b16 %v256
    %v553 = vunpack.c.l.b16 %v257
    %v554 = vunpack.c.l.b16 %v258
    %v555 = vunpack.c.l.b16 %v259
    %v556 = vunpack.c.l.b16 %v260
    %v557 = vunpack.c.l.b16 %v261
    %v558 = vunpack.c.l.b16 %v262
    %v559 = vunpack.c.l.b16 %v263
    %v560 = vunpack.c.l.b16 %v264
    %v561 = vunpack.c.l.b16 %v265
    %v562 = vunpack.c.l.b16 %v266
    %v563 = vunpack.c.l.b16 %v267
    %v564 = vunpack.c.l.b16 %v268
    %v565 = vunpack.c.l.b16 %v269
    %v566 = vunpack.c.l.b16 %v270
    %v567 = vunpack.c.l.b16 %v271
    %v568 = vunpack.c.l.b16 %v272
    %v569 = vunpack.c.l.b16 %v273
    %v570 = vunpack.c.l.b16 %v274
    %v571 = vunpack.c.l.b16 %v275
    %v572 = vunpack.c.l.b16 %v276
    %v573 = vunpack.c.l.b16 %v277
    %v574 = vunpack.c.l.b16 %v278
    %v575 = vunpack.c.l.b16 %v279
    %v576 = vunpack.c.l.b16 %v280
    %v577 = vunpack.c.l.b16 %v281
    %v578 = vunpack.c.l.b16 %v282
    %v579 = vunpack.c.l.b16 %v283
    %v580 = vunpack.c.l.b16 %v284
    %v581 = vunpack.c.l.b16 %v285
    %v582 = vunpack.c.l.b16 %v286
    %v583 = vunpack.c.l.b16 %v287
    %v584 = vunpack.c.l.b16 %v288
    %v585 = vunpack.c.l.b16 %v289
    %v586 = vunpack.c.l.b16 %v290
    %v587 = vunpack.c.l.b16 %v291
    %v588 = vunpack.c.l.b16 %v292
    %v589 = vunpack.c.l.b16 %v293
    %v590 = vunpack.c.l.b16 %v294
    %v591 = vunpack.c.l.b16 %v295
    %v592 = vunpack.c.l.b16 %v296
    %v593 = vunpack.c.l.b16 %v297
    %v594 = vunpack.c.l.b16 %v298
    %v595 = vunpack.c.l.b16 %v299
    %v596 = vunpack.c.l.b16 %v300
    %v597 = vunpack.c.l.b16 %v301
    %v598 = vunpack.c.l.b16 %v302
    %v599 = vunpack.c.l.b16 %v303
    %v600 = vunpack.c.l.b16 %v304
    %v601 = vpack.c.b16 %v474, %v473
    %v602 = vpack.c.b16 %v476, %v475
    %v603 = vpack.c.b16 %v478, %v477
    %v604 = vpack.c.b16 %v480, %v479
    %v605 = vpack.c.b16 %v482, %v481
    %v606 = vpack.c.b16 %v484, %v483
    %v607 = vpack.c.b16 %v486, %v485
    %v608 = vpack.c.b16 %v488, %v487
    %v609 = vpack.c.b16 %v490, %v489
    %v610 = vpack.c.b16 %v492, %v491
    %v611 = vpack.c.b16 %v494, %v493
    %v612 = vpack.c.b16 %v496, %v495
    %v613 = vpack.c.b16 %v498, %v497
    %v614 = vpack.c.b16 %v500, %v499
    %v615 = vpack.c.b16 %v502, %v501
    %v616 = vpack.c.b16 %v504, %v503
    %v617 = vpack.c.b16 %v506, %v505
    %v618 = vpack.c.b16 %v508, %v507
    %v619 = vpack.c.b16 %v510, %v509
    %v620 = vpack.c.b16 %v512, %v511
    %v621 = vpack.c.b16 %v514, %v513
    %v622 = vpack.c.b16 %v516, %v515
    %v623 = vpack.c.b16 %v518, %v517
    %v624 = vpack.c.b16 %v520, %v519
    %v625 = vpack.c.b16 %v522, %v521
    %v626 = vpack.c.b16 %v524, %v523
    %v627 = vpack.c.b16 %v526, %v525
    %v628 = vpack.c.b16 %v528, %v527
    %v629 = vpack.c.b16 %v530, %v529
    %v630 = vpack.c.b16 %v532, %v531
    %v631 = vpack.c.b16 %v534, %v533
    %v632 = vpack.c.b16 %v536, %v535
    %v633 = vpack.c.b16 %v538, %v537
    %v634 = vpack.c.b16 %v540, %v539
    %v635 = vpack.c.b16 %v542, %v541
    %v636 = vpack.c.b16 %v544, %v543
    %v637 = vpack.c.b16 %v546, %v545
    %v638 = vpack.c.b16 %v548, %v547
    %v639 = vpack.c.b16 %v550, %v549
    %v640 = vpack.c.b16 %v552, %v551
    %v641 = vpack.c.b16 %v554, %v553
    %v642 = vpack.c.b16 %v556, %v555
    %v643 = vpack.c.b16 %v558, %v557
    %v644 = vpack.c.b16 %v560, %v559
    %v645 = vpack.c.b16 %v562, %v561
    %v646 = vpack.c.b16 %v564, %v563
    %v647 = vpack.c.b16 %v566, %v565
    %v648 = vpack.c.b16 %v568, %v567
    %v649 = vpack.c.b16 %v570, %v569
    %v650 = vpack.c.b16 %v572, %v571
    %v651 = vpack.c.b16 %v574, %v573
    %v652 = vpack.c.b16 %v576, %v575
    %v653 = vpack.c.b16 %v578, %v577
    %v654 = vpack.c.b16 %v580, %v579
    %v655 = vpack.c.b16 %v582, %v581
    %v656 = vpack.c.b16 %v584, %v583
    %v657 = vpack.c.b16 %v586, %v585
    %v658 = vpack.c.b16 %v588, %v587
    %v659 = vpack.c.b16 %v590, %v589
    %v660 = vpack.c.b16 %v592, %v591
    %v661 = vpack.c.b16 %v594, %v593
    %v662 = vpack.c.b16 %v596, %v595
    %v663 = vpack.c.b16 %v598, %v597
    %v664 = vpack.c.b16 %v600, %v599
    %729 = vmatprep.subr.bf16.mxu0 0
    %730 = vmatpush1.bf16.msra.mxu0 %v601
    %731 = vmatprep.subr.bf16.mxu0 0
    %732 = vmatpush1.bf16.msra.mxu0 %v602
    %733 = vmatprep.subr.bf16.mxu0 0
    %734 = vmatpush1.bf16.msra.mxu0 %v603
    %735 = vmatprep.subr.bf16.mxu0 0
    %736 = vmatpush1.bf16.msra.mxu0 %v604
    %737 = vmatprep.subr.bf16.mxu0 0
    %738 = vmatpush1.bf16.msra.mxu0 %v605
    %739 = vmatprep.subr.bf16.mxu0 0
    %740 = vmatpush1.bf16.msra.mxu0 %v606
    %741 = vmatprep.subr.bf16.mxu0 0
    %742 = vmatpush1.bf16.msra.mxu0 %v607
    %743 = vmatprep.subr.bf16.mxu0 0
    %744 = vmatpush1.bf16.msra.mxu0 %v608
    %745 = vmatprep.subr.bf16.mxu0 0
    %746 = vmatpush1.bf16.msra.mxu0 %v609
    %747 = vmatprep.subr.bf16.mxu0 0
    %748 = vmatpush1.bf16.msra.mxu0 %v610
    %749 = vmatprep.subr.bf16.mxu0 0
    %750 = vmatpush1.bf16.msra.mxu0 %v611
    %751 = vmatprep.subr.bf16.mxu0 0
    %752 = vmatpush1.bf16.msra.mxu0 %v612
    %753 = vmatprep.subr.bf16.mxu0 0
    %754 = vmatpush1.bf16.msra.mxu0 %v613
    %755 = vmatprep.subr.bf16.mxu0 0
    %756 = vmatpush1.bf16.msra.mxu0 %v614
    %757 = vmatprep.subr.bf16.mxu0 0
    %758 = vmatpush1.bf16.msra.mxu0 %v615
    %759 = vmatprep.subr.bf16.mxu0 0
    %760 = vmatpush1.bf16.msra.mxu0 %v616
    %761 = vmatprep.mubr.bf16.mxu0 %v330
    %762 = vmatmul.mubr.bf16.gmra.mrb[0].mxu0 %v329
    %v763 = vpop.f32.mrb[0].mxu0
    %v764 = vadd.f32 0.0, %v763
    %v765 = vpop.f32.mrb[0].mxu0
    %v766 = vpop.f32.mrb[0].mxu0
    %v767 = vadd.f32 0.0, %v766
    %v768 = vpop.f32.mrb[0].mxu0
    %769 = vdwg.mxu0
    %770 = vmatprep.subr.bf16.mxu0 0
    %771 = vmatpush1.bf16.msra.mxu0 %v617
    %772 = vmatprep.subr.bf16.mxu0 0
    %773 = vmatpush1.bf16.msra.mxu0 %v618
    %774 = vmatprep.subr.bf16.mxu0 0
    %775 = vmatpush1.bf16.msra.mxu0 %v619
    %776 = vmatprep.subr.bf16.mxu0 0
    %777 = vmatpush1.bf16.msra.mxu0 %v620
    %778 = vmatprep.subr.bf16.mxu0 0
    %779 = vmatpush1.bf16.msra.mxu0 %v621
    %780 = vmatprep.subr.bf16.mxu0 0
    %781 = vmatpush1.bf16.msra.mxu0 %v622
    %782 = vmatprep.subr.bf16.mxu0 0
    %783 = vmatpush1.bf16.msra.mxu0 %v623
    %784 = vmatprep.subr.bf16.mxu0 0
    %785 = vmatpush1.bf16.msra.mxu0 %v624
    %786 = vmatprep.subr.bf16.mxu0 0
    %787 = vmatpush1.bf16.msra.mxu0 %v625
    %788 = vmatprep.subr.bf16.mxu0 0
    %789 = vmatpush1.bf16.msra.mxu0 %v626
    %790 = vmatprep.subr.bf16.mxu0 0
    %791 = vmatpush1.bf16.msra.mxu0 %v627
    %792 = vmatprep.subr.bf16.mxu0 0
    %793 = vmatpush1.bf16.msra.mxu0 %v628
    %794 = vmatprep.subr.bf16.mxu0 0
    %795 = vmatpush1.bf16.msra.mxu0 %v629
    %796 = vmatprep.subr.bf16.mxu0 0
    %797 = vmatpush1.bf16.msra.mxu0 %v630
    %798 = vmatprep.subr.bf16.mxu0 0
    %799 = vmatpush1.bf16.msra.mxu0 %v631
    %800 = vmatprep.subr.bf16.mxu0 0
    %801 = vmatpush1.bf16.msra.mxu0 %v632
    %802 = vmatprep.mubr.bf16.mxu0 %v332
    %803 = vmatmul.mubr.bf16.gmra.mrb[0].mxu0 %v331
    %v804 = vpop.f32.mrb[0].mxu0
    %v805 = vadd.f32 %v764, %v804
    %v806 = vpop.f32.mrb[0].mxu0
    %v807 = vpop.f32.mrb[0].mxu0
    %v808 = vadd.f32 %v767, %v807
    %v809 = vpop.f32.mrb[0].mxu0
    %810 = vdwg.mxu0
    %811 = vmatprep.subr.bf16.mxu0 0
    %812 = vmatpush1.bf16.msra.mxu0 %v633
    %813 = vmatprep.subr.bf16.mxu0 0
    %814 = vmatpush1.bf16.msra.mxu0 %v634
    %815 = vmatprep.subr.bf16.mxu0 0
    %816 = vmatpush1.bf16.msra.mxu0 %v635
    %817 = vmatprep.subr.bf16.mxu0 0
    %818 = vmatpush1.bf16.msra.mxu0 %v636
    %819 = vmatprep.subr.bf16.mxu0 0
    %820 = vmatpush1.bf16.msra.mxu0 %v637
    %821 = vmatprep.subr.bf16.mxu0 0
    %822 = vmatpush1.bf16.msra.mxu0 %v638
    %823 = vmatprep.subr.bf16.mxu0 0
    %824 = vmatpush1.bf16.msra.mxu0 %v639
    %825 = vmatprep.subr.bf16.mxu0 0
    %826 = vmatpush1.bf16.msra.mxu0 %v640
    %827 = vmatprep.subr.bf16.mxu0 0
    %828 = vmatpush1.bf16.msra.mxu0 %v641
    %829 = vmatprep.subr.bf16.mxu0 0
    %830 = vmatpush1.bf16.msra.mxu0 %v642
    %831 = vmatprep.subr.bf16.mxu0 0
    %832 = vmatpush1.bf16.msra.mxu0 %v643
    %833 = vmatprep.subr.bf16.mxu0 0
    %834 = vmatpush1.bf16.msra.mxu0 %v644
    %835 = vmatprep.subr.bf16.mxu0 0
    %836 = vmatpush1.bf16.msra.mxu0 %v645
    %837 = vmatprep.subr.bf16.mxu0 0
    %838 = vmatpush1.bf16.msra.mxu0 %v646
    %839 = vmatprep.subr.bf16.mxu0 0
    %840 = vmatpush1.bf16.msra.mxu0 %v647
    %841 = vmatprep.subr.bf16.mxu0 0
    %842 = vmatpush1.bf16.msra.mxu0 %v648
    %843 = vmatprep.mubr.bf16.mxu0 %v334
    %844 = vmatmul.mubr.bf16.gmra.mrb[0].mxu0 %v333
    %v845 = vpop.f32.mrb[0].mxu0
    %v846 = vadd.f32 %v805, %v845
    %v847 = vpop.f32.mrb[0].mxu0
    %v848 = vpop.f32.mrb[0].mxu0
    %v849 = vadd.f32 %v808, %v848
    %v850 = vpop.f32.mrb[0].mxu0
    %851 = vdwg.mxu0
    %852 = vmatprep.subr.bf16.mxu0 0
    %853 = vmatpush1.bf16.msra.mxu0 %v649
    %854 = vmatprep.subr.bf16.mxu0 0
    %855 = vmatpush1.bf16.msra.mxu0 %v650
    %856 = vmatprep.subr.bf16.mxu0 0
    %857 = vmatpush1.bf16.msra.mxu0 %v651
    %858 = vmatprep.subr.bf16.mxu0 0
    %859 = vmatpush1.bf16.msra.mxu0 %v652
    %860 = vmatprep.subr.bf16.mxu0 0
    %861 = vmatpush1.bf16.msra.mxu0 %v653
    %862 = vmatprep.subr.bf16.mxu0 0
    %863 = vmatpush1.bf16.msra.mxu0 %v654
    %864 = vmatprep.subr.bf16.mxu0 0
    %865 = vmatpush1.bf16.msra.mxu0 %v655
    %866 = vmatprep.subr.bf16.mxu0 0
    %867 = vmatpush1.bf16.msra.mxu0 %v656
    %868 = vmatprep.subr.bf16.mxu0 0
    %869 = vmatpush1.bf16.msra.mxu0 %v657
    %870 = vmatprep.subr.bf16.mxu0 0
    %871 = vmatpush1.bf16.msra.mxu0 %v658
    %872 = vmatprep.subr.bf16.mxu0 0
    %873 = vmatpush1.bf16.msra.mxu0 %v659
    %874 = vmatprep.subr.bf16.mxu0 0
    %875 = vmatpush1.bf16.msra.mxu0 %v660
    %876 = vmatprep.subr.bf16.mxu0 0
    %877 = vmatpush1.bf16.msra.mxu0 %v661
    %878 = vmatprep.subr.bf16.mxu0 0
    %879 = vmatpush1.bf16.msra.mxu0 %v662
    %880 = vmatprep.subr.bf16.mxu0 0
    %881 = vmatpush1.bf16.msra.mxu0 %v663
    %882 = vmatprep.subr.bf16.mxu0 0
    %883 = vmatpush1.bf16.msra.mxu0 %v664
    %884 = vmatprep.mubr.bf16.mxu0 %v336
    %885 = vmatmul.mubr.bf16.gmra.mrb[0].mxu0 %v335
    %v886 = vpop.f32.mrb[0].mxu0
    %v887 = vadd.f32 %v846, %v886
    %v888 = vpop.f32.mrb[0].mxu0
    %v889 = vpop.f32.mrb[0].mxu0
    %v890 = vadd.f32 %v849, %v889
    %v891 = vpop.f32.mrb[0].mxu0
    %892 = vdwg.mxu0
    %v893 = vadd.f32 %v167, %v887
    %v894 = vadd.f32 %v168, %v890
    %895 = vst [vmem:[#allocation2] sm:$0xff] %v893
    %896 = vst [vmem:[#allocation2 + $0x8] sm:$0xff] %v894
    // Predicated region
    $region94: #{tpu_custom_call.1} parent=1 // pred_check
      %p897 = pneg %p161
    $region95: #{tpu_custom_call.1} parent=1 // pred_check_branch
      %899 = sbr.rel (%p897) target = $region97
    $region96: #{tpu_custom_call.1} parent=1 // pred_region
      %v900 = vld [vmem:[#allocation2] sm:$0xff]
      %v901 = vld [vmem:[#allocation2 + $0x8] sm:$0xff]
      %v902 = vpack.c.bf16 %v901, %v900
      %v903 = vld [vmem:[#allocation8] sm:$0xff]
      %v904 = vld [vmem:[#allocation8 + $0x8] sm:$0xff]
      %v905 = vld [vmem:[#allocation8 + $0x10] sm:$0xff]
      %v906 = vld [vmem:[#allocation8 + $0x18] sm:$0xff]
      %v907 = vld [vmem:[#allocation8 + $0x20] sm:$0xff]
      %v908 = vld [vmem:[#allocation8 + $0x28] sm:$0xff]
      %v909 = vld [vmem:[#allocation8 + $0x30] sm:$0xff]
      %v910 = vld [vmem:[#allocation8 + $0x38] sm:$0xff]
      %v911 = vld [vmem:[#allocation8 + $0x40] sm:$0xff]
      %v912 = vld [vmem:[#allocation8 + $0x48] sm:$0xff]
      %v913 = vld [vmem:[#allocation8 + $0x50] sm:$0xff]
      %v914 = vld [vmem:[#allocation8 + $0x58] sm:$0xff]
      %v915 = vld [vmem:[#allocation8 + $0x60] sm:$0xff]
      %v916 = vld [vmem:[#allocation8 + $0x68] sm:$0xff]
      %v917 = vld [vmem:[#allocation8 + $0x70] sm:$0xff]
      %v918 = vld [vmem:[#allocation8 + $0x78] sm:$0xff]
      %v919 = vld [vmem:[%s3] sm:$0x3]
      %v921 = vlaneseq
      %v922 = vshrl.u32 %v921, 7
      %v923 = vsub.s32 0, %v922
      %v924 = vrot.slane %v919, %v923
      %v925 = vlaneseq
      %v926 = vshrl.u32 %v925, 7
      %v927 = vsub.s32 1, %v926
      %v928 = vrot.slane %v919, %v927
      %v947 = vunpack.c.l.b16 %v903
      %v948 = vunpack.c.h.b16 %v903
      %v949 = vunpack.c.l.b16 %v904
      %v950 = vunpack.c.h.b16 %v904
      %v951 = vunpack.c.l.b16 %v905
      %v952 = vunpack.c.h.b16 %v905
      %v953 = vunpack.c.l.b16 %v906
      %v954 = vunpack.c.h.b16 %v906
      %v955 = vunpack.c.l.b16 %v907
      %v956 = vunpack.c.h.b16 %v907
      %v957 = vunpack.c.l.b16 %v908
      %v958 = vunpack.c.h.b16 %v908
      %v959 = vunpack.c.l.b16 %v909
      %v960 = vunpack.c.h.b16 %v909
      %v961 = vunpack.c.l.b16 %v910
      %v962 = vunpack.c.h.b16 %v910
      %v963 = vunpack.c.l.b16 %v911
      %v964 = vunpack.c.h.b16 %v911
      %v965 = vunpack.c.l.b16 %v912
      %v966 = vunpack.c.h.b16 %v912
      %v967 = vunpack.c.l.b16 %v913
      %v968 = vunpack.c.h.b16 %v913
      %v969 = vunpack.c.l.b16 %v914
      %v970 = vunpack.c.h.b16 %v914
      %v971 = vunpack.c.l.b16 %v915
      %v972 = vunpack.c.h.b16 %v915
      %v973 = vunpack.c.l.b16 %v916
      %v974 = vunpack.c.h.b16 %v916
      %v975 = vunpack.c.l.b16 %v917
      %v976 = vunpack.c.h.b16 %v917
      %v977 = vunpack.c.l.b16 %v918
      %v978 = vunpack.c.h.b16 %v918
      %v979 = vpack.c.b16 %v949, %v947
      %v980 = vpack.c.b16 %v950, %v948
      %v981 = vpack.c.b16 %v953, %v951
      %v982 = vpack.c.b16 %v954, %v952
      %v983 = vpack.c.b16 %v957, %v955
      %v984 = vpack.c.b16 %v958, %v956
      %v985 = vpack.c.b16 %v961, %v959
      %v986 = vpack.c.b16 %v962, %v960
      %v987 = vpack.c.b16 %v965, %v963
      %v988 = vpack.c.b16 %v966, %v964
      %v989 = vpack.c.b16 %v969, %v967
      %v990 = vpack.c.b16 %v970, %v968
      %v991 = vpack.c.b16 %v973, %v971
      %v992 = vpack.c.b16 %v974, %v972
      %v993 = vpack.c.b16 %v977, %v975
      %v994 = vpack.c.b16 %v978, %v976
      %1011 = vmatprep.subr.bf16.mxu0 %v980
      %1012 = vmatpush1.bf16.msra.mxu0 %v979
      %1013 = vmatprep.subr.bf16.mxu0 %v982
      %1014 = vmatpush1.bf16.msra.mxu0 %v981
      %1015 = vmatprep.subr.bf16.mxu0 %v984
      %1016 = vmatpush1.bf16.msra.mxu0 %v983
      %1017 = vmatprep.subr.bf16.mxu0 %v986
      %1018 = vmatpush1.bf16.msra.mxu0 %v985
      %1019 = vmatprep.subr.bf16.mxu0 %v988
      %1020 = vmatpush1.bf16.msra.mxu0 %v987
      %1021 = vmatprep.subr.bf16.mxu0 %v990
      %1022 = vmatpush1.bf16.msra.mxu0 %v989
      %1023 = vmatprep.subr.bf16.mxu0 %v992
      %1024 = vmatpush1.bf16.msra.mxu0 %v991
      %1025 = vmatprep.subr.bf16.mxu0 %v994
      %1026 = vmatpush1.bf16.msra.mxu0 %v993
      %1027 = vmatprep.subr.bf16.mxu0 0
      %1028 = vmatpush1.bf16.msra.mxu0 0
      %1029 = vmatprep.subr.bf16.mxu0 0
      %1030 = vmatpush1.bf16.msra.mxu0 0
      %1031 = vmatprep.subr.bf16.mxu0 0
      %1032 = vmatpush1.bf16.msra.mxu0 0
      %1033 = vmatprep.subr.bf16.mxu0 0
      %1034 = vmatpush1.bf16.msra.mxu0 0
      %1035 = vmatprep.subr.bf16.mxu0 0
      %1036 = vmatpush1.bf16.msra.mxu0 0
      %1037 = vmatprep.subr.bf16.mxu0 0
      %1038 = vmatpush1.bf16.msra.mxu0 0
      %1039 = vmatprep.subr.bf16.mxu0 0
      %1040 = vmatpush1.bf16.msra.mxu0 0
      %1041 = vmatprep.subr.bf16.mxu0 0
      %1042 = vmatpush1.bf16.msra.mxu0 0
      %1043 = vmatprep.mubr.bf16.mxu0 0
      %1044 = vmatmul.mubr.bf16.gmra.mrb[0].mxu0 %v902
      %v1045 = vpop.f32.mrb[0].mxu0
      %v1046 = vadd.f32 %v924, %v1045
      %v1047 = vpop.f32.mrb[0].mxu0
      %v1048 = vadd.f32 %v928, %v1047
      %v1049 = vpop.f32.mrb[0].mxu0
      %v1050 = vadd.f32 %v924, %v1049
      %v1051 = vpop.f32.mrb[0].mxu0
      %v1052 = vadd.f32 %v928, %v1051
      %1053 = vdwg.mxu0
      %v1054 = vmax.f32 %v1046, 0.0
      %v1055 = vmax.f32 %v1048, 0.0
      %v1056 = vmax.f32 %v1050, 0.0
      %v1057 = vmax.f32 %v1052, 0.0
      %v1058 = vpack.c.bf16 %v1056, %v1054
      %v1059 = vpack.c.bf16 %v1057, %v1055
      %v1060 = vld [vmem:[#allocation9] sm:$0xff]
      %v1061 = vld [vmem:[#allocation9 + $0x8] sm:$0xff]
      %v1062 = vld [vmem:[#allocation9 + $0x10] sm:$0xff]
      %v1063 = vld [vmem:[#allocation9 + $0x18] sm:$0xff]
      %v1064 = vld [vmem:[#allocation9 + $0x20] sm:$0xff]
      %v1065 = vld [vmem:[#allocation9 + $0x28] sm:$0xff]
      %v1066 = vld [vmem:[#allocation9 + $0x30] sm:$0xff]
      %v1067 = vld [vmem:[#allocation9 + $0x38] sm:$0xff]
      %v1068 = vld [vmem:[#allocation9 + $0x40] sm:$0xff]
      %v1069 = vld [vmem:[#allocation9 + $0x48] sm:$0xff]
      %v1070 = vld [vmem:[#allocation9 + $0x50] sm:$0xff]
      %v1071 = vld [vmem:[#allocation9 + $0x58] sm:$0xff]
      %v1072 = vld [vmem:[#allocation9 + $0x60] sm:$0xff]
      %v1073 = vld [vmem:[#allocation9 + $0x68] sm:$0xff]
      %v1074 = vld [vmem:[#allocation9 + $0x70] sm:$0xff]
      %v1075 = vld [vmem:[#allocation9 + $0x78] sm:$0xff]
      %v1076 = vld [vmem:[#allocation9 + $0x80] sm:$0xff]
      %v1077 = vld [vmem:[#allocation9 + $0x88] sm:$0xff]
      %v1078 = vld [vmem:[#allocation9 + $0x90] sm:$0xff]
      %v1079 = vld [vmem:[#allocation9 + $0x98] sm:$0xff]
      %v1080 = vld [vmem:[#allocation9 + $0xa0] sm:$0xff]
      %v1081 = vld [vmem:[#allocation9 + $0xa8] sm:$0xff]
      %v1082 = vld [vmem:[#allocation9 + $0xb0] sm:$0xff]
      %v1083 = vld [vmem:[#allocation9 + $0xb8] sm:$0xff]
      %v1084 = vld [vmem:[#allocation9 + $0xc0] sm:$0xff]
      %v1085 = vld [vmem:[#allocation9 + $0xc8] sm:$0xff]
      %v1086 = vld [vmem:[#allocation9 + $0xd0] sm:$0xff]
      %v1087 = vld [vmem:[#allocation9 + $0xd8] sm:$0xff]
      %v1088 = vld [vmem:[#allocation9 + $0xe0] sm:$0xff]
      %v1089 = vld [vmem:[#allocation9 + $0xe8] sm:$0xff]
      %v1090 = vld [vmem:[#allocation9 + $0xf0] sm:$0xff]
      %v1091 = vld [vmem:[#allocation9 + $0xf8] sm:$0xff]
      %v1092 = vld [vmem:[%s5] sm:$0x3]
      %v1094 = vlaneseq
      %v1095 = vshrl.u32 %v1094, 7
      %v1096 = vsub.s32 0, %v1095
      %v1097 = vrot.slane %v1092, %v1096
      %v1098 = vlaneseq
      %v1099 = vshrl.u32 %v1098, 7
      %v1100 = vsub.s32 1, %v1099
      %v1101 = vrot.slane %v1092, %v1100
      %v1136 = vunpack.c.l.b16 %v1060
      %v1137 = vunpack.c.h.b16 %v1060
      %v1138 = vunpack.c.l.b16 %v1061
      %v1139 = vunpack.c.h.b16 %v1061
      %v1140 = vunpack.c.l.b16 %v1062
      %v1141 = vunpack.c.h.b16 %v1062
      %v1142 = vunpack.c.l.b16 %v1063
      %v1143 = vunpack.c.h.b16 %v1063
      %v1144 = vunpack.c.l.b16 %v1064
      %v1145 = vunpack.c.h.b16 %v1064
      %v1146 = vunpack.c.l.b16 %v1065
      %v1147 = vunpack.c.h.b16 %v1065
      %v1148 = vunpack.c.l.b16 %v1066
      %v1149 = vunpack.c.h.b16 %v1066
      %v1150 = vunpack.c.l.b16 %v1067
      %v1151 = vunpack.c.h.b16 %v1067
      %v1152 = vunpack.c.l.b16 %v1068
      %v1153 = vunpack.c.h.b16 %v1068
      %v1154 = vunpack.c.l.b16 %v1069
      %v1155 = vunpack.c.h.b16 %v1069
      %v1156 = vunpack.c.l.b16 %v1070
      %v1157 = vunpack.c.h.b16 %v1070
      %v1158 = vunpack.c.l.b16 %v1071
      %v1159 = vunpack.c.h.b16 %v1071
      %v1160 = vunpack.c.l.b16 %v1072
      %v1161 = vunpack.c.h.b16 %v1072
      %v1162 = vunpack.c.l.b16 %v1073
      %v1163 = vunpack.c.h.b16 %v1073
      %v1164 = vunpack.c.l.b16 %v1074
      %v1165 = vunpack.c.h.b16 %v1074
      %v1166 = vunpack.c.l.b16 %v1075
      %v1167 = vunpack.c.h.b16 %v1075
      %v1168 = vunpack.c.l.b16 %v1076
      %v1169 = vunpack.c.h.b16 %v1076
      %v1170 = vunpack.c.l.b16 %v1077
      %v1171 = vunpack.c.h.b16 %v1077
      %v1172 = vunpack.c.l.b16 %v1078
      %v1173 = vunpack.c.h.b16 %v1078
      %v1174 = vunpack.c.l.b16 %v1079
      %v1175 = vunpack.c.h.b16 %v1079
      %v1176 = vunpack.c.l.b16 %v1080
      %v1177 = vunpack.c.h.b16 %v1080
      %v1178 = vunpack.c.l.b16 %v1081
      %v1179 = vunpack.c.h.b16 %v1081
      %v1180 = vunpack.c.l.b16 %v1082
      %v1181 = vunpack.c.h.b16 %v1082
      %v1182 = vunpack.c.l.b16 %v1083
      %v1183 = vunpack.c.h.b16 %v1083
      %v1184 = vunpack.c.l.b16 %v1084
      %v1185 = vunpack.c.h.b16 %v1084
      %v1186 = vunpack.c.l.b16 %v1085
      %v1187 = vunpack.c.h.b16 %v1085
      %v1188 = vunpack.c.l.b16 %v1086
      %v1189 = vunpack.c.h.b16 %v1086
      %v1190 = vunpack.c.l.b16 %v1087
      %v1191 = vunpack.c.h.b16 %v1087
      %v1192 = vunpack.c.l.b16 %v1088
      %v1193 = vunpack.c.h.b16 %v1088
      %v1194 = vunpack.c.l.b16 %v1089
      %v1195 = vunpack.c.h.b16 %v1089
      %v1196 = vunpack.c.l.b16 %v1090
      %v1197 = vunpack.c.h.b16 %v1090
      %v1198 = vunpack.c.l.b16 %v1091
      %v1199 = vunpack.c.h.b16 %v1091
      %v1200 = vpack.c.b16 %v1138, %v1136
      %v1201 = vpack.c.b16 %v1139, %v1137
      %v1202 = vpack.c.b16 %v1142, %v1140
      %v1203 = vpack.c.b16 %v1143, %v1141
      %v1204 = vpack.c.b16 %v1146, %v1144
      %v1205 = vpack.c.b16 %v1147, %v1145
      %v1206 = vpack.c.b16 %v1150, %v1148
      %v1207 = vpack.c.b16 %v1151, %v1149
      %v1208 = vpack.c.b16 %v1154, %v1152
      %v1209 = vpack.c.b16 %v1155, %v1153
      %v1210 = vpack.c.b16 %v1158, %v1156
      %v1211 = vpack.c.b16 %v1159, %v1157
      %v1212 = vpack.c.b16 %v1162, %v1160
      %v1213 = vpack.c.b16 %v1163, %v1161
      %v1214 = vpack.c.b16 %v1166, %v1164
      %v1215 = vpack.c.b16 %v1167, %v1165
      %v1216 = vpack.c.b16 %v1170, %v1168
      %v1217 = vpack.c.b16 %v1171, %v1169
      %v1218 = vpack.c.b16 %v1174, %v1172
      %v1219 = vpack.c.b16 %v1175, %v1173
      %v1220 = vpack.c.b16 %v1178, %v1176
      %v1221 = vpack.c.b16 %v1179, %v1177
      %v1222 = vpack.c.b16 %v1182, %v1180
      %v1223 = vpack.c.b16 %v1183, %v1181
      %v1224 = vpack.c.b16 %v1186, %v1184
      %v1225 = vpack.c.b16 %v1187, %v1185
      %v1226 = vpack.c.b16 %v1190, %v1188
      %v1227 = vpack.c.b16 %v1191, %v1189
      %v1228 = vpack.c.b16 %v1194, %v1192
      %v1229 = vpack.c.b16 %v1195, %v1193
      %v1230 = vpack.c.b16 %v1198, %v1196
      %v1231 = vpack.c.b16 %v1199, %v1197
      %1264 = vmatprep.subr.bf16.mxu0 %v1201
      %1265 = vmatpush1.bf16.msra.mxu0 %v1200
      %1266 = vmatprep.subr.bf16.mxu0 %v1203
      %1267 = vmatpush1.bf16.msra.mxu0 %v1202
      %1268 = vmatprep.subr.bf16.mxu0 %v1205
      %1269 = vmatpush1.bf16.msra.mxu0 %v1204
      %1270 = vmatprep.subr.bf16.mxu0 %v1207
      %1271 = vmatpush1.bf16.msra.mxu0 %v1206
      %1272 = vmatprep.subr.bf16.mxu0 %v1209
      %1273 = vmatpush1.bf16.msra.mxu0 %v1208
      %1274 = vmatprep.subr.bf16.mxu0 %v1211
      %1275 = vmatpush1.bf16.msra.mxu0 %v1210
      %1276 = vmatprep.subr.bf16.mxu0 %v1213
      %1277 = vmatpush1.bf16.msra.mxu0 %v1212
      %1278 = vmatprep.subr.bf16.mxu0 %v1215
      %1279 = vmatpush1.bf16.msra.mxu0 %v1214
      %1280 = vmatprep.subr.bf16.mxu0 %v1217
      %1281 = vmatpush1.bf16.msra.mxu0 %v1216
      %1282 = vmatprep.subr.bf16.mxu0 %v1219
      %1283 = vmatpush1.bf16.msra.mxu0 %v1218
      %1284 = vmatprep.subr.bf16.mxu0 %v1221
      %1285 = vmatpush1.bf16.msra.mxu0 %v1220
      %1286 = vmatprep.subr.bf16.mxu0 %v1223
      %1287 = vmatpush1.bf16.msra.mxu0 %v1222
      %1288 = vmatprep.subr.bf16.mxu0 %v1225
      %1289 = vmatpush1.bf16.msra.mxu0 %v1224
      %1290 = vmatprep.subr.bf16.mxu0 %v1227
      %1291 = vmatpush1.bf16.msra.mxu0 %v1226
      %1292 = vmatprep.subr.bf16.mxu0 %v1229
      %1293 = vmatpush1.bf16.msra.mxu0 %v1228
      %1294 = vmatprep.subr.bf16.mxu0 %v1231
      %1295 = vmatpush1.bf16.msra.mxu0 %v1230
      %1296 = vmatprep.mubr.bf16.mxu0 %v1059
      %1297 = vmatmul.mubr.bf16.gmra.mrb[0].mxu0 %v1058
      %v1298 = vpop.f32.mrb[0].mxu0
      %v1299 = vadd.f32 %v1097, %v1298
      %v1300 = vpop.f32.mrb[0].mxu0
      %v1301 = vadd.f32 %v1101, %v1300
      %v1302 = vpop.f32.mrb[0].mxu0
      %v1303 = vadd.f32 %v1097, %v1302
      %v1304 = vpop.f32.mrb[0].mxu0
      %v1305 = vadd.f32 %v1101, %v1304
      %1306 = vdwg.mxu0
      %v1307 = vmax.f32 %v1299, 0.0
      %v1308 = vmax.f32 %v1301, 0.0
      %v1309 = vmax.f32 %v1303, 0.0
      %v1310 = vmax.f32 %v1305, 0.0
      %v1311 = vpack.c.bf16 %v1309, %v1307
      %v1312 = vpack.c.bf16 %v1310, %v1308
      %v1313 = vld [vmem:[#allocation11] sm:$0xf]
      %v1314 = vld [vmem:[#allocation11 + $0x4] sm:$0xf]
      %v1315 = vld [vmem:[#allocation11 + $0x8] sm:$0xf]
      %v1316 = vld [vmem:[#allocation11 + $0xc] sm:$0xf]
      %v1317 = vld [vmem:[#allocation11 + $0x10] sm:$0xf]
      %v1318 = vld [vmem:[#allocation11 + $0x14] sm:$0xf]
      %v1319 = vld [vmem:[#allocation11 + $0x18] sm:$0xf]
      %v1320 = vld [vmem:[#allocation11 + $0x1c] sm:$0xf]
      %v1321 = vld [vmem:[#allocation11 + $0x20] sm:$0xf]
      %v1322 = vld [vmem:[#allocation11 + $0x24] sm:$0xf]
      %v1323 = vld [vmem:[#allocation11 + $0x28] sm:$0xf]
      %v1324 = vld [vmem:[#allocation11 + $0x2c] sm:$0xf]
      %v1325 = vld [vmem:[#allocation11 + $0x30] sm:$0xf]
      %v1326 = vld [vmem:[#allocation11 + $0x34] sm:$0xf]
      %v1327 = vld [vmem:[#allocation11 + $0x38] sm:$0xf]
      %v1328 = vld [vmem:[#allocation11 + $0x3c] sm:$0xf]
      %v1329 = vld [vmem:[#allocation11 + $0x40] sm:$0xf]
      %v1330 = vld [vmem:[#allocation11 + $0x44] sm:$0xf]
      %v1331 = vld [vmem:[#allocation11 + $0x48] sm:$0xf]
      %v1332 = vld [vmem:[#allocation11 + $0x4c] sm:$0xf]
      %v1333 = vld [vmem:[#allocation11 + $0x50] sm:$0xf]
      %v1334 = vld [vmem:[#allocation11 + $0x54] sm:$0xf]
      %v1335 = vld [vmem:[#allocation11 + $0x58] sm:$0xf]
      %v1336 = vld [vmem:[#allocation11 + $0x5c] sm:$0xf]
      %v1337 = vld [vmem:[#allocation11 + $0x60] sm:$0xf]
      %v1338 = vld [vmem:[#allocation11 + $0x64] sm:$0xf]
      %v1339 = vld [vmem:[#allocation11 + $0x68] sm:$0xf]
      %v1340 = vld [vmem:[#allocation11 + $0x6c] sm:$0xf]
      %v1341 = vld [vmem:[#allocation11 + $0x70] sm:$0xf]
      %v1342 = vld [vmem:[#allocation11 + $0x74] sm:$0xf]
      %v1343 = vld [vmem:[#allocation11 + $0x78] sm:$0xf]
      %v1344 = vld [vmem:[#allocation11 + $0x7c] sm:$0xf]
      %v1345 = vld [vmem:[%s7] sm:$0x1]
      %v1347 = vlaneseq
      %v1348 = vshrl.u32 %v1347, 7
      %v1349 = vsub.s32 0, %v1348
      %v1350 = vrot.slane %v1345, %v1349
      %v1384 = vunpack.c.l.b16 %v1313
      %v1385 = vunpack.c.l.b16 %v1314
      %v1386 = vunpack.c.l.b16 %v1315
      %v1387 = vunpack.c.l.b16 %v1316
      %v1388 = vunpack.c.l.b16 %v1317
      %v1389 = vunpack.c.l.b16 %v1318
      %v1390 = vunpack.c.l.b16 %v1319
      %v1391 = vunpack.c.l.b16 %v1320
      %v1392 = vunpack.c.l.b16 %v1321
      %v1393 = vunpack.c.l.b16 %v1322
      %v1394 = vunpack.c.l.b16 %v1323
      %v1395 = vunpack.c.l.b16 %v1324
      %v1396 = vunpack.c.l.b16 %v1325
      %v1397 = vunpack.c.l.b16 %v1326
      %v1398 = vunpack.c.l.b16 %v1327
      %v1399 = vunpack.c.l.b16 %v1328
      %v1400 = vunpack.c.l.b16 %v1329
      %v1401 = vunpack.c.l.b16 %v1330
      %v1402 = vunpack.c.l.b16 %v1331
      %v1403 = vunpack.c.l.b16 %v1332
      %v1404 = vunpack.c.l.b16 %v1333
      %v1405 = vunpack.c.l.b16 %v1334
      %v1406 = vunpack.c.l.b16 %v1335
      %v1407 = vunpack.c.l.b16 %v1336
      %v1408 = vunpack.c.l.b16 %v1337
      %v1409 = vunpack.c.l.b16 %v1338
      %v1410 = vunpack.c.l.b16 %v1339
      %v1411 = vunpack.c.l.b16 %v1340
      %v1412 = vunpack.c.l.b16 %v1341
      %v1413 = vunpack.c.l.b16 %v1342
      %v1414 = vunpack.c.l.b16 %v1343
      %v1415 = vunpack.c.l.b16 %v1344
      %v1416 = vpack.c.b16 %v1385, %v1384
      %v1417 = vpack.c.b16 %v1387, %v1386
      %v1418 = vpack.c.b16 %v1389, %v1388
      %v1419 = vpack.c.b16 %v1391, %v1390
      %v1420 = vpack.c.b16 %v1393, %v1392
      %v1421 = vpack.c.b16 %v1395, %v1394
      %v1422 = vpack.c.b16 %v1397, %v1396
      %v1423 = vpack.c.b16 %v1399, %v1398
      %v1424 = vpack.c.b16 %v1401, %v1400
      %v1425 = vpack.c.b16 %v1403, %v1402
      %v1426 = vpack.c.b16 %v1405, %v1404
      %v1427 = vpack.c.b16 %v1407, %v1406
      %v1428 = vpack.c.b16 %v1409, %v1408
      %v1429 = vpack.c.b16 %v1411, %v1410
      %v1430 = vpack.c.b16 %v1413, %v1412
      %v1431 = vpack.c.b16 %v1415, %v1414
      %1448 = vmatprep.subr.bf16.mxu0 0
      %1449 = vmatpush1.bf16.msra.mxu0 %v1416
      %1450 = vmatprep.subr.bf16.mxu0 0
      %1451 = vmatpush1.bf16.msra.mxu0 %v1417
      %1452 = vmatprep.subr.bf16.mxu0 0
      %1453 = vmatpush1.bf16.msra.mxu0 %v1418
      %1454 = vmatprep.subr.bf16.mxu0 0
      %1455 = vmatpush1.bf16.msra.mxu0 %v1419
      %1456 = vmatprep.subr.bf16.mxu0 0
      %1457 = vmatpush1.bf16.msra.mxu0 %v1420
      %1458 = vmatprep.subr.bf16.mxu0 0
      %1459 = vmatpush1.bf16.msra.mxu0 %v1421
      %1460 = vmatprep.subr.bf16.mxu0 0
      %1461 = vmatpush1.bf16.msra.mxu0 %v1422
      %1462 = vmatprep.subr.bf16.mxu0 0
      %1463 = vmatpush1.bf16.msra.mxu0 %v1423
      %1464 = vmatprep.subr.bf16.mxu0 0
      %1465 = vmatpush1.bf16.msra.mxu0 %v1424
      %1466 = vmatprep.subr.bf16.mxu0 0
      %1467 = vmatpush1.bf16.msra.mxu0 %v1425
      %1468 = vmatprep.subr.bf16.mxu0 0
      %1469 = vmatpush1.bf16.msra.mxu0 %v1426
      %1470 = vmatprep.subr.bf16.mxu0 0
      %1471 = vmatpush1.bf16.msra.mxu0 %v1427
      %1472 = vmatprep.subr.bf16.mxu0 0
      %1473 = vmatpush1.bf16.msra.mxu0 %v1428
      %1474 = vmatprep.subr.bf16.mxu0 0
      %1475 = vmatpush1.bf16.msra.mxu0 %v1429
      %1476 = vmatprep.subr.bf16.mxu0 0
      %1477 = vmatpush1.bf16.msra.mxu0 %v1430
      %1478 = vmatprep.subr.bf16.mxu0 0
      %1479 = vmatpush1.bf16.msra.mxu0 %v1431
      %1480 = vmatprep.mubr.bf16.mxu0 %v1312
      %1481 = vmatmul.mubr.bf16.gmra.mrb[0].mxu0 %v1311
      %v1482 = vpop.f32.mrb[0].mxu0
      %v1483 = vadd.f32 %v1350, %v1482
      %v1484 = vpop.f32.mrb[0].mxu0
      %v1485 = vpop.f32.mrb[0].mxu0
      %v1486 = vadd.f32 %v1350, %v1485
      %v1487 = vpop.f32.mrb[0].mxu0
      %1488 = vdwg.mxu0
      %v1489 = vtanh.pop %v1483
      %v1490 = vtanh.pop %v1486
      %v1491 = vpack.c.bf16 %v1490, %v1489
      %v1492 = vld [vmem:[#allocation12] sm:$0xff]
      %v1493 = vld [vmem:[#allocation12 + $0x8] sm:$0xff]
      %v1494 = vld [vmem:[#allocation12 + $0x10] sm:$0xff]
      %v1495 = vld [vmem:[#allocation12 + $0x18] sm:$0xff]
      %v1496 = vld [vmem:[#allocation12 + $0x20] sm:$0xff]
      %v1497 = vld [vmem:[#allocation12 + $0x28] sm:$0xff]
      %v1498 = vld [vmem:[#allocation12 + $0x30] sm:$0xff]
      %v1499 = vld [vmem:[#allocation12 + $0x38] sm:$0xff]
      %v1500 = vld [vmem:[#allocation12 + $0x40] sm:$0xff]
      %v1501 = vld [vmem:[#allocation12 + $0x48] sm:$0xff]
      %v1502 = vld [vmem:[#allocation12 + $0x50] sm:$0xff]
      %v1503 = vld [vmem:[#allocation12 + $0x58] sm:$0xff]
      %v1504 = vld [vmem:[#allocation12 + $0x60] sm:$0xff]
      %v1505 = vld [vmem:[#allocation12 + $0x68] sm:$0xff]
      %v1506 = vld [vmem:[#allocation12 + $0x70] sm:$0xff]
      %v1507 = vld [vmem:[#allocation12 + $0x78] sm:$0xff]
      %v1508 = vld [vmem:[%s9] sm:$0x3]
      %v1510 = vlaneseq
      %v1511 = vshrl.u32 %v1510, 7
      %v1512 = vsub.s32 0, %v1511
      %v1513 = vrot.slane %v1508, %v1512
      %v1514 = vlaneseq
      %v1515 = vshrl.u32 %v1514, 7
      %v1516 = vsub.s32 1, %v1515
      %v1517 = vrot.slane %v1508, %v1516
      %v1536 = vunpack.c.l.b16 %v1492
      %v1537 = vunpack.c.h.b16 %v1492
      %v1538 = vunpack.c.l.b16 %v1493
      %v1539 = vunpack.c.h.b16 %v1493
      %v1540 = vunpack.c.l.b16 %v1494
      %v1541 = vunpack.c.h.b16 %v1494
      %v1542 = vunpack.c.l.b16 %v1495
      %v1543 = vunpack.c.h.b16 %v1495
      %v1544 = vunpack.c.l.b16 %v1496
      %v1545 = vunpack.c.h.b16 %v1496
      %v1546 = vunpack.c.l.b16 %v1497
      %v1547 = vunpack.c.h.b16 %v1497
      %v1548 = vunpack.c.l.b16 %v1498
      %v1549 = vunpack.c.h.b16 %v1498
      %v1550 = vunpack.c.l.b16 %v1499
      %v1551 = vunpack.c.h.b16 %v1499
      %v1552 = vunpack.c.l.b16 %v1500
      %v1553 = vunpack.c.h.b16 %v1500
      %v1554 = vunpack.c.l.b16 %v1501
      %v1555 = vunpack.c.h.b16 %v1501
      %v1556 = vunpack.c.l.b16 %v1502
      %v1557 = vunpack.c.h.b16 %v1502
      %v1558 = vunpack.c.l.b16 %v1503
      %v1559 = vunpack.c.h.b16 %v1503
      %v1560 = vunpack.c.l.b16 %v1504
      %v1561 = vunpack.c.h.b16 %v1504
      %v1562 = vunpack.c.l.b16 %v1505
      %v1563 = vunpack.c.h.b16 %v1505
      %v1564 = vunpack.c.l.b16 %v1506
      %v1565 = vunpack.c.h.b16 %v1506
      %v1566 = vunpack.c.l.b16 %v1507
      %v1567 = vunpack.c.h.b16 %v1507
      %v1568 = vpack.c.b16 %v1538, %v1536
      %v1569 = vpack.c.b16 %v1539, %v1537
      %v1570 = vpack.c.b16 %v1542, %v1540
      %v1571 = vpack.c.b16 %v1543, %v1541
      %v1572 = vpack.c.b16 %v1546, %v1544
      %v1573 = vpack.c.b16 %v1547, %v1545
      %v1574 = vpack.c.b16 %v1550, %v1548
      %v1575 = vpack.c.b16 %v1551, %v1549
      %v1576 = vpack.c.b16 %v1554, %v1552
      %v1577 = vpack.c.b16 %v1555, %v1553
      %v1578 = vpack.c.b16 %v1558, %v1556
      %v1579 = vpack.c.b16 %v1559, %v1557
      %v1580 = vpack.c.b16 %v1562, %v1560
      %v1581 = vpack.c.b16 %v1563, %v1561
      %v1582 = vpack.c.b16 %v1566, %v1564
      %v1583 = vpack.c.b16 %v1567, %v1565
      %1600 = vmatprep.subr.bf16.mxu0 %v1569
      %1601 = vmatpush1.bf16.msra.mxu0 %v1568
      %1602 = vmatprep.subr.bf16.mxu0 %v1571
      %1603 = vmatpush1.bf16.msra.mxu0 %v1570
      %1604 = vmatprep.subr.bf16.mxu0 %v1573
      %1605 = vmatpush1.bf16.msra.mxu0 %v1572
      %1606 = vmatprep.subr.bf16.mxu0 %v1575
      %1607 = vmatpush1.bf16.msra.mxu0 %v1574
      %1608 = vmatprep.subr.bf16.mxu0 %v1577
      %1609 = vmatpush1.bf16.msra.mxu0 %v1576
      %1610 = vmatprep.subr.bf16.mxu0 %v1579
      %1611 = vmatpush1.bf16.msra.mxu0 %v1578
      %1612 = vmatprep.subr.bf16.mxu0 %v1581
      %1613 = vmatpush1.bf16.msra.mxu0 %v1580
      %1614 = vmatprep.subr.bf16.mxu0 %v1583
      %1615 = vmatpush1.bf16.msra.mxu0 %v1582
      %1616 = vmatprep.subr.bf16.mxu0 0
      %1617 = vmatpush1.bf16.msra.mxu0 0
      %1618 = vmatprep.subr.bf16.mxu0 0
      %1619 = vmatpush1.bf16.msra.mxu0 0
      %1620 = vmatprep.subr.bf16.mxu0 0
      %1621 = vmatpush1.bf16.msra.mxu0 0
      %1622 = vmatprep.subr.bf16.mxu0 0
      %1623 = vmatpush1.bf16.msra.mxu0 0
      %1624 = vmatprep.subr.bf16.mxu0 0
      %1625 = vmatpush1.bf16.msra.mxu0 0
      %1626 = vmatprep.subr.bf16.mxu0 0
      %1627 = vmatpush1.bf16.msra.mxu0 0
      %1628 = vmatprep.subr.bf16.mxu0 0
      %1629 = vmatpush1.bf16.msra.mxu0 0
      %1630 = vmatprep.subr.bf16.mxu0 0
      %1631 = vmatpush1.bf16.msra.mxu0 0
      %1632 = vmatprep.mubr.bf16.mxu0 0
      %1633 = vmatmul.mubr.bf16.gmra.mrb[0].mxu0 %v1491
      %v1634 = vpop.f32.mrb[0].mxu0
      %v1635 = vadd.f32 %v1513, %v1634
      %v1636 = vpop.f32.mrb[0].mxu0
      %v1637 = vadd.f32 %v1517, %v1636
      %v1638 = vpop.f32.mrb[0].mxu0
      %v1639 = vadd.f32 %v1513, %v1638
      %v1640 = vpop.f32.mrb[0].mxu0
      %v1641 = vadd.f32 %v1517, %v1640
      %1642 = vdwg.mxu0
      %v1643 = vmax.f32 %v1635, 0.0
      %v1644 = vmax.f32 %v1637, 0.0
      %v1645 = vmax.f32 %v1639, 0.0
      %v1646 = vmax.f32 %v1641, 0.0
      %v1647 = vpack.c.bf16 %v1645, %v1643
      %v1648 = vpack.c.bf16 %v1646, %v1644
      %v1649 = vld [vmem:[#allocation14] sm:$0xff]
      %v1650 = vld [vmem:[#allocation14 + $0x8] sm:$0xff]
      %v1651 = vld [vmem:[#allocation14 + $0x10] sm:$0xff]
      %v1652 = vld [vmem:[#allocation14 + $0x18] sm:$0xff]
      %v1653 = vld [vmem:[#allocation14 + $0x20] sm:$0xff]
      %v1654 = vld [vmem:[#allocation14 + $0x28] sm:$0xff]
      %v1655 = vld [vmem:[#allocation14 + $0x30] sm:$0xff]
      %v1656 = vld [vmem:[#allocation14 + $0x38] sm:$0xff]
      %v1657 = vld [vmem:[#allocation14 + $0x40] sm:$0xff]
      %v1658 = vld [vmem:[#allocation14 + $0x48] sm:$0xff]
      %v1659 = vld [vmem:[#allocation14 + $0x50] sm:$0xff]
      %v1660 = vld [vmem:[#allocation14 + $0x58] sm:$0xff]
      %v1661 = vld [vmem:[#allocation14 + $0x60] sm:$0xff]
      %v1662 = vld [vmem:[#allocation14 + $0x68] sm:$0xff]
      %v1663 = vld [vmem:[#allocation14 + $0x70] sm:$0xff]
      %v1664 = vld [vmem:[#allocation14 + $0x78] sm:$0xff]
      %v1665 = vld [vmem:[#allocation14 + $0x80] sm:$0xff]
      %v1666 = vld [vmem:[#allocation14 + $0x88] sm:$0xff]
      %v1667 = vld [vmem:[#allocation14 + $0x90] sm:$0xff]
      %v1668 = vld [vmem:[#allocation14 + $0x98] sm:$0xff]
      %v1669 = vld [vmem:[#allocation14 + $0xa0] sm:$0xff]
      %v1670 = vld [vmem:[#allocation14 + $0xa8] sm:$0xff]
      %v1671 = vld [vmem:[#allocation14 + $0xb0] sm:$0xff]
      %v1672 = vld [vmem:[#allocation14 + $0xb8] sm:$0xff]
      %v1673 = vld [vmem:[#allocation14 + $0xc0] sm:$0xff]
      %v1674 = vld [vmem:[#allocation14 + $0xc8] sm:$0xff]
      %v1675 = vld [vmem:[#allocation14 + $0xd0] sm:$0xff]
      %v1676 = vld [vmem:[#allocation14 + $0xd8] sm:$0xff]
      %v1677 = vld [vmem:[#allocation14 + $0xe0] sm:$0xff]
      %v1678 = vld [vmem:[#allocation14 + $0xe8] sm:$0xff]
      %v1679 = vld [vmem:[#allocation14 + $0xf0] sm:$0xff]
      %v1680 = vld [vmem:[#allocation14 + $0xf8] sm:$0xff]
      %v1681 = vld [vmem:[%s11] sm:$0x3]
      %v1683 = vlaneseq
      %v1684 = vshrl.u32 %v1683, 7
      %v1685 = vsub.s32 0, %v1684
      %v1686 = vrot.slane %v1681, %v1685
      %v1687 = vlaneseq
      %v1688 = vshrl.u32 %v1687, 7
      %v1689 = vsub.s32 1, %v1688
      %v1690 = vrot.slane %v1681, %v1689
      %v1725 = vunpack.c.l.b16 %v1649
      %v1726 = vunpack.c.h.b16 %v1649
      %v1727 = vunpack.c.l.b16 %v1650
      %v1728 = vunpack.c.h.b16 %v1650
      %v1729 = vunpack.c.l.b16 %v1651
      %v1730 = vunpack.c.h.b16 %v1651
      %v1731 = vunpack.c.l.b16 %v1652
      %v1732 = vunpack.c.h.b16 %v1652
      %v1733 = vunpack.c.l.b16 %v1653
      %v1734 = vunpack.c.h.b16 %v1653
      %v1735 = vunpack.c.l.b16 %v1654
      %v1736 = vunpack.c.h.b16 %v1654
      %v1737 = vunpack.c.l.b16 %v1655
      %v1738 = vunpack.c.h.b16 %v1655
      %v1739 = vunpack.c.l.b16 %v1656
      %v1740 = vunpack.c.h.b16 %v1656
      %v1741 = vunpack.c.l.b16 %v1657
      %v1742 = vunpack.c.h.b16 %v1657
      %v1743 = vunpack.c.l.b16 %v1658
      %v1744 = vunpack.c.h.b16 %v1658
      %v1745 = vunpack.c.l.b16 %v1659
      %v1746 = vunpack.c.h.b16 %v1659
      %v1747 = vunpack.c.l.b16 %v1660
      %v1748 = vunpack.c.h.b16 %v1660
      %v1749 = vunpack.c.l.b16 %v1661
      %v1750 = vunpack.c.h.b16 %v1661
      %v1751 = vunpack.c.l.b16 %v1662
      %v1752 = vunpack.c.h.b16 %v1662
      %v1753 = vunpack.c.l.b16 %v1663
      %v1754 = vunpack.c.h.b16 %v1663
      %v1755 = vunpack.c.l.b16 %v1664
      %v1756 = vunpack.c.h.b16 %v1664
      %v1757 = vunpack.c.l.b16 %v1665
      %v1758 = vunpack.c.h.b16 %v1665
      %v1759 = vunpack.c.l.b16 %v1666
      %v1760 = vunpack.c.h.b16 %v1666
      %v1761 = vunpack.c.l.b16 %v1667
      %v1762 = vunpack.c.h.b16 %v1667
      %v1763 = vunpack.c.l.b16 %v1668
      %v1764 = vunpack.c.h.b16 %v1668
      %v1765 = vunpack.c.l.b16 %v1669
      %v1766 = vunpack.c.h.b16 %v1669
      %v1767 = vunpack.c.l.b16 %v1670
      %v1768 = vunpack.c.h.b16 %v1670
      %v1769 = vunpack.c.l.b16 %v1671
      %v1770 = vunpack.c.h.b16 %v1671
      %v1771 = vunpack.c.l.b16 %v1672
      %v1772 = vunpack.c.h.b16 %v1672
      %v1773 = vunpack.c.l.b16 %v1673
      %v1774 = vunpack.c.h.b16 %v1673
      %v1775 = vunpack.c.l.b16 %v1674
      %v1776 = vunpack.c.h.b16 %v1674
      %v1777 = vunpack.c.l.b16 %v1675
      %v1778 = vunpack.c.h.b16 %v1675
      %v1779 = vunpack.c.l.b16 %v1676
      %v1780 = vunpack.c.h.b16 %v1676
      %v1781 = vunpack.c.l.b16 %v1677
      %v1782 = vunpack.c.h.b16 %v1677
      %v1783 = vunpack.c.l.b16 %v1678
      %v1784 = vunpack.c.h.b16 %v1678
      %v1785 = vunpack.c.l.b16 %v1679
      %v1786 = vunpack.c.h.b16 %v1679
      %v1787 = vunpack.c.l.b16 %v1680
      %v1788 = vunpack.c.h.b16 %v1680
      %v1789 = vpack.c.b16 %v1727, %v1725
      %v1790 = vpack.c.b16 %v1728, %v1726
      %v1791 = vpack.c.b16 %v1731, %v1729
      %v1792 = vpack.c.b16 %v1732, %v1730
      %v1793 = vpack.c.b16 %v1735, %v1733
      %v1794 = vpack.c.b16 %v1736, %v1734
      %v1795 = vpack.c.b16 %v1739, %v1737
      %v1796 = vpack.c.b16 %v1740, %v1738
      %v1797 = vpack.c.b16 %v1743, %v1741
      %v1798 = vpack.c.b16 %v1744, %v1742
      %v1799 = vpack.c.b16 %v1747, %v1745
      %v1800 = vpack.c.b16 %v1748, %v1746
      %v1801 = vpack.c.b16 %v1751, %v1749
      %v1802 = vpack.c.b16 %v1752, %v1750
      %v1803 = vpack.c.b16 %v1755, %v1753
      %v1804 = vpack.c.b16 %v1756, %v1754
      %v1805 = vpack.c.b16 %v1759, %v1757
      %v1806 = vpack.c.b16 %v1760, %v1758
      %v1807 = vpack.c.b16 %v1763, %v1761
      %v1808 = vpack.c.b16 %v1764, %v1762
      %v1809 = vpack.c.b16 %v1767, %v1765
      %v1810 = vpack.c.b16 %v1768, %v1766
      %v1811 = vpack.c.b16 %v1771, %v1769
      %v1812 = vpack.c.b16 %v1772, %v1770
      %v1813 = vpack.c.b16 %v1775, %v1773
      %v1814 = vpack.c.b16 %v1776, %v1774
      %v1815 = vpack.c.b16 %v1779, %v1777
      %v1816 = vpack.c.b16 %v1780, %v1778
      %v1817 = vpack.c.b16 %v1783, %v1781
      %v1818 = vpack.c.b16 %v1784, %v1782
      %v1819 = vpack.c.b16 %v1787, %v1785
      %v1820 = vpack.c.b16 %v1788, %v1786
      %1853 = vmatprep.subr.bf16.mxu0 %v1790
      %1854 = vmatpush1.bf16.msra.mxu0 %v1789
      %1855 = vmatprep.subr.bf16.mxu0 %v1792
      %1856 = vmatpush1.bf16.msra.mxu0 %v1791
      %1857 = vmatprep.subr.bf16.mxu0 %v1794
      %1858 = vmatpush1.bf16.msra.mxu0 %v1793
      %1859 = vmatprep.subr.bf16.mxu0 %v1796
      %1860 = vmatpush1.bf16.msra.mxu0 %v1795
      %1861 = vmatprep.subr.bf16.mxu0 %v1798
      %1862 = vmatpush1.bf16.msra.mxu0 %v1797
      %1863 = vmatprep.subr.bf16.mxu0 %v1800
      %1864 = vmatpush1.bf16.msra.mxu0 %v1799
      %1865 = vmatprep.subr.bf16.mxu0 %v1802
      %1866 = vmatpush1.bf16.msra.mxu0 %v1801
      %1867 = vmatprep.subr.bf16.mxu0 %v1804
      %1868 = vmatpush1.bf16.msra.mxu0 %v1803
      %1869 = vmatprep.subr.bf16.mxu0 %v1806
      %1870 = vmatpush1.bf16.msra.mxu0 %v1805
      %1871 = vmatprep.subr.bf16.mxu0 %v1808
      %1872 = vmatpush1.bf16.msra.mxu0 %v1807
      %1873 = vmatprep.subr.bf16.mxu0 %v1810
      %1874 = vmatpush1.bf16.msra.mxu0 %v1809
      %1875 = vmatprep.subr.bf16.mxu0 %v1812
      %1876 = vmatpush1.bf16.msra.mxu0 %v1811
      %1877 = vmatprep.subr.bf16.mxu0 %v1814
      %1878 = vmatpush1.bf16.msra.mxu0 %v1813
      %1879 = vmatprep.subr.bf16.mxu0 %v1816
      %1880 = vmatpush1.bf16.msra.mxu0 %v1815
      %1881 = vmatprep.subr.bf16.mxu0 %v1818
      %1882 = vmatpush1.bf16.msra.mxu0 %v1817
      %1883 = vmatprep.subr.bf16.mxu0 %v1820
      %1884 = vmatpush1.bf16.msra.mxu0 %v1819
      %1885 = vmatprep.mubr.bf16.mxu0 %v1648
      %1886 = vmatmul.mubr.bf16.gmra.mrb[0].mxu0 %v1647
      %v1887 = vpop.f32.mrb[0].mxu0
      %v1888 = vadd.f32 %v1686, %v1887
      %v1889 = vpop.f32.mrb[0].mxu0
      %v1890 = vadd.f32 %v1690, %v1889
      %v1891 = vpop.f32.mrb[0].mxu0
      %v1892 = vadd.f32 %v1686, %v1891
      %v1893 = vpop.f32.mrb[0].mxu0
      %v1894 = vadd.f32 %v1690, %v1893
      %1895 = vdwg.mxu0
      %v1896 = vmax.f32 %v1888, 0.0
      %v1897 = vmax.f32 %v1890, 0.0
      %v1898 = vmax.f32 %v1892, 0.0
      %v1899 = vmax.f32 %v1894, 0.0
      %v1900 = vpack.c.bf16 %v1898, %v1896
      %v1901 = vpack.c.bf16 %v1899, %v1897
      %v1902 = vld [vmem:[#allocation15] sm:$0xf]
      %v1903 = vld [vmem:[#allocation15 + $0x4] sm:$0xf]
      %v1904 = vld [vmem:[#allocation15 + $0x8] sm:$0xf]
      %v1905 = vld [vmem:[#allocation15 + $0xc] sm:$0xf]
      %v1906 = vld [vmem:[#allocation15 + $0x10] sm:$0xf]
      %v1907 = vld [vmem:[#allocation15 + $0x14] sm:$0xf]
      %v1908 = vld [vmem:[#allocation15 + $0x18] sm:$0xf]
      %v1909 = vld [vmem:[#allocation15 + $0x1c] sm:$0xf]
      %v1910 = vld [vmem:[#allocation15 + $0x20] sm:$0xf]
      %v1911 = vld [vmem:[#allocation15 + $0x24] sm:$0xf]
      %v1912 = vld [vmem:[#allocation15 + $0x28] sm:$0xf]
      %v1913 = vld [vmem:[#allocation15 + $0x2c] sm:$0xf]
      %v1914 = vld [vmem:[#allocation15 + $0x30] sm:$0xf]
      %v1915 = vld [vmem:[#allocation15 + $0x34] sm:$0xf]
      %v1916 = vld [vmem:[#allocation15 + $0x38] sm:$0xf]
      %v1917 = vld [vmem:[#allocation15 + $0x3c] sm:$0xf]
      %v1918 = vld [vmem:[#allocation15 + $0x40] sm:$0xf]
      %v1919 = vld [vmem:[#allocation15 + $0x44] sm:$0xf]
      %v1920 = vld [vmem:[#allocation15 + $0x48] sm:$0xf]
      %v1921 = vld [vmem:[#allocation15 + $0x4c] sm:$0xf]
      %v1922 = vld [vmem:[#allocation15 + $0x50] sm:$0xf]
      %v1923 = vld [vmem:[#allocation15 + $0x54] sm:$0xf]
      %v1924 = vld [vmem:[#allocation15 + $0x58] sm:$0xf]
      %v1925 = vld [vmem:[#allocation15 + $0x5c] sm:$0xf]
      %v1926 = vld [vmem:[#allocation15 + $0x60] sm:$0xf]
      %v1927 = vld [vmem:[#allocation15 + $0x64] sm:$0xf]
      %v1928 = vld [vmem:[#allocation15 + $0x68] sm:$0xf]
      %v1929 = vld [vmem:[#allocation15 + $0x6c] sm:$0xf]
      %v1930 = vld [vmem:[#allocation15 + $0x70] sm:$0xf]
      %v1931 = vld [vmem:[#allocation15 + $0x74] sm:$0xf]
      %v1932 = vld [vmem:[#allocation15 + $0x78] sm:$0xf]
      %v1933 = vld [vmem:[#allocation15 + $0x7c] sm:$0xf]
      %v1934 = vld [vmem:[%s13] sm:$0x1]
      %v1936 = vlaneseq
      %v1937 = vshrl.u32 %v1936, 7
      %v1938 = vsub.s32 0, %v1937
      %v1939 = vrot.slane %v1934, %v1938
      %v1973 = vunpack.c.l.b16 %v1902
      %v1974 = vunpack.c.l.b16 %v1903
      %v1975 = vunpack.c.l.b16 %v1904
      %v1976 = vunpack.c.l.b16 %v1905
      %v1977 = vunpack.c.l.b16 %v1906
      %v1978 = vunpack.c.l.b16 %v1907
      %v1979 = vunpack.c.l.b16 %v1908
      %v1980 = vunpack.c.l.b16 %v1909
      %v1981 = vunpack.c.l.b16 %v1910
      %v1982 = vunpack.c.l.b16 %v1911
      %v1983 = vunpack.c.l.b16 %v1912
      %v1984 = vunpack.c.l.b16 %v1913
      %v1985 = vunpack.c.l.b16 %v1914
      %v1986 = vunpack.c.l.b16 %v1915
      %v1987 = vunpack.c.l.b16 %v1916
      %v1988 = vunpack.c.l.b16 %v1917
      %v1989 = vunpack.c.l.b16 %v1918
      %v1990 = vunpack.c.l.b16 %v1919
      %v1991 = vunpack.c.l.b16 %v1920
      %v1992 = vunpack.c.l.b16 %v1921
      %v1993 = vunpack.c.l.b16 %v1922
      %v1994 = vunpack.c.l.b16 %v1923
      %v1995 = vunpack.c.l.b16 %v1924
      %v1996 = vunpack.c.l.b16 %v1925
      %v1997 = vunpack.c.l.b16 %v1926
      %v1998 = vunpack.c.l.b16 %v1927
      %v1999 = vunpack.c.l.b16 %v1928
      %v2000 = vunpack.c.l.b16 %v1929
      %v2001 = vunpack.c.l.b16 %v1930
      %v2002 = vunpack.c.l.b16 %v1931
      %v2003 = vunpack.c.l.b16 %v1932
      %v2004 = vunpack.c.l.b16 %v1933
      %v2005 = vpack.c.b16 %v1974, %v1973
      %v2006 = vpack.c.b16 %v1976, %v1975
      %v2007 = vpack.c.b16 %v1978, %v1977
      %v2008 = vpack.c.b16 %v1980, %v1979
      %v2009 = vpack.c.b16 %v1982, %v1981
      %v2010 = vpack.c.b16 %v1984, %v1983
      %v2011 = vpack.c.b16 %v1986, %v1985
      %v2012 = vpack.c.b16 %v1988, %v1987
      %v2013 = vpack.c.b16 %v1990, %v1989
      %v2014 = vpack.c.b16 %v1992, %v1991
      %v2015 = vpack.c.b16 %v1994, %v1993
      %v2016 = vpack.c.b16 %v1996, %v1995
      %v2017 = vpack.c.b16 %v1998, %v1997
      %v2018 = vpack.c.b16 %v2000, %v1999
      %v2019 = vpack.c.b16 %v2002, %v2001
      %v2020 = vpack.c.b16 %v2004, %v2003
      %2037 = vmatprep.subr.bf16.mxu0 0
      %2038 = vmatpush1.bf16.msra.mxu0 %v2005
      %2039 = vmatprep.subr.bf16.mxu0 0
      %2040 = vmatpush1.bf16.msra.mxu0 %v2006
      %2041 = vmatprep.subr.bf16.mxu0 0
      %2042 = vmatpush1.bf16.msra.mxu0 %v2007
      %2043 = vmatprep.subr.bf16.mxu0 0
      %2044 = vmatpush1.bf16.msra.mxu0 %v2008
      %2045 = vmatprep.subr.bf16.mxu0 0
      %2046 = vmatpush1.bf16.msra.mxu0 %v2009
      %2047 = vmatprep.subr.bf16.mxu0 0
      %2048 = vmatpush1.bf16.msra.mxu0 %v2010
      %2049 = vmatprep.subr.bf16.mxu0 0
      %2050 = vmatpush1.bf16.msra.mxu0 %v2011
      %2051 = vmatprep.subr.bf16.mxu0 0
      %2052 = vmatpush1.bf16.msra.mxu0 %v2012
      %2053 = vmatprep.subr.bf16.mxu0 0
      %2054 = vmatpush1.bf16.msra.mxu0 %v2013
      %2055 = vmatprep.subr.bf16.mxu0 0
      %2056 = vmatpush1.bf16.msra.mxu0 %v2014
      %2057 = vmatprep.subr.bf16.mxu0 0
      %2058 = vmatpush1.bf16.msra.mxu0 %v2015
      %2059 = vmatprep.subr.bf16.mxu0 0
      %2060 = vmatpush1.bf16.msra.mxu0 %v2016
      %2061 = vmatprep.subr.bf16.mxu0 0
      %2062 = vmatpush1.bf16.msra.mxu0 %v2017
      %2063 = vmatprep.subr.bf16.mxu0 0
      %2064 = vmatpush1.bf16.msra.mxu0 %v2018
      %2065 = vmatprep.subr.bf16.mxu0 0
      %2066 = vmatpush1.bf16.msra.mxu0 %v2019
      %2067 = vmatprep.subr.bf16.mxu0 0
      %2068 = vmatpush1.bf16.msra.mxu0 %v2020
      %2069 = vmatprep.mubr.bf16.mxu0 %v1901
      %2070 = vmatmul.mubr.bf16.gmra.mrb[0].mxu0 %v1900
      %v2071 = vpop.f32.mrb[0].mxu0
      %v2072 = vadd.f32 %v1939, %v2071
      %v2073 = vpop.f32.mrb[0].mxu0
      %v2074 = vpop.f32.mrb[0].mxu0
      %v2075 = vadd.f32 %v1939, %v2074
      %v2076 = vpop.f32.mrb[0].mxu0
      %2077 = vdwg.mxu0
      %v2078 = vxor.u32 %v2072, 2147483648
      %v2079 = vxor.u32 %v2075, 2147483648
      %v2080 = vmul.f32 %v2078, 1.442695
      %v2081 = vpow.pop %v2080
      %v2082 = vmul.f32 %v2079, 1.442695
      %v2083 = vpow.pop %v2082
      %v2084 = vadd.f32 %v2081, 1.0
      %v2085 = vadd.f32 %v2083, 1.0
      %v2086 = vrcp.pop %v2084
      %v2087 = vmul.f32 1.0, %v2086
      %v2088 = vrcp.pop %v2085
      %v2089 = vmul.f32 1.0, %v2088
      %v2090 = vtanh.pop %v2087
      %v2091 = vtanh.pop %v2089
      %v2092 = vmul.f32 %v1489, %v1489
      %v2093 = vmul.f32 %v1490, %v1490
      %2094 = vadd.xlane.f32.xlu0 %v2092
      %v2095 = vpop.xlane.xlu0 %2094
      %2096 = vadd.xlane.f32.xlu0 %v2093
      %v2097 = vpop.xlane.xlu0 %2096
      %v2098 = vadd.f32 %v2095, 1e-12
      %v2099 = vadd.f32 %v2097, 1e-12
      %v2100 = vrsqrt.pop %v2098
      %v2101 = vrsqrt.pop %v2099
      %v2102 = vmul.f32 %v1489, %v2100
      %v2103 = vmul.f32 %v1490, %v2101
      %2104 = vst [vmem:[#allocation17] sm:$0xff] %v2102
      %2105 = vst [vmem:[#allocation17 + $0x8] sm:$0xff] %v2103
      %v2106 = vpack.c.bf16 %v2091, %v2090
      %v2108 = vunpack.c.l.b16 %v2106
      %v2109 = vunpack.c.h.b16 %v2106
      %v2110 = vpack.c.b16 %v2108, %v2108
      %v2111 = vpack.c.b16 %v2109, %v2109
      %2114 = vst [vmem:[#allocation18] sm:$0xf] %v2110
      %2115 = vst [vmem:[#allocation18 + $0x4] sm:$0xf] %v2111
    $region97: #{tpu_custom_call.1} parent=1 // pred_fallthru
      _
    // Predicated region
    $region98: #{tpu_custom_call.1} parent=1 // pred_check
      _
    $region99: #{tpu_custom_call.1} parent=1 // pred_check_branch
      %2117 = sbr.rel (0) target = $region101
    $region100: #{tpu_custom_call.1} parent=1 // pred_region
      %s2119 = ssub.s32 256, 256
      %2120 = vsyncadd [#allocation5], %s2119
      %s2121 = sshll.u32 [#allocation17], 4
      %s2122 = int_to_ptr.vmem [resolvable:$true] %s2121
      %2127 = dma.vmem_to_hbm [thread:$0]  %s2122, 256, %s14, [#allocation5], 128, 128, 8
    $region101: #{tpu_custom_call.1} parent=1 // pred_fallthru
      _
    // Predicated region
    $region102: #{tpu_custom_call.1} parent=1 // pred_check
      _
    $region103: #{tpu_custom_call.1} parent=1 // pred_check_branch
      %2129 = sbr.rel (0) target = $region105
    $region104: #{tpu_custom_call.1} parent=1 // pred_region
      %s2131 = ssub.s32 128, 128
      %2132 = vsyncadd [#allocation19], %s2131
      %s2133 = sshll.u32 [#allocation18], 4
      %s2134 = int_to_ptr.vmem [resolvable:$true] %s2133
      %2139 = dma.vmem_to_hbm [thread:$0]  %s2134, 128, %s15, [#allocation19], 64, 64, 4
    $region105: #{tpu_custom_call.1} parent=1 // pred_fallthru
      _
    // Predicated region
    $region106: #{tpu_custom_call.1} parent=1 // pred_check
      _
    $region107: #{tpu_custom_call.1} parent=1 // pred_check_branch
      %2141 = sbr.rel (0) target = $region109
    $region108: #{tpu_custom_call.1} parent=1 // pred_region
      %2142 = dma.done [#allocation5], 256
    $region109: #{tpu_custom_call.1} parent=1 // pred_fallthru
      _
    // Predicated region
    $region110: #{tpu_custom_call.1} parent=1 // pred_check
      _
    $region111: #{tpu_custom_call.1} parent=1 // pred_check_branch
      %2144 = sbr.rel (0) target = $region113
    $region112: #{tpu_custom_call.1} parent=1 // pred_region
      %2145 = dma.done [#allocation19], 128
    $region113: #{tpu_custom_call.1} parent=1 // pred_fallthru
      _
    %2146 = vsyncpa [#allocation4], 1
    %2147 = vsyncpa [#allocation7], 1
    %2148 = vsyncpa [#allocation10], 1
    %2149 = vsyncpa [#allocation13], 1
    %2150 = vsyncpa [#allocation16], 1
    %2151 = vsyncpa [#allocation5], 1
    %2152 = vsyncpa [#allocation19], 1

</llo_original>
